<compile_context>
chip_gen: v7x
topology: tpu7x:2x2x1
jax: 0.10.0
libtpu: 0.0.40
codegen_flags: <defaults>
</compile_context>

<pallas_src>
import jax
import jax.numpy as jnp
from jax.experimental import pallas as pl
from jax.experimental.pallas import tpu as pltpu

D_IN = 512
D_HID = 512
D_OUT = 10
D_OUT_PAD = 128          # lane-dense (multiple of 128) padded output width


def label_predictor_kernel(x_ref, w1_ref, b1_ref, a1_ref,
                           w2_ref, b2_ref, a2_ref,
                           w3_ref, b3_ref, o_ref):
    # SMEM scalar reads (PReLU slopes).
    a1 = a1_ref[0, 0]
    a2 = a2_ref[0, 0]

    # x arrives f32 from HBM; cast to bf16 on the VPU right before the MXU.
    x = x_ref[...].astype(jnp.bfloat16)                       # (bt, 512)

    # Linear(512, 512) + PReLU  (bf16 operands, f32 accumulation + epilogue)
    h1 = jnp.dot(x, w1_ref[...], preferred_element_type=jnp.float32) + b1_ref[...]
    h1 = jnp.where(h1 > 0, h1, a1 * h1)

    # Linear(512, 512) + PReLU
    h2 = jnp.dot(h1.astype(jnp.bfloat16), w2_ref[...],
                 preferred_element_type=jnp.float32) + b2_ref[...]
    h2 = jnp.where(h2 > 0, h2, a2 * h2)

    # Linear(512, 10) — computed as 512 -> 128 (zero-padded), sliced in wrapper.
    y = jnp.dot(h2.astype(jnp.bfloat16), w3_ref[...],
                preferred_element_type=jnp.float32) + b3_ref[...]

    # bf16 lane-dense writeback (halves padded-logit HBM bytes).
    o_ref[...] = y.astype(o_ref.dtype)


def prepare_params(w1, b1, a1, w2, b2, a2, w3, b3):
    """One-time weight prep (hoisted out of the per-call hot path)."""
    w1b = w1.astype(jnp.bfloat16)
    w2b = w2.astype(jnp.bfloat16)
    w3p = jnp.zeros((D_HID, D_OUT_PAD), jnp.bfloat16).at[:, :D_OUT].set(
        w3.astype(jnp.bfloat16))
    b3p = jnp.zeros((1, D_OUT_PAD), jnp.float32).at[:, :D_OUT].set(b3)
    return (w1b, b1.astype(jnp.float32), a1.astype(jnp.float32),
            w2b, b2.astype(jnp.float32), a2.astype(jnp.float32),
            w3p, b3p)


def _pick_b_tile(B):
    """Adaptive batch tile.

    - tiny/medium batch: round up to the 16-row sublane multiple (minimal
      zero-row padding, no wasted MXU work on a forced 128-row tile);
    - large batch: 256-512-row tiles but always >= 2 grid steps so the
      'parallel' batch axis can shard across v7x's two TensorCores.
    """
    Bp = pl.cdiv(B, 16) * 16
    if Bp <= 256:
        return Bp
    half = pl.cdiv(pl.cdiv(Bp, 2), 16) * 16
    return min(512, half)


def label_predictor(x, params, *, b_tile=None):
    """x: (B, 512) f32; params: output of prepare_params(). Returns (B, 10) f32."""
    w1b, b1, a1, w2b, b2, a2, w3p, b3p = params

    B = x.shape[0]
    if b_tile is None:
        b_tile = _pick_b_tile(B)
    Bp = pl.cdiv(B, b_tile) * b_tile
    if Bp != B:
        x = jnp.pad(x, ((0, Bp - B), (0, 0)))
    n_tiles = Bp // b_tile

    const0 = lambda i: (0, 0)          # weights/biases: same block every step (VMEM-resident)
    batch_row = lambda i: (i, 0)       # x / o: tile along batch

    out = pl.pallas_call(
        label_predictor_kernel,
        out_shape=jax.ShapeDtypeStruct((Bp, D_OUT_PAD), jnp.bfloat16),
        grid_spec=pl.GridSpec(
            grid=(n_tiles,),
            in_specs=[
                pl.BlockSpec((b_tile, D_IN), batch_row),              # x (f32)
                pl.BlockSpec((D_IN, D_HID), const0),                  # w1 (bf16)
                pl.BlockSpec((1, D_HID), const0),                     # b1 (f32)
                pl.BlockSpec(memory_space=pltpu.MemorySpace.SMEM),    # a1 scalar
                pl.BlockSpec((D_HID, D_HID), const0),                 # w2 (bf16)
                pl.BlockSpec((1, D_HID), const0),                     # b2 (f32)
                pl.BlockSpec(memory_space=pltpu.MemorySpace.SMEM),    # a2 scalar
                pl.BlockSpec((D_HID, D_OUT_PAD), const0),             # w3 padded (bf16)
                pl.BlockSpec((1, D_OUT_PAD), const0),                 # b3 padded (f32)
            ],
            out_specs=pl.BlockSpec((b_tile, D_OUT_PAD), batch_row),
        ),
        compiler_params=pltpu.CompilerParams(
            dimension_semantics=("parallel",),   # batch tiles independent (v7x 2-TC split)
            vmem_limit_bytes=32 << 20,           # headroom for 512-row tiles; <=50% of v7x VMEM
        ),
    )(x, w1b, b1, a1, w2b, b2, a2, w3p, b3p)

    # Slice off batch padding + lane padding; restore f32 logits (tiny copy).
    return out[:B, :D_OUT].astype(jnp.float32)


def _ref(x, w1, b1, a1, w2, b2, a2, w3, b3):
    """Pure-JAX f32 reference of the PyTorch forward."""
    prelu = lambda v, a: jnp.where(v > 0, v, a * v)
    h1 = prelu(x @ w1 + b1, a1[0, 0])
    h2 = prelu(h1 @ w2 + b2, a2[0, 0])
    return h2 @ w3 + b3


if __name__ == "__main__":
    key = jax.random.PRNGKey(0)
    ks = jax.random.split(key, 8)

    # B=300: exercises 2 batch tiles (v7x-friendly) AND batch-row padding.
    B = 300

    # Deterministic PyTorch-like init: uniform(-1/sqrt(fan_in), 1/sqrt(fan_in)).
    lim1 = 1.0 / jnp.sqrt(jnp.float32(D_IN))
    lim3 = 1.0 / jnp.sqrt(jnp.float32(D_HID))
    w1 = jax.random.uniform(ks[0], (D_IN, D_HID), jnp.float32, -lim1, lim1)
    b1 = jax.random.uniform(ks[1], (1, D_HID), jnp.float32, -lim1, lim1)
    w2 = jax.random.uniform(ks[2], (D_HID, D_HID), jnp.float32, -lim3, lim3)
    b2 = jax.random.uniform(ks[3], (1, D_HID), jnp.float32, -lim3, lim3)
    w3 = jax.random.uniform(ks[4], (D_HID, D_OUT), jnp.float32, -lim3, lim3)
    b3 = jax.random.uniform(ks[5], (1, D_OUT), jnp.float32, -lim3, lim3)
    a1 = jnp.full((1, 1), 0.25, jnp.float32)   # PReLU weight (default init)
    a2 = jnp.full((1, 1), 0.25, jnp.float32)

    x = jax.random.normal(ks[6], (B, D_IN), jnp.float32)

    # One-time weight prep (cast + lane-pad), reused across calls.
    params = prepare_params(w1, b1, a1, w2, b2, a2, w3, b3)

    y = label_predictor(x, params)
    y = jax.block_until_ready(y)

    y_ref = _ref(x, w1, b1, a1, w2, b2, a2, w3, b3)
    assert y.shape == (B, D_OUT)
    # bf16 MXU operands + bf16 logit writeback with f32 accumulation:
    # small, bounded deviation from the f32 reference.
    assert jnp.allclose(y, y_ref, atol=3e-2, rtol=3e-2)

    # TODO(synk): if this head feeds a softmax/argmax/loss, fuse that consumer
    # into the kernel epilogue so the padded logit tile never hits HBM at all.
    print("KERNEL_OK")
</pallas_src>

<mosaic_0001>
module attributes {stable_mosaic.version = 11 : i64} {
  func.func @label_predictor_kernel(%arg0: i32, %arg1: memref<160x512xf32, #tpu.memory_space<vmem>>, %arg2: memref<512x512xbf16, #tpu.memory_space<vmem>>, %arg3: memref<1x512xf32, #tpu.memory_space<vmem>>, %arg4: memref<1x1xf32, #tpu.memory_space<smem>>, %arg5: memref<512x512xbf16, #tpu.memory_space<vmem>>, %arg6: memref<1x512xf32, #tpu.memory_space<vmem>>, %arg7: memref<1x1xf32, #tpu.memory_space<smem>>, %arg8: memref<512x128xbf16, #tpu.memory_space<vmem>>, %arg9: memref<1x128xf32, #tpu.memory_space<vmem>>, %arg10: memref<160x128xbf16, #tpu.memory_space<vmem>>) attributes {dimension_semantics = [#tpu.dimension_semantics<parallel>], iteration_bounds = array<i64: 2>, scalar_prefetch = 0 : i64, scratch_operands = 0 : i64, tpu.core_type = #tpu.core_type<tc>, window_params = [{transform_indices = @transform_0, window_bounds = array<i64: 160, 512>}, {pipeline_mode = #tpu.pipeline_mode<synchronous>, transform_indices = @transform_1, window_bounds = array<i64: 512, 512>}, {pipeline_mode = #tpu.pipeline_mode<synchronous>, transform_indices = @transform_2, window_bounds = array<i64: 1, 512>}, {transform_indices = @transform_3, window_bounds = array<i64: 1, 1>}, {pipeline_mode = #tpu.pipeline_mode<synchronous>, transform_indices = @transform_4, window_bounds = array<i64: 512, 512>}, {pipeline_mode = #tpu.pipeline_mode<synchronous>, transform_indices = @transform_5, window_bounds = array<i64: 1, 512>}, {transform_indices = @transform_6, window_bounds = array<i64: 1, 1>}, {pipeline_mode = #tpu.pipeline_mode<synchronous>, transform_indices = @transform_7, window_bounds = array<i64: 512, 128>}, {pipeline_mode = #tpu.pipeline_mode<synchronous>, transform_indices = @transform_8, window_bounds = array<i64: 1, 128>}, {transform_indices = @transform_9, window_bounds = array<i64: 160, 128>}]} {
    %c0 = arith.constant 0 : index
    %c0_0 = arith.constant 0 : index
    %0 = memref.load %arg4[%c0, %c0_0] : memref<1x1xf32, #tpu.memory_space<smem>>
    %c0_1 = arith.constant 0 : index
    %c0_2 = arith.constant 0 : index
    %1 = memref.load %arg7[%c0_1, %c0_2] : memref<1x1xf32, #tpu.memory_space<smem>>
    %c0_3 = arith.constant 0 : index
    %c0_4 = arith.constant 0 : index
    %2 = vector.load %arg1[%c0_3, %c0_4] : memref<160x512xf32, #tpu.memory_space<vmem>>, vector<160x512xf32>
    %3 = arith.truncf %2 : vector<160x512xf32> to vector<160x512xbf16>
    %c0_5 = arith.constant 0 : index
    %c0_6 = arith.constant 0 : index
    %4 = vector.load %arg2[%c0_5, %c0_6] : memref<512x512xbf16, #tpu.memory_space<vmem>>, vector<512x512xbf16>
    %cst = arith.constant dense<0.000000e+00> : vector<160x512xf32>
    %5 = tpu.matmul %3, %4, %cst {dimension_numbers = #tpu.dot_dimension_numbers<[1], [0], [0], [1], [0, 0, 1, 1], [], []>} : vector<160x512xbf16>, vector<512x512xbf16>, vector<160x512xf32> -> vector<160x512xf32>
    %c0_7 = arith.constant 0 : index
    %c0_8 = arith.constant 0 : index
    %6 = vector.load %arg3[%c0_7, %c0_8] : memref<1x512xf32, #tpu.memory_space<vmem>>, vector<1x512xf32>
    %7 = vector.broadcast %6 : vector<1x512xf32> to vector<160x512xf32>
    %8 = arith.addf %5, %7 : vector<160x512xf32>
    %cst_9 = arith.constant 0.000000e+00 : f32
    %9 = vector.broadcast %cst_9 : f32 to vector<160x512xf32>
    %10 = arith.cmpf ogt, %8, %9 : vector<160x512xf32>
    %11 = vector.broadcast %0 : f32 to vector<160x512xf32>
    %12 = arith.mulf %11, %8 : vector<160x512xf32>
    %13 = arith.select %10, %8, %12 : vector<160x512xi1>, vector<160x512xf32>
    %14 = arith.truncf %13 : vector<160x512xf32> to vector<160x512xbf16>
    %c0_10 = arith.constant 0 : index
    %c0_11 = arith.constant 0 : index
    %15 = vector.load %arg5[%c0_10, %c0_11] : memref<512x512xbf16, #tpu.memory_space<vmem>>, vector<512x512xbf16>
    %cst_12 = arith.constant dense<0.000000e+00> : vector<160x512xf32>
    %16 = tpu.matmul %14, %15, %cst_12 {dimension_numbers = #tpu.dot_dimension_numbers<[1], [0], [0], [1], [0, 0, 1, 1], [], []>} : vector<160x512xbf16>, vector<512x512xbf16>, vector<160x512xf32> -> vector<160x512xf32>
    %c0_13 = arith.constant 0 : index
    %c0_14 = arith.constant 0 : index
    %17 = vector.load %arg6[%c0_13, %c0_14] : memref<1x512xf32, #tpu.memory_space<vmem>>, vector<1x512xf32>
    %18 = vector.broadcast %17 : vector<1x512xf32> to vector<160x512xf32>
    %19 = arith.addf %16, %18 : vector<160x512xf32>
    %cst_15 = arith.constant 0.000000e+00 : f32
    %20 = vector.broadcast %cst_15 : f32 to vector<160x512xf32>
    %21 = arith.cmpf ogt, %19, %20 : vector<160x512xf32>
    %22 = vector.broadcast %1 : f32 to vector<160x512xf32>
    %23 = arith.mulf %22, %19 : vector<160x512xf32>
    %24 = arith.select %21, %19, %23 : vector<160x512xi1>, vector<160x512xf32>
    %25 = arith.truncf %24 : vector<160x512xf32> to vector<160x512xbf16>
    %c0_16 = arith.constant 0 : index
    %c0_17 = arith.constant 0 : index
    %26 = vector.load %arg8[%c0_16, %c0_17] : memref<512x128xbf16, #tpu.memory_space<vmem>>, vector<512x128xbf16>
    %cst_18 = arith.constant dense<0.000000e+00> : vector<160x128xf32>
    %27 = tpu.matmul %25, %26, %cst_18 {dimension_numbers = #tpu.dot_dimension_numbers<[1], [0], [0], [1], [0, 0, 1, 1], [], []>} : vector<160x512xbf16>, vector<512x128xbf16>, vector<160x128xf32> -> vector<160x128xf32>
    %c0_19 = arith.constant 0 : index
    %c0_20 = arith.constant 0 : index
    %28 = vector.load %arg9[%c0_19, %c0_20] : memref<1x128xf32, #tpu.memory_space<vmem>>, vector<1x128xf32>
    %29 = vector.broadcast %28 : vector<1x128xf32> to vector<160x128xf32>
    %30 = arith.addf %27, %29 : vector<160x128xf32>
    %31 = arith.truncf %30 : vector<160x128xf32> to vector<160x128xbf16>
    %c0_21 = arith.constant 0 : index
    %c0_22 = arith.constant 0 : index
    %32 = vector.load %arg10[%c0_21, %c0_22] : memref<160x128xbf16, #tpu.memory_space<vmem>>, vector<160x128xbf16>
    tpu.vector_store %arg10[%c0_21, %c0_22], %31 {strides = array<i32>} : memref<160x128xbf16, #tpu.memory_space<vmem>>, vector<160x128xbf16>,
    return
  }
  func.func @transform_0(%arg0: i32) -> (i32, i32) {
    %c0_i32 = arith.constant 0 : i32
    %c0_i32_0 = arith.constant 0 : i32
    return %arg0, %c0_i32 : i32, i32
  }
  func.func @transform_1(%arg0: i32) -> (i32, i32) {
    %c0_i32 = arith.constant 0 : i32
    %c0_i32_0 = arith.constant 0 : i32
    %c0_i32_1 = arith.constant 0 : i32
    return %c0_i32, %c0_i32_0 : i32, i32
  }
  func.func @transform_2(%arg0: i32) -> (i32, i32) {
    %c0_i32 = arith.constant 0 : i32
    %c0_i32_0 = arith.constant 0 : i32
    %c0_i32_1 = arith.constant 0 : i32
    return %c0_i32, %c0_i32_0 : i32, i32
  }
  func.func @transform_3(%arg0: i32) -> (i32, i32) {
    %c0_i32 = arith.constant 0 : i32
    %c0_i32_0 = arith.constant 0 : i32
    %c0_i32_1 = arith.constant 0 : i32
    return %c0_i32, %c0_i32_0 : i32, i32
  }
  func.func @transform_4(%arg0: i32) -> (i32, i32) {
    %c0_i32 = arith.constant 0 : i32
    %c0_i32_0 = arith.constant 0 : i32
    %c0_i32_1 = arith.constant 0 : i32
    return %c0_i32, %c0_i32_0 : i32, i32
  }
  func.func @transform_5(%arg0: i32) -> (i32, i32) {
    %c0_i32 = arith.constant 0 : i32
    %c0_i32_0 = arith.constant 0 : i32
    %c0_i32_1 = arith.constant 0 : i32
    return %c0_i32, %c0_i32_0 : i32, i32
  }
  func.func @transform_6(%arg0: i32) -> (i32, i32) {
    %c0_i32 = arith.constant 0 : i32
    %c0_i32_0 = arith.constant 0 : i32
    %c0_i32_1 = arith.constant 0 : i32
    return %c0_i32, %c0_i32_0 : i32, i32
  }
  func.func @transform_7(%arg0: i32) -> (i32, i32) {
    %c0_i32 = arith.constant 0 : i32
    %c0_i32_0 = arith.constant 0 : i32
    %c0_i32_1 = arith.constant 0 : i32
    return %c0_i32, %c0_i32_0 : i32, i32
  }
  func.func @transform_8(%arg0: i32) -> (i32, i32) {
    %c0_i32 = arith.constant 0 : i32
    %c0_i32_0 = arith.constant 0 : i32
    %c0_i32_1 = arith.constant 0 : i32
    return %c0_i32, %c0_i32_0 : i32, i32
  }
  func.func @transform_9(%arg0: i32) -> (i32, i32) {
    %c0_i32 = arith.constant 0 : i32
    %c0_i32_0 = arith.constant 0 : i32
    return %arg0, %c0_i32 : i32, i32
  }
}

</mosaic_0001>

<llo_original>
// kernel: tpu_custom_call.1
$region0: #{tpu_custom_call.1}
  #allocation0 [shape = 'u32[]', space=smem, size = 0x4, offset = 0x4, fixed_abs, tag = 'smem constant byte address 0x4 - core index']
  #allocation1 [shape = 'u32[144,128]{1,0:T(1,128)}', space=vmem, size = 0x12000, scoped, tag = 'internal scratch']
  #allocation2 [shape = 'f32[1,1]{1,0:T(1,128)S(6)}', space=smem, size = 0x200, scoped, tag = 'scoped memory for tpu_custom_call.1']
  #allocation3 [shape = 'f32[1,1]{1,0:T(1,128)S(6)}', space=smem, size = 0x200, scoped, tag = 'scoped memory for tpu_custom_call.1']
  %s0 = inlined_call_operand.hbm [shape: f32[320,512], index: 0, kind: input, shape index: {}]
  %s1 = inlined_call_operand.hbm [shape: bf16[512,512], index: 1, kind: input, shape index: {}]
  %s2 = inlined_call_operand.vmem [shape: f32[1,512], index: 2, kind: input, shape index: {}]
  %s3 = inlined_call_operand.<no memory space> [shape: f32[1,1], index: 3, kind: input, shape index: {}]
  %s4 = inlined_call_operand.hbm [shape: bf16[512,512], index: 4, kind: input, shape index: {}]
  %s5 = inlined_call_operand.vmem [shape: f32[1,512], index: 5, kind: input, shape index: {}]
  %s6 = inlined_call_operand.<no memory space> [shape: f32[1,1], index: 6, kind: input, shape index: {}]
  %s7 = inlined_call_operand.hbm [shape: bf16[512,128], index: 7, kind: input, shape index: {}]
  %s8 = inlined_call_operand.vmem [shape: f32[1,128], index: 8, kind: input, shape index: {}]
  %s9 = inlined_call_operand.hbm [shape: bf16[320,128], index: 9, kind: output, shape index: {}]
  %s10 = sld [smem:[#allocation0]]
  $region85: #{tpu_custom_call.1} parent=0
    _
  %s12 = ssub.s32 1, %s10
  %s13 = scalar_select 0, %s12, %s10
  %14 = sst [smem:[#allocation2]] %s3
  %15 = sst [smem:[#allocation3]] %s6
  $region1: #{tpu_custom_call.1} parent=0
    #allocation4 [shape = 'u8[655360]{0}', space=vmem, size = 0xa0000, scoped, tag = 'input window, operand 0']
    #allocation5 [shape = 's32[2]{0}', space=sflag, size = 0x8, scoped, tag = 'scoped memory for tpu_custom_call.1']
    #allocation6 [shape = 's32[2]{0}', space=sflag, size = 0x8, scoped, tag = 'scoped memory for tpu_custom_call.1']
    #allocation7 [shape = 'u8[524288]{0}', space=vmem, size = 0x80000, scoped, tag = 'input window, operand 1, single buffered']
    #allocation8 [shape = 's32[1]{0}', space=sflag, size = 0x4, scoped, tag = 'scoped memory for tpu_custom_call.1']
    #allocation9 [shape = 'u8[524288]{0}', space=vmem, size = 0x80000, scoped, tag = 'input window, operand 4, single buffered']
    #allocation10 [shape = 'u8[131072]{0}', space=vmem, size = 0x20000, scoped, tag = 'input window, operand 7, single buffered']
    #allocation11 [shape = 's32[1]{0}', space=sflag, size = 0x4, scoped, tag = 'scoped memory for tpu_custom_call.1']
    #allocation12 [shape = 'u8[81920]{0}', space=vmem, size = 0x14000, scoped, tag = 'output window, operand 0']
    %16 = vsyncpa [#allocation5], 0
    %s17 = scalar_lea.sflag [#allocation5], 1
    %18 = vsyncpa %s17, 0
    %19 = vsyncpa [#allocation8], 0
    %20 = vsyncpa [#allocation11], 0
    %21 = vsyncpa [#allocation6], 0
    %s22 = scalar_lea.sflag [#allocation6], 1
    %23 = vsyncpa %s22, 0
    loop: start=0, step=1, limit=4
    $region2: #{tpu_custom_call.1} parent=1 // loop_pre_header
      _
    $region3: #{tpu_custom_call.1} parent=1 // loop_header
      %s25 = sphi 0, %s29
      %p26 = scmp.ge.s32.totalorder %s25, 4
      %s35 = sphi 0, %s37
      %s38 = sphi 0, %s35
      %s39 = sphi 0, %s38
      %s55 = sphi 0, %s39
      %s59 = sphi 0, %s59
      %s61 = sphi 0, %s59
      %s62 = sphi 0, %s61
      %s76 = sphi 0, %s62
      %s80 = sphi 0, %s80
      %s82 = sphi 0, %s80
      %s83 = sphi 0, %s82
      %s97 = sphi 0, %s83
      %s101 = sphi 0, %s101
      %s103 = sphi 0, %s101
      %s104 = sphi 0, %s103
      %s118 = sphi 0, %s104
      %s122 = sphi 0, %s122
      %s124 = sphi 0, %s122
      %s125 = sphi 0, %s124
      %s139 = sphi 0, %s125
      %s143 = sphi 0, %s143
      %s145 = sphi 0, %s143
      %s146 = sphi 0, %s145
      %s160 = sphi 0, %s146
      %s164 = sphi 0, %s164
      %s166 = sphi 0, %s164
      %s167 = sphi 0, %s166
      %s181 = sphi 0, %s167
      %s185 = sphi 0, %s185
      %s187 = sphi 0, %s185
      %s188 = sphi 0, %s187
      %s202 = sphi 0, %s188
      %s206 = sphi 0, %s206
      %s208 = sphi 0, %s206
      %s209 = sphi 0, %s208
      %s223 = sphi 0, %s209
      %s229 = sphi 0, %s231
      %s232 = sphi 0, %s229
      %s233 = sphi 0, %s232
      %s249 = sphi 0, %s233
    $region4: #{tpu_custom_call.1} parent=1 // loop_header_branch
      %28 = sbr.rel (%p26) target = $region8
    $region5: #{tpu_custom_call.1} parent=1 // loop_body
      %s30 = ssub.s32 %s25, 1
      %s31 = ssub.s32 %s25, 2
      %s32 = sadd.s32 %s25, 1
      %s33 = ssub.s32 %s25, %s32
      %p34 = scmp.eq.s32.totalorder %s33, 0
      %s36 = sadd.s32 %s35, 1
      %s37 = scalar_select %p34, %s35, %s36
      %p40 = pneg %p34
      %p41 = scmp.eq.s32.totalorder %s25, 1
      %p42 = por %p40, %p41
      %p43 = scmp.ne.s32.totalorder %s35, %s38
      %p44 = scmp.eq.s32.totalorder %s25, 0
      %p45 = por %p43, %p44
      %p46 = scmp.ne.s32.totalorder %s35, %s38
      %p47 = scmp.eq.s32.totalorder %s30, 1
      %p48 = por %p46, %p47
      %p49 = scmp.ne.s32.totalorder %s38, %s39
      %p50 = scmp.eq.s32.totalorder %s30, 0
      %p51 = por %p49, %p50
      %p52 = scmp.ne.s32.totalorder %s38, %s39
      %p53 = scmp.eq.s32.totalorder %s31, 1
      %p54 = por %p52, %p53
      %p56 = scmp.ne.s32.totalorder %s39, %s55
      %p57 = scmp.eq.s32.totalorder %s31, 0
      %p58 = por %p56, %p57
      %s60 = sadd.s32 %s59, 1
      %p63 = scmp.eq.s32.totalorder %s25, 1
      %p64 = scmp.ne.s32.totalorder %s59, %s61
      %p65 = scmp.eq.s32.totalorder %s25, 0
      %p66 = por %p64, %p65
      %p67 = scmp.ne.s32.totalorder %s59, %s61
      %p68 = scmp.eq.s32.totalorder %s30, 1
      %p69 = por %p67, %p68
      %p70 = scmp.ne.s32.totalorder %s61, %s62
      %p71 = scmp.eq.s32.totalorder %s30, 0
      %p72 = por %p70, %p71
      %p73 = scmp.ne.s32.totalorder %s61, %s62
      %p74 = scmp.eq.s32.totalorder %s31, 1
      %p75 = por %p73, %p74
      %p77 = scmp.ne.s32.totalorder %s62, %s76
      %p78 = scmp.eq.s32.totalorder %s31, 0
      %p79 = por %p77, %p78
      %s81 = sadd.s32 %s80, 1
      %p84 = scmp.eq.s32.totalorder %s25, 1
      %p85 = scmp.ne.s32.totalorder %s80, %s82
      %p86 = scmp.eq.s32.totalorder %s25, 0
      %p87 = por %p85, %p86
      %p88 = scmp.ne.s32.totalorder %s80, %s82
      %p89 = scmp.eq.s32.totalorder %s30, 1
      %p90 = por %p88, %p89
      %p91 = scmp.ne.s32.totalorder %s82, %s83
      %p92 = scmp.eq.s32.totalorder %s30, 0
      %p93 = por %p91, %p92
      %p94 = scmp.ne.s32.totalorder %s82, %s83
      %p95 = scmp.eq.s32.totalorder %s31, 1
      %p96 = por %p94, %p95
      %p98 = scmp.ne.s32.totalorder %s83, %s97
      %p99 = scmp.eq.s32.totalorder %s31, 0
      %p100 = por %p98, %p99
      %s102 = sadd.s32 %s101, 1
      %p105 = scmp.eq.s32.totalorder %s25, 1
      %p106 = scmp.ne.s32.totalorder %s101, %s103
      %p107 = scmp.eq.s32.totalorder %s25, 0
      %p108 = por %p106, %p107
      %p109 = scmp.ne.s32.totalorder %s101, %s103
      %p110 = scmp.eq.s32.totalorder %s30, 1
      %p111 = por %p109, %p110
      %p112 = scmp.ne.s32.totalorder %s103, %s104
      %p113 = scmp.eq.s32.totalorder %s30, 0
      %p114 = por %p112, %p113
      %p115 = scmp.ne.s32.totalorder %s103, %s104
      %p116 = scmp.eq.s32.totalorder %s31, 1
      %p117 = por %p115, %p116
      %p119 = scmp.ne.s32.totalorder %s104, %s118
      %p120 = scmp.eq.s32.totalorder %s31, 0
      %p121 = por %p119, %p120
      %s123 = sadd.s32 %s122, 1
      %p126 = scmp.eq.s32.totalorder %s25, 1
      %p127 = scmp.ne.s32.totalorder %s122, %s124
      %p128 = scmp.eq.s32.totalorder %s25, 0
      %p129 = por %p127, %p128
      %p130 = scmp.ne.s32.totalorder %s122, %s124
      %p131 = scmp.eq.s32.totalorder %s30, 1
      %p132 = por %p130, %p131
      %p133 = scmp.ne.s32.totalorder %s124, %s125
      %p134 = scmp.eq.s32.totalorder %s30, 0
      %p135 = por %p133, %p134
      %p136 = scmp.ne.s32.totalorder %s124, %s125
      %p137 = scmp.eq.s32.totalorder %s31, 1
      %p138 = por %p136, %p137
      %p140 = scmp.ne.s32.totalorder %s125, %s139
      %p141 = scmp.eq.s32.totalorder %s31, 0
      %p142 = por %p140, %p141
      %s144 = sadd.s32 %s143, 1
      %p147 = scmp.eq.s32.totalorder %s25, 1
      %p148 = scmp.ne.s32.totalorder %s143, %s145
      %p149 = scmp.eq.s32.totalorder %s25, 0
      %p150 = por %p148, %p149
      %p151 = scmp.ne.s32.totalorder %s143, %s145
      %p152 = scmp.eq.s32.totalorder %s30, 1
      %p153 = por %p151, %p152
      %p154 = scmp.ne.s32.totalorder %s145, %s146
      %p155 = scmp.eq.s32.totalorder %s30, 0
      %p156 = por %p154, %p155
      %p157 = scmp.ne.s32.totalorder %s145, %s146
      %p158 = scmp.eq.s32.totalorder %s31, 1
      %p159 = por %p157, %p158
      %p161 = scmp.ne.s32.totalorder %s146, %s160
      %p162 = scmp.eq.s32.totalorder %s31, 0
      %p163 = por %p161, %p162
      %s165 = sadd.s32 %s164, 1
      %p168 = scmp.eq.s32.totalorder %s25, 1
      %p169 = scmp.ne.s32.totalorder %s164, %s166
      %p170 = scmp.eq.s32.totalorder %s25, 0
      %p171 = por %p169, %p170
      %p172 = scmp.ne.s32.totalorder %s164, %s166
      %p173 = scmp.eq.s32.totalorder %s30, 1
      %p174 = por %p172, %p173
      %p175 = scmp.ne.s32.totalorder %s166, %s167
      %p176 = scmp.eq.s32.totalorder %s30, 0
      %p177 = por %p175, %p176
      %p178 = scmp.ne.s32.totalorder %s166, %s167
      %p179 = scmp.eq.s32.totalorder %s31, 1
      %p180 = por %p178, %p179
      %p182 = scmp.ne.s32.totalorder %s167, %s181
      %p183 = scmp.eq.s32.totalorder %s31, 0
      %p184 = por %p182, %p183
      %s186 = sadd.s32 %s185, 1
      %p189 = scmp.eq.s32.totalorder %s25, 1
      %p190 = scmp.ne.s32.totalorder %s185, %s187
      %p191 = scmp.eq.s32.totalorder %s25, 0
      %p192 = por %p190, %p191
      %p193 = scmp.ne.s32.totalorder %s185, %s187
      %p194 = scmp.eq.s32.totalorder %s30, 1
      %p195 = por %p193, %p194
      %p196 = scmp.ne.s32.totalorder %s187, %s188
      %p197 = scmp.eq.s32.totalorder %s30, 0
      %p198 = por %p196, %p197
      %p199 = scmp.ne.s32.totalorder %s187, %s188
      %p200 = scmp.eq.s32.totalorder %s31, 1
      %p201 = por %p199, %p200
      %p203 = scmp.ne.s32.totalorder %s188, %s202
      %p204 = scmp.eq.s32.totalorder %s31, 0
      %p205 = por %p203, %p204
      %s207 = sadd.s32 %s206, 1
      %p210 = scmp.eq.s32.totalorder %s25, 1
      %p211 = scmp.ne.s32.totalorder %s206, %s208
      %p212 = scmp.eq.s32.totalorder %s25, 0
      %p213 = por %p211, %p212
      %p214 = scmp.ne.s32.totalorder %s206, %s208
      %p215 = scmp.eq.s32.totalorder %s30, 1
      %p216 = por %p214, %p215
      %p217 = scmp.ne.s32.totalorder %s208, %s209
      %p218 = scmp.eq.s32.totalorder %s30, 0
      %p219 = por %p217, %p218
      %p220 = scmp.ne.s32.totalorder %s208, %s209
      %p221 = scmp.eq.s32.totalorder %s31, 1
      %p222 = por %p220, %p221
      %p224 = scmp.ne.s32.totalorder %s209, %s223
      %p225 = scmp.eq.s32.totalorder %s31, 0
      %p226 = por %p224, %p225
      %s227 = ssub.s32 %s25, %s32
      %p228 = scmp.eq.s32.totalorder %s227, 0
      %s230 = sadd.s32 %s229, 1
      %s231 = scalar_select %p228, %s229, %s230
      %p234 = pneg %p228
      %p235 = scmp.eq.s32.totalorder %s25, 1
      %p236 = por %p234, %p235
      %p237 = scmp.ne.s32.totalorder %s229, %s232
      %p238 = scmp.eq.s32.totalorder %s25, 0
      %p239 = por %p237, %p238
      %p240 = scmp.ne.s32.totalorder %s229, %s232
      %p241 = scmp.eq.s32.totalorder %s30, 1
      %p242 = por %p240, %p241
      %p243 = scmp.ne.s32.totalorder %s232, %s233
      %p244 = scmp.eq.s32.totalorder %s30, 0
      %p245 = por %p243, %p244
      %p246 = scmp.ne.s32.totalorder %s232, %s233
      %p247 = scmp.eq.s32.totalorder %s31, 1
      %p248 = por %p246, %p247
      %p250 = scmp.ne.s32.totalorder %s233, %s249
      %p251 = scmp.eq.s32.totalorder %s31, 0
      %p252 = por %p250, %p251
      %p253 = scmp.le.s32.totalorder 1, %s25
      %p254 = scmp.lt.s32.totalorder %s25, 3
      %p255 = pnand %p253, %p254
      %p256 = pneg %p255
      // Predicated region
      $region9: #{tpu_custom_call.1} parent=5 // pred_check
        _
      $region10: #{tpu_custom_call.1} parent=5 // pred_check_branch
        %258 = sbr.rel (%p255) target = $region12
      $region11: #{tpu_custom_call.1} parent=5 // pred_region
        %s259 = ssub.s32 %s25, 1
        // Predicated region
        $region13: #{tpu_custom_call.1} parent=11 // pred_check
          %p260 = pneg %p72
        $region14: #{tpu_custom_call.1} parent=11 // pred_check_branch
          %262 = sbr.rel (%p260) target = $region16
        $region15: #{tpu_custom_call.1} parent=11 // pred_region
          %s264 = ssub.s32 16384, 16384
          %265 = vsyncadd [#allocation8], %s264
          %s266 = sshll.u32 [#allocation7], 4
          %s267 = int_to_ptr.vmem [resolvable:$true] %s266
          %272 = dma.hbm_to_vmem [thread:$0]  %s1, 16384, %s267, [#allocation8], 256, 256, 16
        $region16: #{tpu_custom_call.1} parent=11 // pred_fallthru
          _
        // Predicated region
        $region17: #{tpu_custom_call.1} parent=11 // pred_check
          %p273 = pneg %p93
        $region18: #{tpu_custom_call.1} parent=11 // pred_check_branch
          %275 = sbr.rel (%p273) target = $region20
        $region19: #{tpu_custom_call.1} parent=11 // pred_region
          _
        $region20: #{tpu_custom_call.1} parent=11 // pred_fallthru
          _
        // Predicated region
        $region21: #{tpu_custom_call.1} parent=11 // pred_check
          %p276 = pneg %p114
        $region22: #{tpu_custom_call.1} parent=11 // pred_check_branch
          %278 = sbr.rel (%p276) target = $region24
        $region23: #{tpu_custom_call.1} parent=11 // pred_region
          _
        $region24: #{tpu_custom_call.1} parent=11 // pred_fallthru
          _
        // Predicated region
        $region25: #{tpu_custom_call.1} parent=11 // pred_check
          %p279 = pneg %p135
        $region26: #{tpu_custom_call.1} parent=11 // pred_check_branch
          %281 = sbr.rel (%p279) target = $region28
        $region27: #{tpu_custom_call.1} parent=11 // pred_region
          %s283 = ssub.s32 16384, 16384
          %284 = vsyncadd [#allocation8], %s283
          %s285 = sshll.u32 [#allocation9], 4
          %s286 = int_to_ptr.vmem [resolvable:$true] %s285
          %291 = dma.hbm_to_vmem [thread:$0]  %s4, 16384, %s286, [#allocation8], 256, 256, 16
        $region28: #{tpu_custom_call.1} parent=11 // pred_fallthru
          _
        // Predicated region
        $region29: #{tpu_custom_call.1} parent=11 // pred_check
          %p292 = pneg %p156
        $region30: #{tpu_custom_call.1} parent=11 // pred_check_branch
          %294 = sbr.rel (%p292) target = $region32
        $region31: #{tpu_custom_call.1} parent=11 // pred_region
          _
        $region32: #{tpu_custom_call.1} parent=11 // pred_fallthru
          _
        // Predicated region
        $region33: #{tpu_custom_call.1} parent=11 // pred_check
          %p295 = pneg %p177
        $region34: #{tpu_custom_call.1} parent=11 // pred_check_branch
          %297 = sbr.rel (%p295) target = $region36
        $region35: #{tpu_custom_call.1} parent=11 // pred_region
          _
        $region36: #{tpu_custom_call.1} parent=11 // pred_fallthru
          _
        // Predicated region
        $region37: #{tpu_custom_call.1} parent=11 // pred_check
          %p298 = pneg %p198
        $region38: #{tpu_custom_call.1} parent=11 // pred_check_branch
          %300 = sbr.rel (%p298) target = $region40
        $region39: #{tpu_custom_call.1} parent=11 // pred_region
          %s302 = ssub.s32 4096, 4096
          %303 = vsyncadd [#allocation11], %s302
          %s304 = sshll.u32 [#allocation10], 4
          %s305 = int_to_ptr.vmem [resolvable:$true] %s304
          %310 = dma.hbm_to_vmem [thread:$0]  %s7, 4096, %s305, [#allocation11], 64, 64, 4
        $region40: #{tpu_custom_call.1} parent=11 // pred_fallthru
          _
        // Predicated region
        $region41: #{tpu_custom_call.1} parent=11 // pred_check
          %p311 = pneg %p219
        $region42: #{tpu_custom_call.1} parent=11 // pred_check_branch
          %313 = sbr.rel (%p311) target = $region44
        $region43: #{tpu_custom_call.1} parent=11 // pred_region
          _
        $region44: #{tpu_custom_call.1} parent=11 // pred_fallthru
          _
      $region12: #{tpu_custom_call.1} parent=5 // pred_fallthru
        _
      %p314 = scmp.lt.s32.totalorder %s25, 2
      // Predicated region
      $region45: #{tpu_custom_call.1} parent=5 // pred_check
        %p315 = pneg %p314
      $region46: #{tpu_custom_call.1} parent=5 // pred_check_branch
        %317 = sbr.rel (%p315) target = $region48
      $region47: #{tpu_custom_call.1} parent=5 // pred_region
        // Predicated region
        $region49: #{tpu_custom_call.1} parent=47 // pred_check
          %p318 = pneg %p45
        $region50: #{tpu_custom_call.1} parent=47 // pred_check_branch
          %320 = sbr.rel (%p318) target = $region52
        $region51: #{tpu_custom_call.1} parent=47 // pred_region
          %s321 = sand.u32 %s35, 1
          %s322 = scalar_lea.sflag [#allocation5], %s321
          %s323 = sand.u32 %s35, 1
          %s324 = smul.addr %s323, 640
          %s325 = scalar_lea.vmem [#allocation4], %s324
          %s326 = smul.u32 20, %s25
          %s328 = ssub.s32 10240, 10240
          %329 = vsyncadd %s322, %s328
          %s330 = smul.addr %s326, 4
          %s331 = smul.addr %s330, 128
          %s332 = scalar_lea.hbm %s0, %s331
          %s333 = sshll.u32 %s325, 4
          %s334 = int_to_ptr.vmem [resolvable:$true] %s333
          %339 = dma.hbm_to_vmem [thread:$0]  %s332, 10240, %s334, %s322, 512, 512, 32
        $region52: #{tpu_custom_call.1} parent=47 // pred_fallthru
          _
      $region48: #{tpu_custom_call.1} parent=5 // pred_fallthru
        _
      %p340 = scmp.le.s32.totalorder 1, %s25
      %p341 = scmp.lt.s32.totalorder %s25, 3
      %p342 = pnand %p340, %p341
      %p343 = pneg %p342
      // Predicated region
      $region53: #{tpu_custom_call.1} parent=5 // pred_check
        _
      $region54: #{tpu_custom_call.1} parent=5 // pred_check_branch
        %345 = sbr.rel (%p342) target = $region56
      $region55: #{tpu_custom_call.1} parent=5 // pred_region
        %s346 = ssub.s32 %s25, 1
        %s347 = sand.u32 %s38, 1
        %s348 = scalar_lea.sflag [#allocation5], %s347
        %s349 = sand.u32 %s38, 1
        %s350 = smul.addr %s349, 640
        %s351 = scalar_lea.vmem [#allocation4], %s350
        // Predicated region
        $region57: #{tpu_custom_call.1} parent=55 // pred_check
          %p352 = pneg %p51
        $region58: #{tpu_custom_call.1} parent=55 // pred_check_branch
          %354 = sbr.rel (%p352) target = $region60
        $region59: #{tpu_custom_call.1} parent=55 // pred_region
          %355 = dma.done %s348, 10240
        $region60: #{tpu_custom_call.1} parent=55 // pred_fallthru
          _
        // Predicated region
        $region61: #{tpu_custom_call.1} parent=55 // pred_check
          %p356 = pneg %p72
        $region62: #{tpu_custom_call.1} parent=55 // pred_check_branch
          %358 = sbr.rel (%p356) target = $region64
        $region63: #{tpu_custom_call.1} parent=55 // pred_region
          %359 = dma.done [#allocation8], 16384
        $region64: #{tpu_custom_call.1} parent=55 // pred_fallthru
          _
        // Predicated region
        $region65: #{tpu_custom_call.1} parent=55 // pred_check
          %p360 = pneg %p135
        $region66: #{tpu_custom_call.1} parent=55 // pred_check_branch
          %362 = sbr.rel (%p360) target = $region68
        $region67: #{tpu_custom_call.1} parent=55 // pred_region
          %363 = dma.done [#allocation8], 16384
        $region68: #{tpu_custom_call.1} parent=55 // pred_fallthru
          _
        // Predicated region
        $region69: #{tpu_custom_call.1} parent=55 // pred_check
          %p364 = pneg %p198
        $region70: #{tpu_custom_call.1} parent=55 // pred_check_branch
          %366 = sbr.rel (%p364) target = $region72
        $region71: #{tpu_custom_call.1} parent=55 // pred_region
          %367 = dma.done [#allocation11], 4096
        $region72: #{tpu_custom_call.1} parent=55 // pred_fallthru
          _
        %s368 = sand.u32 %s38, 1
        %s369 = scalar_lea.sflag [#allocation5], %s368
        %s370 = sand.u32 %s38, 1
        %s371 = smul.addr %s370, 640
        %s372 = scalar_lea.vmem [#allocation4], %s371
        %p373 = pneg %p51
        %p374 = pneg %p48
        %p375 = pneg %p72
        %p376 = pneg %p69
        %p377 = pneg %p93
        %p378 = pneg %p90
        %p379 = pneg %p114
        %p380 = pneg %p111
        %p381 = pneg %p135
        %p382 = pneg %p132
        %p383 = pneg %p156
        %p384 = pneg %p153
        %p385 = pneg %p177
        %p386 = pneg %p174
        %p387 = pneg %p198
        %p388 = pneg %p195
        %p389 = pneg %p219
        %p390 = pneg %p216
        %p391 = pneg %p245
        %p392 = pneg %p242
        %s393 = sand.u32 %s232, 1
        %s394 = scalar_lea.sflag [#allocation6], %s393
        %s395 = sand.u32 %s232, 1
        %s396 = smul.addr %s395, 80
        %s397 = scalar_lea.vmem [#allocation12], %s396
        %s398 = smul.u32 20, %s30
        %s399 = smul.u32 20, %s30
        %s401 = sld [smem:[#allocation2]]
        %s402 = sld [smem:[#allocation3]]
        %v403 = vld [vmem:[%s351] sm:$0xff]
        %v404 = vld [vmem:[%s351 + $0x8] sm:$0xff]
        %v405 = vld [vmem:[%s351 + $0x10] sm:$0xff]
        %v406 = vld [vmem:[%s351 + $0x18] sm:$0xff]
        %v407 = vld [vmem:[%s351 + $0x20] sm:$0xff]
        %v408 = vld [vmem:[%s351 + $0x28] sm:$0xff]
        %v409 = vld [vmem:[%s351 + $0x30] sm:$0xff]
        %v410 = vld [vmem:[%s351 + $0x38] sm:$0xff]
        %v411 = vld [vmem:[%s351 + $0x40] sm:$0xff]
        %v412 = vld [vmem:[%s351 + $0x48] sm:$0xff]
        %v413 = vld [vmem:[%s351 + $0x50] sm:$0xff]
        %v414 = vld [vmem:[%s351 + $0x58] sm:$0xff]
        %v415 = vld [vmem:[%s351 + $0x60] sm:$0xff]
        %v416 = vld [vmem:[%s351 + $0x68] sm:$0xff]
        %v417 = vld [vmem:[%s351 + $0x70] sm:$0xff]
        %v418 = vld [vmem:[%s351 + $0x78] sm:$0xff]
        %v419 = vld [vmem:[%s351 + $0x80] sm:$0xff]
        %v420 = vld [vmem:[%s351 + $0x88] sm:$0xff]
        %v421 = vld [vmem:[%s351 + $0x90] sm:$0xff]
        %v422 = vld [vmem:[%s351 + $0x98] sm:$0xff]
        %v423 = vld [vmem:[%s351 + $0xa0] sm:$0xff]
        %v424 = vld [vmem:[%s351 + $0xa8] sm:$0xff]
        %v425 = vld [vmem:[%s351 + $0xb0] sm:$0xff]
        %v426 = vld [vmem:[%s351 + $0xb8] sm:$0xff]
        %v427 = vld [vmem:[%s351 + $0xc0] sm:$0xff]
        %v428 = vld [vmem:[%s351 + $0xc8] sm:$0xff]
        %v429 = vld [vmem:[%s351 + $0xd0] sm:$0xff]
        %v430 = vld [vmem:[%s351 + $0xd8] sm:$0xff]
        %v431 = vld [vmem:[%s351 + $0xe0] sm:$0xff]
        %v432 = vld [vmem:[%s351 + $0xe8] sm:$0xff]
        %v433 = vld [vmem:[%s351 + $0xf0] sm:$0xff]
        %v434 = vld [vmem:[%s351 + $0xf8] sm:$0xff]
        %v435 = vld [vmem:[%s351 + $0x100] sm:$0xff]
        %v436 = vld [vmem:[%s351 + $0x108] sm:$0xff]
        %v437 = vld [vmem:[%s351 + $0x110] sm:$0xff]
        %v438 = vld [vmem:[%s351 + $0x118] sm:$0xff]
        %v439 = vld [vmem:[%s351 + $0x120] sm:$0xff]
        %v440 = vld [vmem:[%s351 + $0x128] sm:$0xff]
        %v441 = vld [vmem:[%s351 + $0x130] sm:$0xff]
        %v442 = vld [vmem:[%s351 + $0x138] sm:$0xff]
        %v443 = vld [vmem:[%s351 + $0x140] sm:$0xff]
        %v444 = vld [vmem:[%s351 + $0x148] sm:$0xff]
        %v445 = vld [vmem:[%s351 + $0x150] sm:$0xff]
        %v446 = vld [vmem:[%s351 + $0x158] sm:$0xff]
        %v447 = vld [vmem:[%s351 + $0x160] sm:$0xff]
        %v448 = vld [vmem:[%s351 + $0x168] sm:$0xff]
        %v449 = vld [vmem:[%s351 + $0x170] sm:$0xff]
        %v450 = vld [vmem:[%s351 + $0x178] sm:$0xff]
        %v451 = vld [vmem:[%s351 + $0x180] sm:$0xff]
        %v452 = vld [vmem:[%s351 + $0x188] sm:$0xff]
        %v453 = vld [vmem:[%s351 + $0x190] sm:$0xff]
        %v454 = vld [vmem:[%s351 + $0x198] sm:$0xff]
        %v455 = vld [vmem:[%s351 + $0x1a0] sm:$0xff]
        %v456 = vld [vmem:[%s351 + $0x1a8] sm:$0xff]
        %v457 = vld [vmem:[%s351 + $0x1b0] sm:$0xff]
        %v458 = vld [vmem:[%s351 + $0x1b8] sm:$0xff]
        %v459 = vld [vmem:[%s351 + $0x1c0] sm:$0xff]
        %v460 = vld [vmem:[%s351 + $0x1c8] sm:$0xff]
        %v461 = vld [vmem:[%s351 + $0x1d0] sm:$0xff]
        %v462 = vld [vmem:[%s351 + $0x1d8] sm:$0xff]
        %v463 = vld [vmem:[%s351 + $0x1e0] sm:$0xff]
        %v464 = vld [vmem:[%s351 + $0x1e8] sm:$0xff]
        %v465 = vld [vmem:[%s351 + $0x1f0] sm:$0xff]
        %v466 = vld [vmem:[%s351 + $0x1f8] sm:$0xff]
        %v467 = vld [vmem:[%s351 + $0x200] sm:$0xff]
        %v468 = vld [vmem:[%s351 + $0x208] sm:$0xff]
        %v469 = vld [vmem:[%s351 + $0x210] sm:$0xff]
        %v470 = vld [vmem:[%s351 + $0x218] sm:$0xff]
        %v471 = vld [vmem:[%s351 + $0x220] sm:$0xff]
        %v472 = vld [vmem:[%s351 + $0x228] sm:$0xff]
        %v473 = vld [vmem:[%s351 + $0x230] sm:$0xff]
        %v474 = vld [vmem:[%s351 + $0x238] sm:$0xff]
        %v475 = vld [vmem:[%s351 + $0x240] sm:$0xff]
        %v476 = vld [vmem:[%s351 + $0x248] sm:$0xff]
        %v477 = vld [vmem:[%s351 + $0x250] sm:$0xff]
        %v478 = vld [vmem:[%s351 + $0x258] sm:$0xff]
        %v479 = vld [vmem:[%s351 + $0x260] sm:$0xff]
        %v480 = vld [vmem:[%s351 + $0x268] sm:$0xff]
        %v481 = vld [vmem:[%s351 + $0x270] sm:$0xff]
        %v482 = vld [vmem:[%s351 + $0x278] sm:$0xff]
        %v483 = vpack.c.bf16 %v407, %v403
        %v484 = vpack.c.bf16 %v408, %v404
        %v485 = vpack.c.bf16 %v409, %v405
        %v486 = vpack.c.bf16 %v410, %v406
        %v487 = vpack.c.bf16 %v415, %v411
        %v488 = vpack.c.bf16 %v416, %v412
        %v489 = vpack.c.bf16 %v417, %v413
        %v490 = vpack.c.bf16 %v418, %v414
        %v491 = vpack.c.bf16 %v423, %v419
        %v492 = vpack.c.bf16 %v424, %v420
        %v493 = vpack.c.bf16 %v425, %v421
        %v494 = vpack.c.bf16 %v426, %v422
        %v495 = vpack.c.bf16 %v431, %v427
        %v496 = vpack.c.bf16 %v432, %v428
        %v497 = vpack.c.bf16 %v433, %v429
        %v498 = vpack.c.bf16 %v434, %v430
        %v499 = vpack.c.bf16 %v439, %v435
        %v500 = vpack.c.bf16 %v440, %v436
        %v501 = vpack.c.bf16 %v441, %v437
        %v502 = vpack.c.bf16 %v442, %v438
        %v503 = vpack.c.bf16 %v447, %v443
        %v504 = vpack.c.bf16 %v448, %v444
        %v505 = vpack.c.bf16 %v449, %v445
        %v506 = vpack.c.bf16 %v450, %v446
        %v507 = vpack.c.bf16 %v455, %v451
        %v508 = vpack.c.bf16 %v456, %v452
        %v509 = vpack.c.bf16 %v457, %v453
        %v510 = vpack.c.bf16 %v458, %v454
        %v511 = vpack.c.bf16 %v463, %v459
        %v512 = vpack.c.bf16 %v464, %v460
        %v513 = vpack.c.bf16 %v465, %v461
        %v514 = vpack.c.bf16 %v466, %v462
        %v515 = vpack.c.bf16 %v471, %v467
        %v516 = vpack.c.bf16 %v472, %v468
        %v517 = vpack.c.bf16 %v473, %v469
        %v518 = vpack.c.bf16 %v474, %v470
        %v519 = vpack.c.bf16 %v479, %v475
        %v520 = vpack.c.bf16 %v480, %v476
        %v521 = vpack.c.bf16 %v481, %v477
        %v522 = vpack.c.bf16 %v482, %v478
        %v523 = vld [vmem:[#allocation7] sm:$0xff]
        %v524 = vld [vmem:[#allocation7 + $0x8] sm:$0xff]
        %v525 = vld [vmem:[#allocation7 + $0x10] sm:$0xff]
        %v526 = vld [vmem:[#allocation7 + $0x18] sm:$0xff]
        %v527 = vld [vmem:[#allocation7 + $0x20] sm:$0xff]
        %v528 = vld [vmem:[#allocation7 + $0x28] sm:$0xff]
        %v529 = vld [vmem:[#allocation7 + $0x30] sm:$0xff]
        %v530 = vld [vmem:[#allocation7 + $0x38] sm:$0xff]
        %v531 = vld [vmem:[#allocation7 + $0x40] sm:$0xff]
        %v532 = vld [vmem:[#allocation7 + $0x48] sm:$0xff]
        %v533 = vld [vmem:[#allocation7 + $0x50] sm:$0xff]
        %v534 = vld [vmem:[#allocation7 + $0x58] sm:$0xff]
        %v535 = vld [vmem:[#allocation7 + $0x60] sm:$0xff]
        %v536 = vld [vmem:[#allocation7 + $0x68] sm:$0xff]
        %v537 = vld [vmem:[#allocation7 + $0x70] sm:$0xff]
        %v538 = vld [vmem:[#allocation7 + $0x78] sm:$0xff]
        %v539 = vld [vmem:[#allocation7 + $0x80] sm:$0xff]
        %v540 = vld [vmem:[#allocation7 + $0x88] sm:$0xff]
        %v541 = vld [vmem:[#allocation7 + $0x90] sm:$0xff]
        %v542 = vld [vmem:[#allocation7 + $0x98] sm:$0xff]
        %v543 = vld [vmem:[#allocation7 + $0xa0] sm:$0xff]
        %v544 = vld [vmem:[#allocation7 + $0xa8] sm:$0xff]
        %v545 = vld [vmem:[#allocation7 + $0xb0] sm:$0xff]
        %v546 = vld [vmem:[#allocation7 + $0xb8] sm:$0xff]
        %v547 = vld [vmem:[#allocation7 + $0xc0] sm:$0xff]
        %v548 = vld [vmem:[#allocation7 + $0xc8] sm:$0xff]
        %v549 = vld [vmem:[#allocation7 + $0xd0] sm:$0xff]
        %v550 = vld [vmem:[#allocation7 + $0xd8] sm:$0xff]
        %v551 = vld [vmem:[#allocation7 + $0xe0] sm:$0xff]
        %v552 = vld [vmem:[#allocation7 + $0xe8] sm:$0xff]
        %v553 = vld [vmem:[#allocation7 + $0xf0] sm:$0xff]
        %v554 = vld [vmem:[#allocation7 + $0xf8] sm:$0xff]
        %v555 = vld [vmem:[#allocation7 + $0x100] sm:$0xff]
        %v556 = vld [vmem:[#allocation7 + $0x108] sm:$0xff]
        %v557 = vld [vmem:[#allocation7 + $0x110] sm:$0xff]
        %v558 = vld [vmem:[#allocation7 + $0x118] sm:$0xff]
        %v559 = vld [vmem:[#allocation7 + $0x120] sm:$0xff]
        %v560 = vld [vmem:[#allocation7 + $0x128] sm:$0xff]
        %v561 = vld [vmem:[#allocation7 + $0x130] sm:$0xff]
        %v562 = vld [vmem:[#allocation7 + $0x138] sm:$0xff]
        %v563 = vld [vmem:[#allocation7 + $0x140] sm:$0xff]
        %v564 = vld [vmem:[#allocation7 + $0x148] sm:$0xff]
        %v565 = vld [vmem:[#allocation7 + $0x150] sm:$0xff]
        %v566 = vld [vmem:[#allocation7 + $0x158] sm:$0xff]
        %v567 = vld [vmem:[#allocation7 + $0x160] sm:$0xff]
        %v568 = vld [vmem:[#allocation7 + $0x168] sm:$0xff]
        %v569 = vld [vmem:[#allocation7 + $0x170] sm:$0xff]
        %v570 = vld [vmem:[#allocation7 + $0x178] sm:$0xff]
        %v571 = vld [vmem:[#allocation7 + $0x180] sm:$0xff]
        %v572 = vld [vmem:[#allocation7 + $0x188] sm:$0xff]
        %v573 = vld [vmem:[#allocation7 + $0x190] sm:$0xff]
        %v574 = vld [vmem:[#allocation7 + $0x198] sm:$0xff]
        %v575 = vld [vmem:[#allocation7 + $0x1a0] sm:$0xff]
        %v576 = vld [vmem:[#allocation7 + $0x1a8] sm:$0xff]
        %v577 = vld [vmem:[#allocation7 + $0x1b0] sm:$0xff]
        %v578 = vld [vmem:[#allocation7 + $0x1b8] sm:$0xff]
        %v579 = vld [vmem:[#allocation7 + $0x1c0] sm:$0xff]
        %v580 = vld [vmem:[#allocation7 + $0x1c8] sm:$0xff]
        %v581 = vld [vmem:[#allocation7 + $0x1d0] sm:$0xff]
        %v582 = vld [vmem:[#allocation7 + $0x1d8] sm:$0xff]
        %v583 = vld [vmem:[#allocation7 + $0x1e0] sm:$0xff]
        %v584 = vld [vmem:[#allocation7 + $0x1e8] sm:$0xff]
        %v585 = vld [vmem:[#allocation7 + $0x1f0] sm:$0xff]
        %v586 = vld [vmem:[#allocation7 + $0x1f8] sm:$0xff]
        %v587 = vld [vmem:[#allocation7 + $0x200] sm:$0xff]
        %v588 = vld [vmem:[#allocation7 + $0x208] sm:$0xff]
        %v589 = vld [vmem:[#allocation7 + $0x210] sm:$0xff]
        %v590 = vld [vmem:[#allocation7 + $0x218] sm:$0xff]
        %v591 = vld [vmem:[#allocation7 + $0x220] sm:$0xff]
        %v592 = vld [vmem:[#allocation7 + $0x228] sm:$0xff]
        %v593 = vld [vmem:[#allocation7 + $0x230] sm:$0xff]
        %v594 = vld [vmem:[#allocation7 + $0x238] sm:$0xff]
        %v595 = vld [vmem:[#allocation7 + $0x240] sm:$0xff]
        %v596 = vld [vmem:[#allocation7 + $0x248] sm:$0xff]
        %v597 = vld [vmem:[#allocation7 + $0x250] sm:$0xff]
        %v598 = vld [vmem:[#allocation7 + $0x258] sm:$0xff]
        %v599 = vld [vmem:[#allocation7 + $0x260] sm:$0xff]
        %v600 = vld [vmem:[#allocation7 + $0x268] sm:$0xff]
        %v601 = vld [vmem:[#allocation7 + $0x270] sm:$0xff]
        %v602 = vld [vmem:[#allocation7 + $0x278] sm:$0xff]
        %v603 = vld [vmem:[#allocation7 + $0x280] sm:$0xff]
        %v604 = vld [vmem:[#allocation7 + $0x288] sm:$0xff]
        %v605 = vld [vmem:[#allocation7 + $0x290] sm:$0xff]
        %v606 = vld [vmem:[#allocation7 + $0x298] sm:$0xff]
        %v607 = vld [vmem:[#allocation7 + $0x2a0] sm:$0xff]
        %v608 = vld [vmem:[#allocation7 + $0x2a8] sm:$0xff]
        %v609 = vld [vmem:[#allocation7 + $0x2b0] sm:$0xff]
        %v610 = vld [vmem:[#allocation7 + $0x2b8] sm:$0xff]
        %v611 = vld [vmem:[#allocation7 + $0x2c0] sm:$0xff]
        %v612 = vld [vmem:[#allocation7 + $0x2c8] sm:$0xff]
        %v613 = vld [vmem:[#allocation7 + $0x2d0] sm:$0xff]
        %v614 = vld [vmem:[#allocation7 + $0x2d8] sm:$0xff]
        %v615 = vld [vmem:[#allocation7 + $0x2e0] sm:$0xff]
        %v616 = vld [vmem:[#allocation7 + $0x2e8] sm:$0xff]
        %v617 = vld [vmem:[#allocation7 + $0x2f0] sm:$0xff]
        %v618 = vld [vmem:[#allocation7 + $0x2f8] sm:$0xff]
        %v619 = vld [vmem:[#allocation7 + $0x300] sm:$0xff]
        %v620 = vld [vmem:[#allocation7 + $0x308] sm:$0xff]
        %v621 = vld [vmem:[#allocation7 + $0x310] sm:$0xff]
        %v622 = vld [vmem:[#allocation7 + $0x318] sm:$0xff]
        %v623 = vld [vmem:[#allocation7 + $0x320] sm:$0xff]
        %v624 = vld [vmem:[#allocation7 + $0x328] sm:$0xff]
        %v625 = vld [vmem:[#allocation7 + $0x330] sm:$0xff]
        %v626 = vld [vmem:[#allocation7 + $0x338] sm:$0xff]
        %v627 = vld [vmem:[#allocation7 + $0x340] sm:$0xff]
        %v628 = vld [vmem:[#allocation7 + $0x348] sm:$0xff]
        %v629 = vld [vmem:[#allocation7 + $0x350] sm:$0xff]
        %v630 = vld [vmem:[#allocation7 + $0x358] sm:$0xff]
        %v631 = vld [vmem:[#allocation7 + $0x360] sm:$0xff]
        %v632 = vld [vmem:[#allocation7 + $0x368] sm:$0xff]
        %v633 = vld [vmem:[#allocation7 + $0x370] sm:$0xff]
        %v634 = vld [vmem:[#allocation7 + $0x378] sm:$0xff]
        %v635 = vld [vmem:[#allocation7 + $0x380] sm:$0xff]
        %v636 = vld [vmem:[#allocation7 + $0x388] sm:$0xff]
        %v637 = vld [vmem:[#allocation7 + $0x390] sm:$0xff]
        %v638 = vld [vmem:[#allocation7 + $0x398] sm:$0xff]
        %v639 = vld [vmem:[#allocation7 + $0x3a0] sm:$0xff]
        %v640 = vld [vmem:[#allocation7 + $0x3a8] sm:$0xff]
        %v641 = vld [vmem:[#allocation7 + $0x3b0] sm:$0xff]
        %v642 = vld [vmem:[#allocation7 + $0x3b8] sm:$0xff]
        %v643 = vld [vmem:[#allocation7 + $0x3c0] sm:$0xff]
        %v644 = vld [vmem:[#allocation7 + $0x3c8] sm:$0xff]
        %v645 = vld [vmem:[#allocation7 + $0x3d0] sm:$0xff]
        %v646 = vld [vmem:[#allocation7 + $0x3d8] sm:$0xff]
        %v647 = vld [vmem:[#allocation7 + $0x3e0] sm:$0xff]
        %v648 = vld [vmem:[#allocation7 + $0x3e8] sm:$0xff]
        %v649 = vld [vmem:[#allocation7 + $0x3f0] sm:$0xff]
        %v650 = vld [vmem:[#allocation7 + $0x3f8] sm:$0xff]
        %v651 = vld [vmem:[%s2] sm:$0xf]
        %v653 = vlaneseq
        %v654 = vshrl.u32 %v653, 7
        %v655 = vsub.s32 0, %v654
        %v656 = vrot.slane %v651, %v655
        %v657 = vlaneseq
        %v658 = vshrl.u32 %v657, 7
        %v659 = vsub.s32 1, %v658
        %v660 = vrot.slane %v651, %v659
        %v661 = vlaneseq
        %v662 = vshrl.u32 %v661, 7
        %v663 = vsub.s32 2, %v662
        %v664 = vrot.slane %v651, %v663
        %v665 = vlaneseq
        %v666 = vshrl.u32 %v665, 7
        %v667 = vsub.s32 3, %v666
        %v668 = vrot.slane %v651, %v667
        %v801 = vunpack.c.l.b16 %v523
        %v802 = vunpack.c.h.b16 %v523
        %v803 = vunpack.c.l.b16 %v524
        %v804 = vunpack.c.h.b16 %v524
        %v805 = vunpack.c.l.b16 %v525
        %v806 = vunpack.c.h.b16 %v525
        %v807 = vunpack.c.l.b16 %v526
        %v808 = vunpack.c.h.b16 %v526
        %v809 = vunpack.c.l.b16 %v527
        %v810 = vunpack.c.h.b16 %v527
        %v811 = vunpack.c.l.b16 %v528
        %v812 = vunpack.c.h.b16 %v528
        %v813 = vunpack.c.l.b16 %v529
        %v814 = vunpack.c.h.b16 %v529
        %v815 = vunpack.c.l.b16 %v530
        %v816 = vunpack.c.h.b16 %v530
        %v817 = vunpack.c.l.b16 %v531
        %v818 = vunpack.c.h.b16 %v531
        %v819 = vunpack.c.l.b16 %v532
        %v820 = vunpack.c.h.b16 %v532
        %v821 = vunpack.c.l.b16 %v533
        %v822 = vunpack.c.h.b16 %v533
        %v823 = vunpack.c.l.b16 %v534
        %v824 = vunpack.c.h.b16 %v534
        %v825 = vunpack.c.l.b16 %v535
        %v826 = vunpack.c.h.b16 %v535
        %v827 = vunpack.c.l.b16 %v536
        %v828 = vunpack.c.h.b16 %v536
        %v829 = vunpack.c.l.b16 %v537
        %v830 = vunpack.c.h.b16 %v537
        %v831 = vunpack.c.l.b16 %v538
        %v832 = vunpack.c.h.b16 %v538
        %v833 = vunpack.c.l.b16 %v539
        %v834 = vunpack.c.h.b16 %v539
        %v835 = vunpack.c.l.b16 %v540
        %v836 = vunpack.c.h.b16 %v540
        %v837 = vunpack.c.l.b16 %v541
        %v838 = vunpack.c.h.b16 %v541
        %v839 = vunpack.c.l.b16 %v542
        %v840 = vunpack.c.h.b16 %v542
        %v841 = vunpack.c.l.b16 %v543
        %v842 = vunpack.c.h.b16 %v543
        %v843 = vunpack.c.l.b16 %v544
        %v844 = vunpack.c.h.b16 %v544
        %v845 = vunpack.c.l.b16 %v545
        %v846 = vunpack.c.h.b16 %v545
        %v847 = vunpack.c.l.b16 %v546
        %v848 = vunpack.c.h.b16 %v546
        %v849 = vunpack.c.l.b16 %v547
        %v850 = vunpack.c.h.b16 %v547
        %v851 = vunpack.c.l.b16 %v548
        %v852 = vunpack.c.h.b16 %v548
        %v853 = vunpack.c.l.b16 %v549
        %v854 = vunpack.c.h.b16 %v549
        %v855 = vunpack.c.l.b16 %v550
        %v856 = vunpack.c.h.b16 %v550
        %v857 = vunpack.c.l.b16 %v551
        %v858 = vunpack.c.h.b16 %v551
        %v859 = vunpack.c.l.b16 %v552
        %v860 = vunpack.c.h.b16 %v552
        %v861 = vunpack.c.l.b16 %v553
        %v862 = vunpack.c.h.b16 %v553
        %v863 = vunpack.c.l.b16 %v554
        %v864 = vunpack.c.h.b16 %v554
        %v865 = vunpack.c.l.b16 %v555
        %v866 = vunpack.c.h.b16 %v555
        %v867 = vunpack.c.l.b16 %v556
        %v868 = vunpack.c.h.b16 %v556
        %v869 = vunpack.c.l.b16 %v557
        %v870 = vunpack.c.h.b16 %v557
        %v871 = vunpack.c.l.b16 %v558
        %v872 = vunpack.c.h.b16 %v558
        %v873 = vunpack.c.l.b16 %v559
        %v874 = vunpack.c.h.b16 %v559
        %v875 = vunpack.c.l.b16 %v560
        %v876 = vunpack.c.h.b16 %v560
        %v877 = vunpack.c.l.b16 %v561
        %v878 = vunpack.c.h.b16 %v561
        %v879 = vunpack.c.l.b16 %v562
        %v880 = vunpack.c.h.b16 %v562
        %v881 = vunpack.c.l.b16 %v563
        %v882 = vunpack.c.h.b16 %v563
        %v883 = vunpack.c.l.b16 %v564
        %v884 = vunpack.c.h.b16 %v564
        %v885 = vunpack.c.l.b16 %v565
        %v886 = vunpack.c.h.b16 %v565
        %v887 = vunpack.c.l.b16 %v566
        %v888 = vunpack.c.h.b16 %v566
        %v889 = vunpack.c.l.b16 %v567
        %v890 = vunpack.c.h.b16 %v567
        %v891 = vunpack.c.l.b16 %v568
        %v892 = vunpack.c.h.b16 %v568
        %v893 = vunpack.c.l.b16 %v569
        %v894 = vunpack.c.h.b16 %v569
        %v895 = vunpack.c.l.b16 %v570
        %v896 = vunpack.c.h.b16 %v570
        %v897 = vunpack.c.l.b16 %v571
        %v898 = vunpack.c.h.b16 %v571
        %v899 = vunpack.c.l.b16 %v572
        %v900 = vunpack.c.h.b16 %v572
        %v901 = vunpack.c.l.b16 %v573
        %v902 = vunpack.c.h.b16 %v573
        %v903 = vunpack.c.l.b16 %v574
        %v904 = vunpack.c.h.b16 %v574
        %v905 = vunpack.c.l.b16 %v575
        %v906 = vunpack.c.h.b16 %v575
        %v907 = vunpack.c.l.b16 %v576
        %v908 = vunpack.c.h.b16 %v576
        %v909 = vunpack.c.l.b16 %v577
        %v910 = vunpack.c.h.b16 %v577
        %v911 = vunpack.c.l.b16 %v578
        %v912 = vunpack.c.h.b16 %v578
        %v913 = vunpack.c.l.b16 %v579
        %v914 = vunpack.c.h.b16 %v579
        %v915 = vunpack.c.l.b16 %v580
        %v916 = vunpack.c.h.b16 %v580
        %v917 = vunpack.c.l.b16 %v581
        %v918 = vunpack.c.h.b16 %v581
        %v919 = vunpack.c.l.b16 %v582
        %v920 = vunpack.c.h.b16 %v582
        %v921 = vunpack.c.l.b16 %v583
        %v922 = vunpack.c.h.b16 %v583
        %v923 = vunpack.c.l.b16 %v584
        %v924 = vunpack.c.h.b16 %v584
        %v925 = vunpack.c.l.b16 %v585
        %v926 = vunpack.c.h.b16 %v585
        %v927 = vunpack.c.l.b16 %v586
        %v928 = vunpack.c.h.b16 %v586
        %v929 = vunpack.c.l.b16 %v587
        %v930 = vunpack.c.h.b16 %v587
        %v931 = vunpack.c.l.b16 %v588
        %v932 = vunpack.c.h.b16 %v588
        %v933 = vunpack.c.l.b16 %v589
        %v934 = vunpack.c.h.b16 %v589
        %v935 = vunpack.c.l.b16 %v590
        %v936 = vunpack.c.h.b16 %v590
        %v937 = vunpack.c.l.b16 %v591
        %v938 = vunpack.c.h.b16 %v591
        %v939 = vunpack.c.l.b16 %v592
        %v940 = vunpack.c.h.b16 %v592
        %v941 = vunpack.c.l.b16 %v593
        %v942 = vunpack.c.h.b16 %v593
        %v943 = vunpack.c.l.b16 %v594
        %v944 = vunpack.c.h.b16 %v594
        %v945 = vunpack.c.l.b16 %v595
        %v946 = vunpack.c.h.b16 %v595
        %v947 = vunpack.c.l.b16 %v596
        %v948 = vunpack.c.h.b16 %v596
        %v949 = vunpack.c.l.b16 %v597
        %v950 = vunpack.c.h.b16 %v597
        %v951 = vunpack.c.l.b16 %v598
        %v952 = vunpack.c.h.b16 %v598
        %v953 = vunpack.c.l.b16 %v599
        %v954 = vunpack.c.h.b16 %v599
        %v955 = vunpack.c.l.b16 %v600
        %v956 = vunpack.c.h.b16 %v600
        %v957 = vunpack.c.l.b16 %v601
        %v958 = vunpack.c.h.b16 %v601
        %v959 = vunpack.c.l.b16 %v602
        %v960 = vunpack.c.h.b16 %v602
        %v961 = vunpack.c.l.b16 %v603
        %v962 = vunpack.c.h.b16 %v603
        %v963 = vunpack.c.l.b16 %v604
        %v964 = vunpack.c.h.b16 %v604
        %v965 = vunpack.c.l.b16 %v605
        %v966 = vunpack.c.h.b16 %v605
        %v967 = vunpack.c.l.b16 %v606
        %v968 = vunpack.c.h.b16 %v606
        %v969 = vunpack.c.l.b16 %v607
        %v970 = vunpack.c.h.b16 %v607
        %v971 = vunpack.c.l.b16 %v608
        %v972 = vunpack.c.h.b16 %v608
        %v973 = vunpack.c.l.b16 %v609
        %v974 = vunpack.c.h.b16 %v609
        %v975 = vunpack.c.l.b16 %v610
        %v976 = vunpack.c.h.b16 %v610
        %v977 = vunpack.c.l.b16 %v611
        %v978 = vunpack.c.h.b16 %v611
        %v979 = vunpack.c.l.b16 %v612
        %v980 = vunpack.c.h.b16 %v612
        %v981 = vunpack.c.l.b16 %v613
        %v982 = vunpack.c.h.b16 %v613
        %v983 = vunpack.c.l.b16 %v614
        %v984 = vunpack.c.h.b16 %v614
        %v985 = vunpack.c.l.b16 %v615
        %v986 = vunpack.c.h.b16 %v615
        %v987 = vunpack.c.l.b16 %v616
        %v988 = vunpack.c.h.b16 %v616
        %v989 = vunpack.c.l.b16 %v617
        %v990 = vunpack.c.h.b16 %v617
        %v991 = vunpack.c.l.b16 %v618
        %v992 = vunpack.c.h.b16 %v618
        %v993 = vunpack.c.l.b16 %v619
        %v994 = vunpack.c.h.b16 %v619
        %v995 = vunpack.c.l.b16 %v620
        %v996 = vunpack.c.h.b16 %v620
        %v997 = vunpack.c.l.b16 %v621
        %v998 = vunpack.c.h.b16 %v621
        %v999 = vunpack.c.l.b16 %v622
        %v1000 = vunpack.c.h.b16 %v622
        %v1001 = vunpack.c.l.b16 %v623
        %v1002 = vunpack.c.h.b16 %v623
        %v1003 = vunpack.c.l.b16 %v624
        %v1004 = vunpack.c.h.b16 %v624
        %v1005 = vunpack.c.l.b16 %v625
        %v1006 = vunpack.c.h.b16 %v625
        %v1007 = vunpack.c.l.b16 %v626
        %v1008 = vunpack.c.h.b16 %v626
        %v1009 = vunpack.c.l.b16 %v627
        %v1010 = vunpack.c.h.b16 %v627
        %v1011 = vunpack.c.l.b16 %v628
        %v1012 = vunpack.c.h.b16 %v628
        %v1013 = vunpack.c.l.b16 %v629
        %v1014 = vunpack.c.h.b16 %v629
        %v1015 = vunpack.c.l.b16 %v630
        %v1016 = vunpack.c.h.b16 %v630
        %v1017 = vunpack.c.l.b16 %v631
        %v1018 = vunpack.c.h.b16 %v631
        %v1019 = vunpack.c.l.b16 %v632
        %v1020 = vunpack.c.h.b16 %v632
        %v1021 = vunpack.c.l.b16 %v633
        %v1022 = vunpack.c.h.b16 %v633
        %v1023 = vunpack.c.l.b16 %v634
        %v1024 = vunpack.c.h.b16 %v634
        %v1025 = vunpack.c.l.b16 %v635
        %v1026 = vunpack.c.h.b16 %v635
        %v1027 = vunpack.c.l.b16 %v636
        %v1028 = vunpack.c.h.b16 %v636
        %v1029 = vunpack.c.l.b16 %v637
        %v1030 = vunpack.c.h.b16 %v637
        %v1031 = vunpack.c.l.b16 %v638
        %v1032 = vunpack.c.h.b16 %v638
        %v1033 = vunpack.c.l.b16 %v639
        %v1034 = vunpack.c.h.b16 %v639
        %v1035 = vunpack.c.l.b16 %v640
        %v1036 = vunpack.c.h.b16 %v640
        %v1037 = vunpack.c.l.b16 %v641
        %v1038 = vunpack.c.h.b16 %v641
        %v1039 = vunpack.c.l.b16 %v642
        %v1040 = vunpack.c.h.b16 %v642
        %v1041 = vunpack.c.l.b16 %v643
        %v1042 = vunpack.c.h.b16 %v643
        %v1043 = vunpack.c.l.b16 %v644
        %v1044 = vunpack.c.h.b16 %v644
        %v1045 = vunpack.c.l.b16 %v645
        %v1046 = vunpack.c.h.b16 %v645
        %v1047 = vunpack.c.l.b16 %v646
        %v1048 = vunpack.c.h.b16 %v646
        %v1049 = vunpack.c.l.b16 %v647
        %v1050 = vunpack.c.h.b16 %v647
        %v1051 = vunpack.c.l.b16 %v648
        %v1052 = vunpack.c.h.b16 %v648
        %v1053 = vunpack.c.l.b16 %v649
        %v1054 = vunpack.c.h.b16 %v649
        %v1055 = vunpack.c.l.b16 %v650
        %v1056 = vunpack.c.h.b16 %v650
        %v1057 = vpack.c.b16 %v805, %v801
        %v1058 = vpack.c.b16 %v806, %v802
        %v1059 = vpack.c.b16 %v807, %v803
        %v1060 = vpack.c.b16 %v808, %v804
        %v1061 = vpack.c.b16 %v813, %v809
        %v1062 = vpack.c.b16 %v814, %v810
        %v1063 = vpack.c.b16 %v815, %v811
        %v1064 = vpack.c.b16 %v816, %v812
        %v1065 = vpack.c.b16 %v821, %v817
        %v1066 = vpack.c.b16 %v822, %v818
        %v1067 = vpack.c.b16 %v823, %v819
        %v1068 = vpack.c.b16 %v824, %v820
        %v1069 = vpack.c.b16 %v829, %v825
        %v1070 = vpack.c.b16 %v830, %v826
        %v1071 = vpack.c.b16 %v831, %v827
        %v1072 = vpack.c.b16 %v832, %v828
        %v1073 = vpack.c.b16 %v837, %v833
        %v1074 = vpack.c.b16 %v838, %v834
        %v1075 = vpack.c.b16 %v839, %v835
        %v1076 = vpack.c.b16 %v840, %v836
        %v1077 = vpack.c.b16 %v845, %v841
        %v1078 = vpack.c.b16 %v846, %v842
        %v1079 = vpack.c.b16 %v847, %v843
        %v1080 = vpack.c.b16 %v848, %v844
        %v1081 = vpack.c.b16 %v853, %v849
        %v1082 = vpack.c.b16 %v854, %v850
        %v1083 = vpack.c.b16 %v855, %v851
        %v1084 = vpack.c.b16 %v856, %v852
        %v1085 = vpack.c.b16 %v861, %v857
        %v1086 = vpack.c.b16 %v862, %v858
        %v1087 = vpack.c.b16 %v863, %v859
        %v1088 = vpack.c.b16 %v864, %v860
        %v1089 = vpack.c.b16 %v869, %v865
        %v1090 = vpack.c.b16 %v870, %v866
        %v1091 = vpack.c.b16 %v871, %v867
        %v1092 = vpack.c.b16 %v872, %v868
        %v1093 = vpack.c.b16 %v877, %v873
        %v1094 = vpack.c.b16 %v878, %v874
        %v1095 = vpack.c.b16 %v879, %v875
        %v1096 = vpack.c.b16 %v880, %v876
        %v1097 = vpack.c.b16 %v885, %v881
        %v1098 = vpack.c.b16 %v886, %v882
        %v1099 = vpack.c.b16 %v887, %v883
        %v1100 = vpack.c.b16 %v888, %v884
        %v1101 = vpack.c.b16 %v893, %v889
        %v1102 = vpack.c.b16 %v894, %v890
        %v1103 = vpack.c.b16 %v895, %v891
        %v1104 = vpack.c.b16 %v896, %v892
        %v1105 = vpack.c.b16 %v901, %v897
        %v1106 = vpack.c.b16 %v902, %v898
        %v1107 = vpack.c.b16 %v903, %v899
        %v1108 = vpack.c.b16 %v904, %v900
        %v1109 = vpack.c.b16 %v909, %v905
        %v1110 = vpack.c.b16 %v910, %v906
        %v1111 = vpack.c.b16 %v911, %v907
        %v1112 = vpack.c.b16 %v912, %v908
        %v1113 = vpack.c.b16 %v917, %v913
        %v1114 = vpack.c.b16 %v918, %v914
        %v1115 = vpack.c.b16 %v919, %v915
        %v1116 = vpack.c.b16 %v920, %v916
        %v1117 = vpack.c.b16 %v925, %v921
        %v1118 = vpack.c.b16 %v926, %v922
        %v1119 = vpack.c.b16 %v927, %v923
        %v1120 = vpack.c.b16 %v928, %v924
        %v1121 = vpack.c.b16 %v933, %v929
        %v1122 = vpack.c.b16 %v934, %v930
        %v1123 = vpack.c.b16 %v935, %v931
        %v1124 = vpack.c.b16 %v936, %v932
        %v1125 = vpack.c.b16 %v941, %v937
        %v1126 = vpack.c.b16 %v942, %v938
        %v1127 = vpack.c.b16 %v943, %v939
        %v1128 = vpack.c.b16 %v944, %v940
        %v1129 = vpack.c.b16 %v949, %v945
        %v1130 = vpack.c.b16 %v950, %v946
        %v1131 = vpack.c.b16 %v951, %v947
        %v1132 = vpack.c.b16 %v952, %v948
        %v1133 = vpack.c.b16 %v957, %v953
        %v1134 = vpack.c.b16 %v958, %v954
        %v1135 = vpack.c.b16 %v959, %v955
        %v1136 = vpack.c.b16 %v960, %v956
        %v1137 = vpack.c.b16 %v965, %v961
        %v1138 = vpack.c.b16 %v966, %v962
        %v1139 = vpack.c.b16 %v967, %v963
        %v1140 = vpack.c.b16 %v968, %v964
        %v1141 = vpack.c.b16 %v973, %v969
        %v1142 = vpack.c.b16 %v974, %v970
        %v1143 = vpack.c.b16 %v975, %v971
        %v1144 = vpack.c.b16 %v976, %v972
        %v1145 = vpack.c.b16 %v981, %v977
        %v1146 = vpack.c.b16 %v982, %v978
        %v1147 = vpack.c.b16 %v983, %v979
        %v1148 = vpack.c.b16 %v984, %v980
        %v1149 = vpack.c.b16 %v989, %v985
        %v1150 = vpack.c.b16 %v990, %v986
        %v1151 = vpack.c.b16 %v991, %v987
        %v1152 = vpack.c.b16 %v992, %v988
        %v1153 = vpack.c.b16 %v997, %v993
        %v1154 = vpack.c.b16 %v998, %v994
        %v1155 = vpack.c.b16 %v999, %v995
        %v1156 = vpack.c.b16 %v1000, %v996
        %v1157 = vpack.c.b16 %v1005, %v1001
        %v1158 = vpack.c.b16 %v1006, %v1002
        %v1159 = vpack.c.b16 %v1007, %v1003
        %v1160 = vpack.c.b16 %v1008, %v1004
        %v1161 = vpack.c.b16 %v1013, %v1009
        %v1162 = vpack.c.b16 %v1014, %v1010
        %v1163 = vpack.c.b16 %v1015, %v1011
        %v1164 = vpack.c.b16 %v1016, %v1012
        %v1165 = vpack.c.b16 %v1021, %v1017
        %v1166 = vpack.c.b16 %v1022, %v1018
        %v1167 = vpack.c.b16 %v1023, %v1019
        %v1168 = vpack.c.b16 %v1024, %v1020
        %v1169 = vpack.c.b16 %v1029, %v1025
        %v1170 = vpack.c.b16 %v1030, %v1026
        %v1171 = vpack.c.b16 %v1031, %v1027
        %v1172 = vpack.c.b16 %v1032, %v1028
        %v1173 = vpack.c.b16 %v1037, %v1033
        %v1174 = vpack.c.b16 %v1038, %v1034
        %v1175 = vpack.c.b16 %v1039, %v1035
        %v1176 = vpack.c.b16 %v1040, %v1036
        %v1177 = vpack.c.b16 %v1045, %v1041
        %v1178 = vpack.c.b16 %v1046, %v1042
        %v1179 = vpack.c.b16 %v1047, %v1043
        %v1180 = vpack.c.b16 %v1048, %v1044
        %v1181 = vpack.c.b16 %v1053, %v1049
        %v1182 = vpack.c.b16 %v1054, %v1050
        %v1183 = vpack.c.b16 %v1055, %v1051
        %v1184 = vpack.c.b16 %v1056, %v1052
        %1313 = vmatprep.subr.bf16.mxu0 %v1058
        %1314 = vmatpush1.bf16.msra.mxu0 %v1057
        %1315 = vmatprep.subr.bf16.mxu0 %v1062
        %1316 = vmatpush1.bf16.msra.mxu0 %v1061
        %1317 = vmatprep.subr.bf16.mxu0 %v1066
        %1318 = vmatpush1.bf16.msra.mxu0 %v1065
        %1319 = vmatprep.subr.bf16.mxu0 %v1070
        %1320 = vmatpush1.bf16.msra.mxu0 %v1069
        %1321 = vmatprep.subr.bf16.mxu0 %v1074
        %1322 = vmatpush1.bf16.msra.mxu0 %v1073
        %1323 = vmatprep.subr.bf16.mxu0 %v1078
        %1324 = vmatpush1.bf16.msra.mxu0 %v1077
        %1325 = vmatprep.subr.bf16.mxu0 %v1082
        %1326 = vmatpush1.bf16.msra.mxu0 %v1081
        %1327 = vmatprep.subr.bf16.mxu0 %v1086
        %1328 = vmatpush1.bf16.msra.mxu0 %v1085
        %1329 = vmatprep.subr.bf16.mxu0 %v1090
        %1330 = vmatpush1.bf16.msra.mxu0 %v1089
        %1331 = vmatprep.subr.bf16.mxu0 %v1094
        %1332 = vmatpush1.bf16.msra.mxu0 %v1093
        %1333 = vmatprep.subr.bf16.mxu0 %v1098
        %1334 = vmatpush1.bf16.msra.mxu0 %v1097
        %1335 = vmatprep.subr.bf16.mxu0 %v1102
        %1336 = vmatpush1.bf16.msra.mxu0 %v1101
        %1337 = vmatprep.subr.bf16.mxu0 %v1106
        %1338 = vmatpush1.bf16.msra.mxu0 %v1105
        %1339 = vmatprep.subr.bf16.mxu0 %v1110
        %1340 = vmatpush1.bf16.msra.mxu0 %v1109
        %1341 = vmatprep.subr.bf16.mxu0 %v1114
        %1342 = vmatpush1.bf16.msra.mxu0 %v1113
        %1343 = vmatprep.subr.bf16.mxu0 %v1118
        %1344 = vmatpush1.bf16.msra.mxu0 %v1117
        %1345 = vmatprep.mubr.bf16.mxu0 %v484
        %1346 = vmatmul.mubr.bf16.gmra.mrb[0].mxu0 %v483
        %v1347 = vpop.f32.mrb[0].mxu0
        %v1348 = vadd.f32 %v656, %v1347
        %v1349 = vpop.f32.mrb[0].mxu0
        %v1350 = vadd.f32 %v660, %v1349
        %v1351 = vpop.f32.mrb[0].mxu0
        %v1352 = vadd.f32 %v656, %v1351
        %v1353 = vpop.f32.mrb[0].mxu0
        %v1354 = vadd.f32 %v660, %v1353
        %1355 = vmatprep.mubr.bf16.mxu0 %v488
        %1356 = vmatmul.mubr.bf16.gmra.mrb[0].mxu0 %v487
        %v1357 = vpop.f32.mrb[0].mxu0
        %v1358 = vadd.f32 %v656, %v1357
        %v1359 = vpop.f32.mrb[0].mxu0
        %v1360 = vadd.f32 %v660, %v1359
        %v1361 = vpop.f32.mrb[0].mxu0
        %v1362 = vadd.f32 %v656, %v1361
        %v1363 = vpop.f32.mrb[0].mxu0
        %v1364 = vadd.f32 %v660, %v1363
        %1365 = vmatprep.mubr.bf16.mxu0 %v492
        %1366 = vmatmul.mubr.bf16.gmra.mrb[0].mxu0 %v491
        %v1367 = vpop.f32.mrb[0].mxu0
        %v1368 = vadd.f32 %v656, %v1367
        %v1369 = vpop.f32.mrb[0].mxu0
        %v1370 = vadd.f32 %v660, %v1369
        %v1371 = vpop.f32.mrb[0].mxu0
        %v1372 = vadd.f32 %v656, %v1371
        %v1373 = vpop.f32.mrb[0].mxu0
        %v1374 = vadd.f32 %v660, %v1373
        %1375 = vmatprep.mubr.bf16.mxu0 %v496
        %1376 = vmatmul.mubr.bf16.gmra.mrb[0].mxu0 %v495
        %v1377 = vpop.f32.mrb[0].mxu0
        %v1378 = vadd.f32 %v656, %v1377
        %v1379 = vpop.f32.mrb[0].mxu0
        %v1380 = vadd.f32 %v660, %v1379
        %v1381 = vpop.f32.mrb[0].mxu0
        %v1382 = vadd.f32 %v656, %v1381
        %v1383 = vpop.f32.mrb[0].mxu0
        %v1384 = vadd.f32 %v660, %v1383
        %1385 = vmatprep.mubr.bf16.mxu0 %v500
        %1386 = vmatmul.mubr.bf16.gmra.mrb[0].mxu0 %v499
        %v1387 = vpop.f32.mrb[0].mxu0
        %v1388 = vadd.f32 %v656, %v1387
        %v1389 = vpop.f32.mrb[0].mxu0
        %v1390 = vadd.f32 %v660, %v1389
        %v1391 = vpop.f32.mrb[0].mxu0
        %v1392 = vadd.f32 %v656, %v1391
        %v1393 = vpop.f32.mrb[0].mxu0
        %v1394 = vadd.f32 %v660, %v1393
        %1395 = vmatprep.mubr.bf16.mxu0 %v504
        %1396 = vmatmul.mubr.bf16.gmra.mrb[0].mxu0 %v503
        %v1397 = vpop.f32.mrb[0].mxu0
        %v1398 = vadd.f32 %v656, %v1397
        %v1399 = vpop.f32.mrb[0].mxu0
        %v1400 = vadd.f32 %v660, %v1399
        %v1401 = vpop.f32.mrb[0].mxu0
        %v1402 = vadd.f32 %v656, %v1401
        %v1403 = vpop.f32.mrb[0].mxu0
        %v1404 = vadd.f32 %v660, %v1403
        %1405 = vmatprep.mubr.bf16.mxu0 %v508
        %1406 = vmatmul.mubr.bf16.gmra.mrb[0].mxu0 %v507
        %v1407 = vpop.f32.mrb[0].mxu0
        %v1408 = vadd.f32 %v656, %v1407
        %v1409 = vpop.f32.mrb[0].mxu0
        %v1410 = vadd.f32 %v660, %v1409
        %v1411 = vpop.f32.mrb[0].mxu0
        %v1412 = vadd.f32 %v656, %v1411
        %v1413 = vpop.f32.mrb[0].mxu0
        %v1414 = vadd.f32 %v660, %v1413
        %1415 = vmatprep.mubr.bf16.mxu0 %v512
        %1416 = vmatmul.mubr.bf16.gmra.mrb[0].mxu0 %v511
        %v1417 = vpop.f32.mrb[0].mxu0
        %v1418 = vadd.f32 %v656, %v1417
        %v1419 = vpop.f32.mrb[0].mxu0
        %v1420 = vadd.f32 %v660, %v1419
        %v1421 = vpop.f32.mrb[0].mxu0
        %v1422 = vadd.f32 %v656, %v1421
        %v1423 = vpop.f32.mrb[0].mxu0
        %v1424 = vadd.f32 %v660, %v1423
        %1425 = vmatprep.mubr.bf16.mxu0 %v516
        %1426 = vmatmul.mubr.bf16.gmra.mrb[0].mxu0 %v515
        %v1427 = vpop.f32.mrb[0].mxu0
        %v1428 = vadd.f32 %v656, %v1427
        %v1429 = vpop.f32.mrb[0].mxu0
        %v1430 = vadd.f32 %v660, %v1429
        %v1431 = vpop.f32.mrb[0].mxu0
        %v1432 = vadd.f32 %v656, %v1431
        %v1433 = vpop.f32.mrb[0].mxu0
        %v1434 = vadd.f32 %v660, %v1433
        %1435 = vmatprep.mubr.bf16.mxu0 %v520
        %1436 = vmatmul.mubr.bf16.gmra.mrb[0].mxu0 %v519
        %v1437 = vpop.f32.mrb[0].mxu0
        %v1438 = vadd.f32 %v656, %v1437
        %v1439 = vpop.f32.mrb[0].mxu0
        %v1440 = vadd.f32 %v660, %v1439
        %v1441 = vpop.f32.mrb[0].mxu0
        %v1442 = vadd.f32 %v656, %v1441
        %v1443 = vpop.f32.mrb[0].mxu0
        %v1444 = vadd.f32 %v660, %v1443
        %1445 = vdwg.mxu0
        %1446 = vmatprep.subr.bf16.mxu0 %v1122
        %1447 = vmatpush1.bf16.msra.mxu0 %v1121
        %1448 = vmatprep.subr.bf16.mxu0 %v1126
        %1449 = vmatpush1.bf16.msra.mxu0 %v1125
        %1450 = vmatprep.subr.bf16.mxu0 %v1130
        %1451 = vmatpush1.bf16.msra.mxu0 %v1129
        %1452 = vmatprep.subr.bf16.mxu0 %v1134
        %1453 = vmatpush1.bf16.msra.mxu0 %v1133
        %1454 = vmatprep.subr.bf16.mxu0 %v1138
        %1455 = vmatpush1.bf16.msra.mxu0 %v1137
        %1456 = vmatprep.subr.bf16.mxu0 %v1142
        %1457 = vmatpush1.bf16.msra.mxu0 %v1141
        %1458 = vmatprep.subr.bf16.mxu0 %v1146
        %1459 = vmatpush1.bf16.msra.mxu0 %v1145
        %1460 = vmatprep.subr.bf16.mxu0 %v1150
        %1461 = vmatpush1.bf16.msra.mxu0 %v1149
        %1462 = vmatprep.subr.bf16.mxu0 %v1154
        %1463 = vmatpush1.bf16.msra.mxu0 %v1153
        %1464 = vmatprep.subr.bf16.mxu0 %v1158
        %1465 = vmatpush1.bf16.msra.mxu0 %v1157
        %1466 = vmatprep.subr.bf16.mxu0 %v1162
        %1467 = vmatpush1.bf16.msra.mxu0 %v1161
        %1468 = vmatprep.subr.bf16.mxu0 %v1166
        %1469 = vmatpush1.bf16.msra.mxu0 %v1165
        %1470 = vmatprep.subr.bf16.mxu0 %v1170
        %1471 = vmatpush1.bf16.msra.mxu0 %v1169
        %1472 = vmatprep.subr.bf16.mxu0 %v1174
        %1473 = vmatpush1.bf16.msra.mxu0 %v1173
        %1474 = vmatprep.subr.bf16.mxu0 %v1178
        %1475 = vmatpush1.bf16.msra.mxu0 %v1177
        %1476 = vmatprep.subr.bf16.mxu0 %v1182
        %1477 = vmatpush1.bf16.msra.mxu0 %v1181
        %1478 = vmatprep.mubr.bf16.mxu0 %v486
        %1479 = vmatmul.mubr.bf16.gmra.mrb[0].mxu0 %v485
        %v1480 = vpop.f32.mrb[0].mxu0
        %v1481 = vadd.f32 %v1348, %v1480
        %v1482 = vpop.f32.mrb[0].mxu0
        %v1483 = vadd.f32 %v1350, %v1482
        %v1484 = vpop.f32.mrb[0].mxu0
        %v1485 = vadd.f32 %v1352, %v1484
        %v1486 = vpop.f32.mrb[0].mxu0
        %v1487 = vadd.f32 %v1354, %v1486
        %1488 = vmatprep.mubr.bf16.mxu0 %v490
        %1489 = vmatmul.mubr.bf16.gmra.mrb[0].mxu0 %v489
        %v1490 = vpop.f32.mrb[0].mxu0
        %v1491 = vadd.f32 %v1358, %v1490
        %v1492 = vpop.f32.mrb[0].mxu0
        %v1493 = vadd.f32 %v1360, %v1492
        %v1494 = vpop.f32.mrb[0].mxu0
        %v1495 = vadd.f32 %v1362, %v1494
        %v1496 = vpop.f32.mrb[0].mxu0
        %v1497 = vadd.f32 %v1364, %v1496
        %1498 = vmatprep.mubr.bf16.mxu0 %v494
        %1499 = vmatmul.mubr.bf16.gmra.mrb[0].mxu0 %v493
        %v1500 = vpop.f32.mrb[0].mxu0
        %v1501 = vadd.f32 %v1368, %v1500
        %v1502 = vpop.f32.mrb[0].mxu0
        %v1503 = vadd.f32 %v1370, %v1502
        %v1504 = vpop.f32.mrb[0].mxu0
        %v1505 = vadd.f32 %v1372, %v1504
        %v1506 = vpop.f32.mrb[0].mxu0
        %v1507 = vadd.f32 %v1374, %v1506
        %1508 = vmatprep.mubr.bf16.mxu0 %v498
        %1509 = vmatmul.mubr.bf16.gmra.mrb[0].mxu0 %v497
        %v1510 = vpop.f32.mrb[0].mxu0
        %v1511 = vadd.f32 %v1378, %v1510
        %v1512 = vpop.f32.mrb[0].mxu0
        %v1513 = vadd.f32 %v1380, %v1512
        %v1514 = vpop.f32.mrb[0].mxu0
        %v1515 = vadd.f32 %v1382, %v1514
        %v1516 = vpop.f32.mrb[0].mxu0
        %v1517 = vadd.f32 %v1384, %v1516
        %1518 = vmatprep.mubr.bf16.mxu0 %v502
        %1519 = vmatmul.mubr.bf16.gmra.mrb[0].mxu0 %v501
        %v1520 = vpop.f32.mrb[0].mxu0
        %v1521 = vadd.f32 %v1388, %v1520
        %v1522 = vpop.f32.mrb[0].mxu0
        %v1523 = vadd.f32 %v1390, %v1522
        %v1524 = vpop.f32.mrb[0].mxu0
        %v1525 = vadd.f32 %v1392, %v1524
        %v1526 = vpop.f32.mrb[0].mxu0
        %v1527 = vadd.f32 %v1394, %v1526
        %1528 = vmatprep.mubr.bf16.mxu0 %v506
        %1529 = vmatmul.mubr.bf16.gmra.mrb[0].mxu0 %v505
        %v1530 = vpop.f32.mrb[0].mxu0
        %v1531 = vadd.f32 %v1398, %v1530
        %v1532 = vpop.f32.mrb[0].mxu0
        %v1533 = vadd.f32 %v1400, %v1532
        %v1534 = vpop.f32.mrb[0].mxu0
        %v1535 = vadd.f32 %v1402, %v1534
        %v1536 = vpop.f32.mrb[0].mxu0
        %v1537 = vadd.f32 %v1404, %v1536
        %1538 = vmatprep.mubr.bf16.mxu0 %v510
        %1539 = vmatmul.mubr.bf16.gmra.mrb[0].mxu0 %v509
        %v1540 = vpop.f32.mrb[0].mxu0
        %v1541 = vadd.f32 %v1408, %v1540
        %v1542 = vpop.f32.mrb[0].mxu0
        %v1543 = vadd.f32 %v1410, %v1542
        %v1544 = vpop.f32.mrb[0].mxu0
        %v1545 = vadd.f32 %v1412, %v1544
        %v1546 = vpop.f32.mrb[0].mxu0
        %v1547 = vadd.f32 %v1414, %v1546
        %1548 = vmatprep.mubr.bf16.mxu0 %v514
        %1549 = vmatmul.mubr.bf16.gmra.mrb[0].mxu0 %v513
        %v1550 = vpop.f32.mrb[0].mxu0
        %v1551 = vadd.f32 %v1418, %v1550
        %v1552 = vpop.f32.mrb[0].mxu0
        %v1553 = vadd.f32 %v1420, %v1552
        %v1554 = vpop.f32.mrb[0].mxu0
        %v1555 = vadd.f32 %v1422, %v1554
        %v1556 = vpop.f32.mrb[0].mxu0
        %v1557 = vadd.f32 %v1424, %v1556
        %1558 = vmatprep.mubr.bf16.mxu0 %v518
        %1559 = vmatmul.mubr.bf16.gmra.mrb[0].mxu0 %v517
        %v1560 = vpop.f32.mrb[0].mxu0
        %v1561 = vadd.f32 %v1428, %v1560
        %v1562 = vpop.f32.mrb[0].mxu0
        %v1563 = vadd.f32 %v1430, %v1562
        %v1564 = vpop.f32.mrb[0].mxu0
        %v1565 = vadd.f32 %v1432, %v1564
        %v1566 = vpop.f32.mrb[0].mxu0
        %v1567 = vadd.f32 %v1434, %v1566
        %1568 = vmatprep.mubr.bf16.mxu0 %v522
        %1569 = vmatmul.mubr.bf16.gmra.mrb[0].mxu0 %v521
        %v1570 = vpop.f32.mrb[0].mxu0
        %v1571 = vadd.f32 %v1438, %v1570
        %v1572 = vpop.f32.mrb[0].mxu0
        %v1573 = vadd.f32 %v1440, %v1572
        %v1574 = vpop.f32.mrb[0].mxu0
        %v1575 = vadd.f32 %v1442, %v1574
        %v1576 = vpop.f32.mrb[0].mxu0
        %v1577 = vadd.f32 %v1444, %v1576
        %1578 = vdwg.mxu0
        %1579 = vmatprep.subr.bf16.mxu0 %v1060
        %1580 = vmatpush1.bf16.msra.mxu0 %v1059
        %1581 = vmatprep.subr.bf16.mxu0 %v1064
        %1582 = vmatpush1.bf16.msra.mxu0 %v1063
        %1583 = vmatprep.subr.bf16.mxu0 %v1068
        %1584 = vmatpush1.bf16.msra.mxu0 %v1067
        %1585 = vmatprep.subr.bf16.mxu0 %v1072
        %1586 = vmatpush1.bf16.msra.mxu0 %v1071
        %1587 = vmatprep.subr.bf16.mxu0 %v1076
        %1588 = vmatpush1.bf16.msra.mxu0 %v1075
        %1589 = vmatprep.subr.bf16.mxu0 %v1080
        %1590 = vmatpush1.bf16.msra.mxu0 %v1079
        %1591 = vmatprep.subr.bf16.mxu0 %v1084
        %1592 = vmatpush1.bf16.msra.mxu0 %v1083
        %1593 = vmatprep.subr.bf16.mxu0 %v1088
        %1594 = vmatpush1.bf16.msra.mxu0 %v1087
        %1595 = vmatprep.subr.bf16.mxu0 %v1092
        %1596 = vmatpush1.bf16.msra.mxu0 %v1091
        %1597 = vmatprep.subr.bf16.mxu0 %v1096
        %1598 = vmatpush1.bf16.msra.mxu0 %v1095
        %1599 = vmatprep.subr.bf16.mxu0 %v1100
        %1600 = vmatpush1.bf16.msra.mxu0 %v1099
        %1601 = vmatprep.subr.bf16.mxu0 %v1104
        %1602 = vmatpush1.bf16.msra.mxu0 %v1103
        %1603 = vmatprep.subr.bf16.mxu0 %v1108
        %1604 = vmatpush1.bf16.msra.mxu0 %v1107
        %1605 = vmatprep.subr.bf16.mxu0 %v1112
        %1606 = vmatpush1.bf16.msra.mxu0 %v1111
        %1607 = vmatprep.subr.bf16.mxu0 %v1116
        %1608 = vmatpush1.bf16.msra.mxu0 %v1115
        %1609 = vmatprep.subr.bf16.mxu0 %v1120
        %1610 = vmatpush1.bf16.msra.mxu0 %v1119
        %1611 = vmatprep.mubr.bf16.mxu0 %v484
        %1612 = vmatmul.mubr.bf16.gmra.mrb[0].mxu0 %v483
        %v1613 = vpop.f32.mrb[0].mxu0
        %v1614 = vadd.f32 %v664, %v1613
        %v1615 = vpop.f32.mrb[0].mxu0
        %v1616 = vadd.f32 %v668, %v1615
        %v1617 = vpop.f32.mrb[0].mxu0
        %v1618 = vadd.f32 %v664, %v1617
        %v1619 = vpop.f32.mrb[0].mxu0
        %v1620 = vadd.f32 %v668, %v1619
        %1621 = vmatprep.mubr.bf16.mxu0 %v488
        %1622 = vmatmul.mubr.bf16.gmra.mrb[0].mxu0 %v487
        %v1623 = vpop.f32.mrb[0].mxu0
        %v1624 = vadd.f32 %v664, %v1623
        %v1625 = vpop.f32.mrb[0].mxu0
        %v1626 = vadd.f32 %v668, %v1625
        %v1627 = vpop.f32.mrb[0].mxu0
        %v1628 = vadd.f32 %v664, %v1627
        %v1629 = vpop.f32.mrb[0].mxu0
        %v1630 = vadd.f32 %v668, %v1629
        %1631 = vmatprep.mubr.bf16.mxu0 %v492
        %1632 = vmatmul.mubr.bf16.gmra.mrb[0].mxu0 %v491
        %v1633 = vpop.f32.mrb[0].mxu0
        %v1634 = vadd.f32 %v664, %v1633
        %v1635 = vpop.f32.mrb[0].mxu0
        %v1636 = vadd.f32 %v668, %v1635
        %v1637 = vpop.f32.mrb[0].mxu0
        %v1638 = vadd.f32 %v664, %v1637
        %v1639 = vpop.f32.mrb[0].mxu0
        %v1640 = vadd.f32 %v668, %v1639
        %1641 = vmatprep.mubr.bf16.mxu0 %v496
        %1642 = vmatmul.mubr.bf16.gmra.mrb[0].mxu0 %v495
        %v1643 = vpop.f32.mrb[0].mxu0
        %v1644 = vadd.f32 %v664, %v1643
        %v1645 = vpop.f32.mrb[0].mxu0
        %v1646 = vadd.f32 %v668, %v1645
        %v1647 = vpop.f32.mrb[0].mxu0
        %v1648 = vadd.f32 %v664, %v1647
        %v1649 = vpop.f32.mrb[0].mxu0
        %v1650 = vadd.f32 %v668, %v1649
        %1651 = vmatprep.mubr.bf16.mxu0 %v500
        %1652 = vmatmul.mubr.bf16.gmra.mrb[0].mxu0 %v499
        %v1653 = vpop.f32.mrb[0].mxu0
        %v1654 = vadd.f32 %v664, %v1653
        %v1655 = vpop.f32.mrb[0].mxu0
        %v1656 = vadd.f32 %v668, %v1655
        %v1657 = vpop.f32.mrb[0].mxu0
        %v1658 = vadd.f32 %v664, %v1657
        %v1659 = vpop.f32.mrb[0].mxu0
        %v1660 = vadd.f32 %v668, %v1659
        %1661 = vmatprep.mubr.bf16.mxu0 %v504
        %1662 = vmatmul.mubr.bf16.gmra.mrb[0].mxu0 %v503
        %v1663 = vpop.f32.mrb[0].mxu0
        %v1664 = vadd.f32 %v664, %v1663
        %v1665 = vpop.f32.mrb[0].mxu0
        %v1666 = vadd.f32 %v668, %v1665
        %v1667 = vpop.f32.mrb[0].mxu0
        %v1668 = vadd.f32 %v664, %v1667
        %v1669 = vpop.f32.mrb[0].mxu0
        %v1670 = vadd.f32 %v668, %v1669
        %1671 = vmatprep.mubr.bf16.mxu0 %v508
        %1672 = vmatmul.mubr.bf16.gmra.mrb[0].mxu0 %v507
        %v1673 = vpop.f32.mrb[0].mxu0
        %v1674 = vadd.f32 %v664, %v1673
        %v1675 = vpop.f32.mrb[0].mxu0
        %v1676 = vadd.f32 %v668, %v1675
        %v1677 = vpop.f32.mrb[0].mxu0
        %v1678 = vadd.f32 %v664, %v1677
        %v1679 = vpop.f32.mrb[0].mxu0
        %v1680 = vadd.f32 %v668, %v1679
        %1681 = vmatprep.mubr.bf16.mxu0 %v512
        %1682 = vmatmul.mubr.bf16.gmra.mrb[0].mxu0 %v511
        %v1683 = vpop.f32.mrb[0].mxu0
        %v1684 = vadd.f32 %v664, %v1683
        %v1685 = vpop.f32.mrb[0].mxu0
        %v1686 = vadd.f32 %v668, %v1685
        %v1687 = vpop.f32.mrb[0].mxu0
        %v1688 = vadd.f32 %v664, %v1687
        %v1689 = vpop.f32.mrb[0].mxu0
        %v1690 = vadd.f32 %v668, %v1689
        %1691 = vmatprep.mubr.bf16.mxu0 %v516
        %1692 = vmatmul.mubr.bf16.gmra.mrb[0].mxu0 %v515
        %v1693 = vpop.f32.mrb[0].mxu0
        %v1694 = vadd.f32 %v664, %v1693
        %v1695 = vpop.f32.mrb[0].mxu0
        %v1696 = vadd.f32 %v668, %v1695
        %v1697 = vpop.f32.mrb[0].mxu0
        %v1698 = vadd.f32 %v664, %v1697
        %v1699 = vpop.f32.mrb[0].mxu0
        %v1700 = vadd.f32 %v668, %v1699
        %1701 = vmatprep.mubr.bf16.mxu0 %v520
        %1702 = vmatmul.mubr.bf16.gmra.mrb[0].mxu0 %v519
        %v1703 = vpop.f32.mrb[0].mxu0
        %v1704 = vadd.f32 %v664, %v1703
        %v1705 = vpop.f32.mrb[0].mxu0
        %v1706 = vadd.f32 %v668, %v1705
        %v1707 = vpop.f32.mrb[0].mxu0
        %v1708 = vadd.f32 %v664, %v1707
        %v1709 = vpop.f32.mrb[0].mxu0
        %v1710 = vadd.f32 %v668, %v1709
        %1711 = vdwg.mxu0
        %1712 = vmatprep.subr.bf16.mxu0 %v1124
        %1713 = vmatpush1.bf16.msra.mxu0 %v1123
        %1714 = vmatprep.subr.bf16.mxu0 %v1128
        %1715 = vmatpush1.bf16.msra.mxu0 %v1127
        %1716 = vmatprep.subr.bf16.mxu0 %v1132
        %1717 = vmatpush1.bf16.msra.mxu0 %v1131
        %1718 = vmatprep.subr.bf16.mxu0 %v1136
        %1719 = vmatpush1.bf16.msra.mxu0 %v1135
        %1720 = vmatprep.subr.bf16.mxu0 %v1140
        %1721 = vmatpush1.bf16.msra.mxu0 %v1139
        %1722 = vmatprep.subr.bf16.mxu0 %v1144
        %1723 = vmatpush1.bf16.msra.mxu0 %v1143
        %1724 = vmatprep.subr.bf16.mxu0 %v1148
        %1725 = vmatpush1.bf16.msra.mxu0 %v1147
        %1726 = vmatprep.subr.bf16.mxu0 %v1152
        %1727 = vmatpush1.bf16.msra.mxu0 %v1151
        %1728 = vmatprep.subr.bf16.mxu0 %v1156
        %1729 = vmatpush1.bf16.msra.mxu0 %v1155
        %1730 = vmatprep.subr.bf16.mxu0 %v1160
        %1731 = vmatpush1.bf16.msra.mxu0 %v1159
        %1732 = vmatprep.subr.bf16.mxu0 %v1164
        %1733 = vmatpush1.bf16.msra.mxu0 %v1163
        %1734 = vmatprep.subr.bf16.mxu0 %v1168
        %1735 = vmatpush1.bf16.msra.mxu0 %v1167
        %1736 = vmatprep.subr.bf16.mxu0 %v1172
        %1737 = vmatpush1.bf16.msra.mxu0 %v1171
        %1738 = vmatprep.subr.bf16.mxu0 %v1176
        %1739 = vmatpush1.bf16.msra.mxu0 %v1175
        %1740 = vmatprep.subr.bf16.mxu0 %v1180
        %1741 = vmatpush1.bf16.msra.mxu0 %v1179
        %1742 = vmatprep.subr.bf16.mxu0 %v1184
        %1743 = vmatpush1.bf16.msra.mxu0 %v1183
        %1744 = vmatprep.mubr.bf16.mxu0 %v486
        %1745 = vmatmul.mubr.bf16.gmra.mrb[0].mxu0 %v485
        %v1746 = vpop.f32.mrb[0].mxu0
        %v1747 = vadd.f32 %v1614, %v1746
        %v1748 = vpop.f32.mrb[0].mxu0
        %v1749 = vadd.f32 %v1616, %v1748
        %v1750 = vpop.f32.mrb[0].mxu0
        %v1751 = vadd.f32 %v1618, %v1750
        %v1752 = vpop.f32.mrb[0].mxu0
        %v1753 = vadd.f32 %v1620, %v1752
        %1754 = vmatprep.mubr.bf16.mxu0 %v490
        %1755 = vmatmul.mubr.bf16.gmra.mrb[0].mxu0 %v489
        %v1756 = vpop.f32.mrb[0].mxu0
        %v1757 = vadd.f32 %v1624, %v1756
        %v1758 = vpop.f32.mrb[0].mxu0
        %v1759 = vadd.f32 %v1626, %v1758
        %v1760 = vpop.f32.mrb[0].mxu0
        %v1761 = vadd.f32 %v1628, %v1760
        %v1762 = vpop.f32.mrb[0].mxu0
        %v1763 = vadd.f32 %v1630, %v1762
        %1764 = vmatprep.mubr.bf16.mxu0 %v494
        %1765 = vmatmul.mubr.bf16.gmra.mrb[0].mxu0 %v493
        %v1766 = vpop.f32.mrb[0].mxu0
        %v1767 = vadd.f32 %v1634, %v1766
        %v1768 = vpop.f32.mrb[0].mxu0
        %v1769 = vadd.f32 %v1636, %v1768
        %v1770 = vpop.f32.mrb[0].mxu0
        %v1771 = vadd.f32 %v1638, %v1770
        %v1772 = vpop.f32.mrb[0].mxu0
        %v1773 = vadd.f32 %v1640, %v1772
        %1774 = vmatprep.mubr.bf16.mxu0 %v498
        %1775 = vmatmul.mubr.bf16.gmra.mrb[0].mxu0 %v497
        %v1776 = vpop.f32.mrb[0].mxu0
        %v1777 = vadd.f32 %v1644, %v1776
        %v1778 = vpop.f32.mrb[0].mxu0
        %v1779 = vadd.f32 %v1646, %v1778
        %v1780 = vpop.f32.mrb[0].mxu0
        %v1781 = vadd.f32 %v1648, %v1780
        %v1782 = vpop.f32.mrb[0].mxu0
        %v1783 = vadd.f32 %v1650, %v1782
        %1784 = vmatprep.mubr.bf16.mxu0 %v502
        %1785 = vmatmul.mubr.bf16.gmra.mrb[0].mxu0 %v501
        %v1786 = vpop.f32.mrb[0].mxu0
        %v1787 = vadd.f32 %v1654, %v1786
        %v1788 = vpop.f32.mrb[0].mxu0
        %v1789 = vadd.f32 %v1656, %v1788
        %v1790 = vpop.f32.mrb[0].mxu0
        %v1791 = vadd.f32 %v1658, %v1790
        %v1792 = vpop.f32.mrb[0].mxu0
        %v1793 = vadd.f32 %v1660, %v1792
        %1794 = vmatprep.mubr.bf16.mxu0 %v506
        %1795 = vmatmul.mubr.bf16.gmra.mrb[0].mxu0 %v505
        %v1796 = vpop.f32.mrb[0].mxu0
        %v1797 = vadd.f32 %v1664, %v1796
        %v1798 = vpop.f32.mrb[0].mxu0
        %v1799 = vadd.f32 %v1666, %v1798
        %v1800 = vpop.f32.mrb[0].mxu0
        %v1801 = vadd.f32 %v1668, %v1800
        %v1802 = vpop.f32.mrb[0].mxu0
        %v1803 = vadd.f32 %v1670, %v1802
        %1804 = vmatprep.mubr.bf16.mxu0 %v510
        %1805 = vmatmul.mubr.bf16.gmra.mrb[0].mxu0 %v509
        %v1806 = vpop.f32.mrb[0].mxu0
        %v1807 = vadd.f32 %v1674, %v1806
        %v1808 = vpop.f32.mrb[0].mxu0
        %v1809 = vadd.f32 %v1676, %v1808
        %v1810 = vpop.f32.mrb[0].mxu0
        %v1811 = vadd.f32 %v1678, %v1810
        %v1812 = vpop.f32.mrb[0].mxu0
        %v1813 = vadd.f32 %v1680, %v1812
        %1814 = vmatprep.mubr.bf16.mxu0 %v514
        %1815 = vmatmul.mubr.bf16.gmra.mrb[0].mxu0 %v513
        %v1816 = vpop.f32.mrb[0].mxu0
        %v1817 = vadd.f32 %v1684, %v1816
        %v1818 = vpop.f32.mrb[0].mxu0
        %v1819 = vadd.f32 %v1686, %v1818
        %v1820 = vpop.f32.mrb[0].mxu0
        %v1821 = vadd.f32 %v1688, %v1820
        %v1822 = vpop.f32.mrb[0].mxu0
        %v1823 = vadd.f32 %v1690, %v1822
        %1824 = vmatprep.mubr.bf16.mxu0 %v518
        %1825 = vmatmul.mubr.bf16.gmra.mrb[0].mxu0 %v517
        %v1826 = vpop.f32.mrb[0].mxu0
        %v1827 = vadd.f32 %v1694, %v1826
        %v1828 = vpop.f32.mrb[0].mxu0
        %v1829 = vadd.f32 %v1696, %v1828
        %v1830 = vpop.f32.mrb[0].mxu0
        %v1831 = vadd.f32 %v1698, %v1830
        %v1832 = vpop.f32.mrb[0].mxu0
        %v1833 = vadd.f32 %v1700, %v1832
        %1834 = vmatprep.mubr.bf16.mxu0 %v522
        %1835 = vmatmul.mubr.bf16.gmra.mrb[0].mxu0 %v521
        %v1836 = vpop.f32.mrb[0].mxu0
        %v1837 = vadd.f32 %v1704, %v1836
        %v1838 = vpop.f32.mrb[0].mxu0
        %v1839 = vadd.f32 %v1706, %v1838
        %v1840 = vpop.f32.mrb[0].mxu0
        %v1841 = vadd.f32 %v1708, %v1840
        %v1842 = vpop.f32.mrb[0].mxu0
        %v1843 = vadd.f32 %v1710, %v1842
        %1844 = vdwg.mxu0
        %vm1845 = vcmp.gt.f32.partialorder %v1481, 0.0
        %vm1846 = vcmp.gt.f32.partialorder %v1483, 0.0
        %vm1847 = vcmp.gt.f32.partialorder %v1747, 0.0
        %vm1848 = vcmp.gt.f32.partialorder %v1749, 0.0
        %vm1849 = vcmp.gt.f32.partialorder %v1485, 0.0
        %vm1850 = vcmp.gt.f32.partialorder %v1487, 0.0
        %vm1851 = vcmp.gt.f32.partialorder %v1751, 0.0
        %vm1852 = vcmp.gt.f32.partialorder %v1753, 0.0
        %vm1853 = vcmp.gt.f32.partialorder %v1491, 0.0
        %vm1854 = vcmp.gt.f32.partialorder %v1493, 0.0
        %vm1855 = vcmp.gt.f32.partialorder %v1757, 0.0
        %vm1856 = vcmp.gt.f32.partialorder %v1759, 0.0
        %vm1857 = vcmp.gt.f32.partialorder %v1495, 0.0
        %vm1858 = vcmp.gt.f32.partialorder %v1497, 0.0
        %vm1859 = vcmp.gt.f32.partialorder %v1761, 0.0
        %vm1860 = vcmp.gt.f32.partialorder %v1763, 0.0
        %vm1861 = vcmp.gt.f32.partialorder %v1501, 0.0
        %vm1862 = vcmp.gt.f32.partialorder %v1503, 0.0
        %vm1863 = vcmp.gt.f32.partialorder %v1767, 0.0
        %vm1864 = vcmp.gt.f32.partialorder %v1769, 0.0
        %vm1865 = vcmp.gt.f32.partialorder %v1505, 0.0
        %vm1866 = vcmp.gt.f32.partialorder %v1507, 0.0
        %vm1867 = vcmp.gt.f32.partialorder %v1771, 0.0
        %vm1868 = vcmp.gt.f32.partialorder %v1773, 0.0
        %vm1869 = vcmp.gt.f32.partialorder %v1511, 0.0
        %vm1870 = vcmp.gt.f32.partialorder %v1513, 0.0
        %vm1871 = vcmp.gt.f32.partialorder %v1777, 0.0
        %vm1872 = vcmp.gt.f32.partialorder %v1779, 0.0
        %vm1873 = vcmp.gt.f32.partialorder %v1515, 0.0
        %vm1874 = vcmp.gt.f32.partialorder %v1517, 0.0
        %vm1875 = vcmp.gt.f32.partialorder %v1781, 0.0
        %vm1876 = vcmp.gt.f32.partialorder %v1783, 0.0
        %vm1877 = vcmp.gt.f32.partialorder %v1521, 0.0
        %vm1878 = vcmp.gt.f32.partialorder %v1523, 0.0
        %vm1879 = vcmp.gt.f32.partialorder %v1787, 0.0
        %vm1880 = vcmp.gt.f32.partialorder %v1789, 0.0
        %vm1881 = vcmp.gt.f32.partialorder %v1525, 0.0
        %vm1882 = vcmp.gt.f32.partialorder %v1527, 0.0
        %vm1883 = vcmp.gt.f32.partialorder %v1791, 0.0
        %vm1884 = vcmp.gt.f32.partialorder %v1793, 0.0
        %vm1885 = vcmp.gt.f32.partialorder %v1531, 0.0
        %vm1886 = vcmp.gt.f32.partialorder %v1533, 0.0
        %vm1887 = vcmp.gt.f32.partialorder %v1797, 0.0
        %vm1888 = vcmp.gt.f32.partialorder %v1799, 0.0
        %vm1889 = vcmp.gt.f32.partialorder %v1535, 0.0
        %vm1890 = vcmp.gt.f32.partialorder %v1537, 0.0
        %vm1891 = vcmp.gt.f32.partialorder %v1801, 0.0
        %vm1892 = vcmp.gt.f32.partialorder %v1803, 0.0
        %vm1893 = vcmp.gt.f32.partialorder %v1541, 0.0
        %vm1894 = vcmp.gt.f32.partialorder %v1543, 0.0
        %vm1895 = vcmp.gt.f32.partialorder %v1807, 0.0
        %vm1896 = vcmp.gt.f32.partialorder %v1809, 0.0
        %vm1897 = vcmp.gt.f32.partialorder %v1545, 0.0
        %vm1898 = vcmp.gt.f32.partialorder %v1547, 0.0
        %vm1899 = vcmp.gt.f32.partialorder %v1811, 0.0
        %vm1900 = vcmp.gt.f32.partialorder %v1813, 0.0
        %vm1901 = vcmp.gt.f32.partialorder %v1551, 0.0
        %vm1902 = vcmp.gt.f32.partialorder %v1553, 0.0
        %vm1903 = vcmp.gt.f32.partialorder %v1817, 0.0
        %vm1904 = vcmp.gt.f32.partialorder %v1819, 0.0
        %vm1905 = vcmp.gt.f32.partialorder %v1555, 0.0
        %vm1906 = vcmp.gt.f32.partialorder %v1557, 0.0
        %vm1907 = vcmp.gt.f32.partialorder %v1821, 0.0
        %vm1908 = vcmp.gt.f32.partialorder %v1823, 0.0
        %vm1909 = vcmp.gt.f32.partialorder %v1561, 0.0
        %vm1910 = vcmp.gt.f32.partialorder %v1563, 0.0
        %vm1911 = vcmp.gt.f32.partialorder %v1827, 0.0
        %vm1912 = vcmp.gt.f32.partialorder %v1829, 0.0
        %vm1913 = vcmp.gt.f32.partialorder %v1565, 0.0
        %vm1914 = vcmp.gt.f32.partialorder %v1567, 0.0
        %vm1915 = vcmp.gt.f32.partialorder %v1831, 0.0
        %vm1916 = vcmp.gt.f32.partialorder %v1833, 0.0
        %vm1917 = vcmp.gt.f32.partialorder %v1571, 0.0
        %vm1918 = vcmp.gt.f32.partialorder %v1573, 0.0
        %vm1919 = vcmp.gt.f32.partialorder %v1837, 0.0
        %vm1920 = vcmp.gt.f32.partialorder %v1839, 0.0
        %vm1921 = vcmp.gt.f32.partialorder %v1575, 0.0
        %vm1922 = vcmp.gt.f32.partialorder %v1577, 0.0
        %vm1923 = vcmp.gt.f32.partialorder %v1841, 0.0
        %vm1924 = vcmp.gt.f32.partialorder %v1843, 0.0
        %v1925 = vstv %s401
        %v1926 = vmul.f32 %v1925, %v1481
        %v1927 = vmul.f32 %v1925, %v1483
        %v1928 = vmul.f32 %v1925, %v1747
        %v1929 = vmul.f32 %v1925, %v1749
        %v1930 = vmul.f32 %v1925, %v1485
        %v1931 = vmul.f32 %v1925, %v1487
        %v1932 = vmul.f32 %v1925, %v1751
        %v1933 = vmul.f32 %v1925, %v1753
        %v1934 = vmul.f32 %v1925, %v1491
        %v1935 = vmul.f32 %v1925, %v1493
        %v1936 = vmul.f32 %v1925, %v1757
        %v1937 = vmul.f32 %v1925, %v1759
        %v1938 = vmul.f32 %v1925, %v1495
        %v1939 = vmul.f32 %v1925, %v1497
        %v1940 = vmul.f32 %v1925, %v1761
        %v1941 = vmul.f32 %v1925, %v1763
        %v1942 = vmul.f32 %v1925, %v1501
        %v1943 = vmul.f32 %v1925, %v1503
        %v1944 = vmul.f32 %v1925, %v1767
        %v1945 = vmul.f32 %v1925, %v1769
        %v1946 = vmul.f32 %v1925, %v1505
        %v1947 = vmul.f32 %v1925, %v1507
        %v1948 = vmul.f32 %v1925, %v1771
        %v1949 = vmul.f32 %v1925, %v1773
        %v1950 = vmul.f32 %v1925, %v1511
        %v1951 = vmul.f32 %v1925, %v1513
        %v1952 = vmul.f32 %v1925, %v1777
        %v1953 = vmul.f32 %v1925, %v1779
        %v1954 = vmul.f32 %v1925, %v1515
        %v1955 = vmul.f32 %v1925, %v1517
        %v1956 = vmul.f32 %v1925, %v1781
        %v1957 = vmul.f32 %v1925, %v1783
        %v1958 = vmul.f32 %v1925, %v1521
        %v1959 = vmul.f32 %v1925, %v1523
        %v1960 = vmul.f32 %v1925, %v1787
        %v1961 = vmul.f32 %v1925, %v1789
        %v1962 = vmul.f32 %v1925, %v1525
        %v1963 = vmul.f32 %v1925, %v1527
        %v1964 = vmul.f32 %v1925, %v1791
        %v1965 = vmul.f32 %v1925, %v1793
        %v1966 = vmul.f32 %v1925, %v1531
        %v1967 = vmul.f32 %v1925, %v1533
        %v1968 = vmul.f32 %v1925, %v1797
        %v1969 = vmul.f32 %v1925, %v1799
        %v1970 = vmul.f32 %v1925, %v1535
        %v1971 = vmul.f32 %v1925, %v1537
        %v1972 = vmul.f32 %v1925, %v1801
        %v1973 = vmul.f32 %v1925, %v1803
        %v1974 = vmul.f32 %v1925, %v1541
        %v1975 = vmul.f32 %v1925, %v1543
        %v1976 = vmul.f32 %v1925, %v1807
        %v1977 = vmul.f32 %v1925, %v1809
        %v1978 = vmul.f32 %v1925, %v1545
        %v1979 = vmul.f32 %v1925, %v1547
        %v1980 = vmul.f32 %v1925, %v1811
        %v1981 = vmul.f32 %v1925, %v1813
        %v1982 = vmul.f32 %v1925, %v1551
        %v1983 = vmul.f32 %v1925, %v1553
        %v1984 = vmul.f32 %v1925, %v1817
        %v1985 = vmul.f32 %v1925, %v1819
        %v1986 = vmul.f32 %v1925, %v1555
        %v1987 = vmul.f32 %v1925, %v1557
        %v1988 = vmul.f32 %v1925, %v1821
        %v1989 = vmul.f32 %v1925, %v1823
        %v1990 = vmul.f32 %v1925, %v1561
        %v1991 = vmul.f32 %v1925, %v1563
        %v1992 = vmul.f32 %v1925, %v1827
        %v1993 = vmul.f32 %v1925, %v1829
        %v1994 = vmul.f32 %v1925, %v1565
        %v1995 = vmul.f32 %v1925, %v1567
        %v1996 = vmul.f32 %v1925, %v1831
        %v1997 = vmul.f32 %v1925, %v1833
        %v1998 = vmul.f32 %v1925, %v1571
        %v1999 = vmul.f32 %v1925, %v1573
        %v2000 = vmul.f32 %v1925, %v1837
        %v2001 = vmul.f32 %v1925, %v1839
        %v2002 = vmul.f32 %v1925, %v1575
        %v2003 = vmul.f32 %v1925, %v1577
        %v2004 = vmul.f32 %v1925, %v1841
        %v2005 = vmul.f32 %v1925, %v1843
        %v2006 = vsel %vm1845, %v1481, %v1926
        %v2007 = vsel %vm1846, %v1483, %v1927
        %v2008 = vsel %vm1847, %v1747, %v1928
        %v2009 = vsel %vm1848, %v1749, %v1929
        %v2010 = vsel %vm1849, %v1485, %v1930
        %v2011 = vsel %vm1850, %v1487, %v1931
        %v2012 = vsel %vm1851, %v1751, %v1932
        %v2013 = vsel %vm1852, %v1753, %v1933
        %v2014 = vsel %vm1853, %v1491, %v1934
        %v2015 = vsel %vm1854, %v1493, %v1935
        %v2016 = vsel %vm1855, %v1757, %v1936
        %v2017 = vsel %vm1856, %v1759, %v1937
        %v2018 = vsel %vm1857, %v1495, %v1938
        %v2019 = vsel %vm1858, %v1497, %v1939
        %v2020 = vsel %vm1859, %v1761, %v1940
        %v2021 = vsel %vm1860, %v1763, %v1941
        %v2022 = vsel %vm1861, %v1501, %v1942
        %v2023 = vsel %vm1862, %v1503, %v1943
        %v2024 = vsel %vm1863, %v1767, %v1944
        %v2025 = vsel %vm1864, %v1769, %v1945
        %v2026 = vsel %vm1865, %v1505, %v1946
        %v2027 = vsel %vm1866, %v1507, %v1947
        %v2028 = vsel %vm1867, %v1771, %v1948
        %v2029 = vsel %vm1868, %v1773, %v1949
        %v2030 = vsel %vm1869, %v1511, %v1950
        %v2031 = vsel %vm1870, %v1513, %v1951
        %v2032 = vsel %vm1871, %v1777, %v1952
        %v2033 = vsel %vm1872, %v1779, %v1953
        %v2034 = vsel %vm1873, %v1515, %v1954
        %v2035 = vsel %vm1874, %v1517, %v1955
        %v2036 = vsel %vm1875, %v1781, %v1956
        %v2037 = vsel %vm1876, %v1783, %v1957
        %v2038 = vsel %vm1877, %v1521, %v1958
        %v2039 = vsel %vm1878, %v1523, %v1959
        %v2040 = vsel %vm1879, %v1787, %v1960
        %v2041 = vsel %vm1880, %v1789, %v1961
        %v2042 = vsel %vm1881, %v1525, %v1962
        %v2043 = vsel %vm1882, %v1527, %v1963
        %v2044 = vsel %vm1883, %v1791, %v1964
        %v2045 = vsel %vm1884, %v1793, %v1965
        %v2046 = vsel %vm1885, %v1531, %v1966
        %v2047 = vsel %vm1886, %v1533, %v1967
        %v2048 = vsel %vm1887, %v1797, %v1968
        %v2049 = vsel %vm1888, %v1799, %v1969
        %v2050 = vsel %vm1889, %v1535, %v1970
        %v2051 = vsel %vm1890, %v1537, %v1971
        %v2052 = vsel %vm1891, %v1801, %v1972
        %v2053 = vsel %vm1892, %v1803, %v1973
        %v2054 = vsel %vm1893, %v1541, %v1974
        %v2055 = vsel %vm1894, %v1543, %v1975
        %v2056 = vsel %vm1895, %v1807, %v1976
        %v2057 = vsel %vm1896, %v1809, %v1977
        %v2058 = vsel %vm1897, %v1545, %v1978
        %v2059 = vsel %vm1898, %v1547, %v1979
        %v2060 = vsel %vm1899, %v1811, %v1980
        %v2061 = vsel %vm1900, %v1813, %v1981
        %v2062 = vsel %vm1901, %v1551, %v1982
        %v2063 = vsel %vm1902, %v1553, %v1983
        %v2064 = vsel %vm1903, %v1817, %v1984
        %v2065 = vsel %vm1904, %v1819, %v1985
        %v2066 = vsel %vm1905, %v1555, %v1986
        %v2067 = vsel %vm1906, %v1557, %v1987
        %v2068 = vsel %vm1907, %v1821, %v1988
        %v2069 = vsel %vm1908, %v1823, %v1989
        %v2070 = vsel %vm1909, %v1561, %v1990
        %v2071 = vsel %vm1910, %v1563, %v1991
        %v2072 = vsel %vm1911, %v1827, %v1992
        %v2073 = vsel %vm1912, %v1829, %v1993
        %v2074 = vsel %vm1913, %v1565, %v1994
        %v2075 = vsel %vm1914, %v1567, %v1995
        %v2076 = vsel %vm1915, %v1831, %v1996
        %v2077 = vsel %vm1916, %v1833, %v1997
        %v2078 = vsel %vm1917, %v1571, %v1998
        %v2079 = vsel %vm1918, %v1573, %v1999
        %v2080 = vsel %vm1919, %v1837, %v2000
        %v2081 = vsel %vm1920, %v1839, %v2001
        %v2082 = vsel %vm1921, %v1575, %v2002
        %v2083 = vsel %vm1922, %v1577, %v2003
        %v2084 = vsel %vm1923, %v1841, %v2004
        %v2085 = vsel %vm1924, %v1843, %v2005
        %v2086 = vpack.c.bf16 %v2010, %v2006
        %v2087 = vpack.c.bf16 %v2011, %v2007
        %v2088 = vpack.c.bf16 %v2012, %v2008
        %v2089 = vpack.c.bf16 %v2013, %v2009
        %v2090 = vpack.c.bf16 %v2018, %v2014
        %v2091 = vpack.c.bf16 %v2019, %v2015
        %v2092 = vpack.c.bf16 %v2020, %v2016
        %v2093 = vpack.c.bf16 %v2021, %v2017
        %v2094 = vpack.c.bf16 %v2026, %v2022
        %v2095 = vpack.c.bf16 %v2027, %v2023
        %v2096 = vpack.c.bf16 %v2028, %v2024
        %v2097 = vpack.c.bf16 %v2029, %v2025
        %v2098 = vpack.c.bf16 %v2034, %v2030
        %v2099 = vpack.c.bf16 %v2035, %v2031
        %v2100 = vpack.c.bf16 %v2036, %v2032
        %v2101 = vpack.c.bf16 %v2037, %v2033
        %v2102 = vpack.c.bf16 %v2042, %v2038
        %v2103 = vpack.c.bf16 %v2043, %v2039
        %v2104 = vpack.c.bf16 %v2044, %v2040
        %v2105 = vpack.c.bf16 %v2045, %v2041
        %v2106 = vpack.c.bf16 %v2050, %v2046
        %v2107 = vpack.c.bf16 %v2051, %v2047
        %v2108 = vpack.c.bf16 %v2052, %v2048
        %v2109 = vpack.c.bf16 %v2053, %v2049
        %v2110 = vpack.c.bf16 %v2058, %v2054
        %v2111 = vpack.c.bf16 %v2059, %v2055
        %v2112 = vpack.c.bf16 %v2060, %v2056
        %v2113 = vpack.c.bf16 %v2061, %v2057
        %v2114 = vpack.c.bf16 %v2066, %v2062
        %v2115 = vpack.c.bf16 %v2067, %v2063
        %v2116 = vpack.c.bf16 %v2068, %v2064
        %v2117 = vpack.c.bf16 %v2069, %v2065
        %v2118 = vpack.c.bf16 %v2074, %v2070
        %v2119 = vpack.c.bf16 %v2075, %v2071
        %v2120 = vpack.c.bf16 %v2076, %v2072
        %v2121 = vpack.c.bf16 %v2077, %v2073
        %v2122 = vpack.c.bf16 %v2082, %v2078
        %v2123 = vpack.c.bf16 %v2083, %v2079
        %v2124 = vpack.c.bf16 %v2084, %v2080
        %v2125 = vpack.c.bf16 %v2085, %v2081
        %v2126 = vld [vmem:[#allocation9] sm:$0xff]
        %v2127 = vld [vmem:[#allocation9 + $0x8] sm:$0xff]
        %v2128 = vld [vmem:[#allocation9 + $0x10] sm:$0xff]
        %v2129 = vld [vmem:[#allocation9 + $0x18] sm:$0xff]
        %v2130 = vld [vmem:[#allocation9 + $0x20] sm:$0xff]
        %v2131 = vld [vmem:[#allocation9 + $0x28] sm:$0xff]
        %v2132 = vld [vmem:[#allocation9 + $0x30] sm:$0xff]
        %v2133 = vld [vmem:[#allocation9 + $0x38] sm:$0xff]
        %v2134 = vld [vmem:[#allocation9 + $0x40] sm:$0xff]
        %v2135 = vld [vmem:[#allocation9 + $0x48] sm:$0xff]
        %v2136 = vld [vmem:[#allocation9 + $0x50] sm:$0xff]
        %v2137 = vld [vmem:[#allocation9 + $0x58] sm:$0xff]
        %v2138 = vld [vmem:[#allocation9 + $0x60] sm:$0xff]
        %v2139 = vld [vmem:[#allocation9 + $0x68] sm:$0xff]
        %v2140 = vld [vmem:[#allocation9 + $0x70] sm:$0xff]
        %v2141 = vld [vmem:[#allocation9 + $0x78] sm:$0xff]
        %v2142 = vld [vmem:[#allocation9 + $0x80] sm:$0xff]
        %v2143 = vld [vmem:[#allocation9 + $0x88] sm:$0xff]
        %v2144 = vld [vmem:[#allocation9 + $0x90] sm:$0xff]
        %v2145 = vld [vmem:[#allocation9 + $0x98] sm:$0xff]
        %v2146 = vld [vmem:[#allocation9 + $0xa0] sm:$0xff]
        %v2147 = vld [vmem:[#allocation9 + $0xa8] sm:$0xff]
        %v2148 = vld [vmem:[#allocation9 + $0xb0] sm:$0xff]
        %v2149 = vld [vmem:[#allocation9 + $0xb8] sm:$0xff]
        %v2150 = vld [vmem:[#allocation9 + $0xc0] sm:$0xff]
        %v2151 = vld [vmem:[#allocation9 + $0xc8] sm:$0xff]
        %v2152 = vld [vmem:[#allocation9 + $0xd0] sm:$0xff]
        %v2153 = vld [vmem:[#allocation9 + $0xd8] sm:$0xff]
        %v2154 = vld [vmem:[#allocation9 + $0xe0] sm:$0xff]
        %v2155 = vld [vmem:[#allocation9 + $0xe8] sm:$0xff]
        %v2156 = vld [vmem:[#allocation9 + $0xf0] sm:$0xff]
        %v2157 = vld [vmem:[#allocation9 + $0xf8] sm:$0xff]
        %v2158 = vld [vmem:[#allocation9 + $0x100] sm:$0xff]
        %v2159 = vld [vmem:[#allocation9 + $0x108] sm:$0xff]
        %v2160 = vld [vmem:[#allocation9 + $0x110] sm:$0xff]
        %v2161 = vld [vmem:[#allocation9 + $0x118] sm:$0xff]
        %v2162 = vld [vmem:[#allocation9 + $0x120] sm:$0xff]
        %v2163 = vld [vmem:[#allocation9 + $0x128] sm:$0xff]
        %v2164 = vld [vmem:[#allocation9 + $0x130] sm:$0xff]
        %v2165 = vld [vmem:[#allocation9 + $0x138] sm:$0xff]
        %v2166 = vld [vmem:[#allocation9 + $0x140] sm:$0xff]
        %v2167 = vld [vmem:[#allocation9 + $0x148] sm:$0xff]
        %v2168 = vld [vmem:[#allocation9 + $0x150] sm:$0xff]
        %v2169 = vld [vmem:[#allocation9 + $0x158] sm:$0xff]
        %v2170 = vld [vmem:[#allocation9 + $0x160] sm:$0xff]
        %v2171 = vld [vmem:[#allocation9 + $0x168] sm:$0xff]
        %v2172 = vld [vmem:[#allocation9 + $0x170] sm:$0xff]
        %v2173 = vld [vmem:[#allocation9 + $0x178] sm:$0xff]
        %v2174 = vld [vmem:[#allocation9 + $0x180] sm:$0xff]
        %v2175 = vld [vmem:[#allocation9 + $0x188] sm:$0xff]
        %v2176 = vld [vmem:[#allocation9 + $0x190] sm:$0xff]
        %v2177 = vld [vmem:[#allocation9 + $0x198] sm:$0xff]
        %v2178 = vld [vmem:[#allocation9 + $0x1a0] sm:$0xff]
        %v2179 = vld [vmem:[#allocation9 + $0x1a8] sm:$0xff]
        %v2180 = vld [vmem:[#allocation9 + $0x1b0] sm:$0xff]
        %v2181 = vld [vmem:[#allocation9 + $0x1b8] sm:$0xff]
        %v2182 = vld [vmem:[#allocation9 + $0x1c0] sm:$0xff]
        %v2183 = vld [vmem:[#allocation9 + $0x1c8] sm:$0xff]
        %v2184 = vld [vmem:[#allocation9 + $0x1d0] sm:$0xff]
        %v2185 = vld [vmem:[#allocation9 + $0x1d8] sm:$0xff]
        %v2186 = vld [vmem:[#allocation9 + $0x1e0] sm:$0xff]
        %v2187 = vld [vmem:[#allocation9 + $0x1e8] sm:$0xff]
        %v2188 = vld [vmem:[#allocation9 + $0x1f0] sm:$0xff]
        %v2189 = vld [vmem:[#allocation9 + $0x1f8] sm:$0xff]
        %v2190 = vld [vmem:[#allocation9 + $0x200] sm:$0xff]
        %v2191 = vld [vmem:[#allocation9 + $0x208] sm:$0xff]
        %v2192 = vld [vmem:[#allocation9 + $0x210] sm:$0xff]
        %v2193 = vld [vmem:[#allocation9 + $0x218] sm:$0xff]
        %v2194 = vld [vmem:[#allocation9 + $0x220] sm:$0xff]
        %v2195 = vld [vmem:[#allocation9 + $0x228] sm:$0xff]
        %v2196 = vld [vmem:[#allocation9 + $0x230] sm:$0xff]
        %v2197 = vld [vmem:[#allocation9 + $0x238] sm:$0xff]
        %v2198 = vld [vmem:[#allocation9 + $0x240] sm:$0xff]
        %v2199 = vld [vmem:[#allocation9 + $0x248] sm:$0xff]
        %v2200 = vld [vmem:[#allocation9 + $0x250] sm:$0xff]
        %v2201 = vld [vmem:[#allocation9 + $0x258] sm:$0xff]
        %v2202 = vld [vmem:[#allocation9 + $0x260] sm:$0xff]
        %v2203 = vld [vmem:[#allocation9 + $0x268] sm:$0xff]
        %v2204 = vld [vmem:[#allocation9 + $0x270] sm:$0xff]
        %v2205 = vld [vmem:[#allocation9 + $0x278] sm:$0xff]
        %v2206 = vld [vmem:[#allocation9 + $0x280] sm:$0xff]
        %v2207 = vld [vmem:[#allocation9 + $0x288] sm:$0xff]
        %v2208 = vld [vmem:[#allocation9 + $0x290] sm:$0xff]
        %v2209 = vld [vmem:[#allocation9 + $0x298] sm:$0xff]
        %v2210 = vld [vmem:[#allocation9 + $0x2a0] sm:$0xff]
        %v2211 = vld [vmem:[#allocation9 + $0x2a8] sm:$0xff]
        %v2212 = vld [vmem:[#allocation9 + $0x2b0] sm:$0xff]
        %v2213 = vld [vmem:[#allocation9 + $0x2b8] sm:$0xff]
        %v2214 = vld [vmem:[#allocation9 + $0x2c0] sm:$0xff]
        %v2215 = vld [vmem:[#allocation9 + $0x2c8] sm:$0xff]
        %v2216 = vld [vmem:[#allocation9 + $0x2d0] sm:$0xff]
        %v2217 = vld [vmem:[#allocation9 + $0x2d8] sm:$0xff]
        %v2218 = vld [vmem:[#allocation9 + $0x2e0] sm:$0xff]
        %v2219 = vld [vmem:[#allocation9 + $0x2e8] sm:$0xff]
        %v2220 = vld [vmem:[#allocation9 + $0x2f0] sm:$0xff]
        %v2221 = vld [vmem:[#allocation9 + $0x2f8] sm:$0xff]
        %v2222 = vld [vmem:[#allocation9 + $0x300] sm:$0xff]
        %v2223 = vld [vmem:[#allocation9 + $0x308] sm:$0xff]
        %v2224 = vld [vmem:[#allocation9 + $0x310] sm:$0xff]
        %v2225 = vld [vmem:[#allocation9 + $0x318] sm:$0xff]
        %v2226 = vld [vmem:[#allocation9 + $0x320] sm:$0xff]
        %v2227 = vld [vmem:[#allocation9 + $0x328] sm:$0xff]
        %v2228 = vld [vmem:[#allocation9 + $0x330] sm:$0xff]
        %v2229 = vld [vmem:[#allocation9 + $0x338] sm:$0xff]
        %v2230 = vld [vmem:[#allocation9 + $0x340] sm:$0xff]
        %v2231 = vld [vmem:[#allocation9 + $0x348] sm:$0xff]
        %v2232 = vld [vmem:[#allocation9 + $0x350] sm:$0xff]
        %v2233 = vld [vmem:[#allocation9 + $0x358] sm:$0xff]
        %v2234 = vld [vmem:[#allocation9 + $0x360] sm:$0xff]
        %v2235 = vld [vmem:[#allocation9 + $0x368] sm:$0xff]
        %v2236 = vld [vmem:[#allocation9 + $0x370] sm:$0xff]
        %v2237 = vld [vmem:[#allocation9 + $0x378] sm:$0xff]
        %v2238 = vld [vmem:[#allocation9 + $0x380] sm:$0xff]
        %v2239 = vld [vmem:[#allocation9 + $0x388] sm:$0xff]
        %v2240 = vld [vmem:[#allocation9 + $0x390] sm:$0xff]
        %v2241 = vld [vmem:[#allocation9 + $0x398] sm:$0xff]
        %v2242 = vld [vmem:[#allocation9 + $0x3a0] sm:$0xff]
        %v2243 = vld [vmem:[#allocation9 + $0x3a8] sm:$0xff]
        %v2244 = vld [vmem:[#allocation9 + $0x3b0] sm:$0xff]
        %v2245 = vld [vmem:[#allocation9 + $0x3b8] sm:$0xff]
        %v2246 = vld [vmem:[#allocation9 + $0x3c0] sm:$0xff]
        %v2247 = vld [vmem:[#allocation9 + $0x3c8] sm:$0xff]
        %v2248 = vld [vmem:[#allocation9 + $0x3d0] sm:$0xff]
        %v2249 = vld [vmem:[#allocation9 + $0x3d8] sm:$0xff]
        %v2250 = vld [vmem:[#allocation9 + $0x3e0] sm:$0xff]
        %v2251 = vld [vmem:[#allocation9 + $0x3e8] sm:$0xff]
        %v2252 = vld [vmem:[#allocation9 + $0x3f0] sm:$0xff]
        %v2253 = vld [vmem:[#allocation9 + $0x3f8] sm:$0xff]
        %v2254 = vld [vmem:[%s5] sm:$0xf]
        %v2256 = vlaneseq
        %v2257 = vshrl.u32 %v2256, 7
        %v2258 = vsub.s32 0, %v2257
        %v2259 = vrot.slane %v2254, %v2258
        %v2260 = vlaneseq
        %v2261 = vshrl.u32 %v2260, 7
        %v2262 = vsub.s32 1, %v2261
        %v2263 = vrot.slane %v2254, %v2262
        %v2264 = vlaneseq
        %v2265 = vshrl.u32 %v2264, 7
        %v2266 = vsub.s32 2, %v2265
        %v2267 = vrot.slane %v2254, %v2266
        %v2268 = vlaneseq
        %v2269 = vshrl.u32 %v2268, 7
        %v2270 = vsub.s32 3, %v2269
        %v2271 = vrot.slane %v2254, %v2270
        %v2404 = vunpack.c.l.b16 %v2126
        %v2405 = vunpack.c.h.b16 %v2126
        %v2406 = vunpack.c.l.b16 %v2127
        %v2407 = vunpack.c.h.b16 %v2127
        %v2408 = vunpack.c.l.b16 %v2128
        %v2409 = vunpack.c.h.b16 %v2128
        %v2410 = vunpack.c.l.b16 %v2129
        %v2411 = vunpack.c.h.b16 %v2129
        %v2412 = vunpack.c.l.b16 %v2130
        %v2413 = vunpack.c.h.b16 %v2130
        %v2414 = vunpack.c.l.b16 %v2131
        %v2415 = vunpack.c.h.b16 %v2131
        %v2416 = vunpack.c.l.b16 %v2132
        %v2417 = vunpack.c.h.b16 %v2132
        %v2418 = vunpack.c.l.b16 %v2133
        %v2419 = vunpack.c.h.b16 %v2133
        %v2420 = vunpack.c.l.b16 %v2134
        %v2421 = vunpack.c.h.b16 %v2134
        %v2422 = vunpack.c.l.b16 %v2135
        %v2423 = vunpack.c.h.b16 %v2135
        %v2424 = vunpack.c.l.b16 %v2136
        %v2425 = vunpack.c.h.b16 %v2136
        %v2426 = vunpack.c.l.b16 %v2137
        %v2427 = vunpack.c.h.b16 %v2137
        %v2428 = vunpack.c.l.b16 %v2138
        %v2429 = vunpack.c.h.b16 %v2138
        %v2430 = vunpack.c.l.b16 %v2139
        %v2431 = vunpack.c.h.b16 %v2139
        %v2432 = vunpack.c.l.b16 %v2140
        %v2433 = vunpack.c.h.b16 %v2140
        %v2434 = vunpack.c.l.b16 %v2141
        %v2435 = vunpack.c.h.b16 %v2141
        %v2436 = vunpack.c.l.b16 %v2142
        %v2437 = vunpack.c.h.b16 %v2142
        %v2438 = vunpack.c.l.b16 %v2143
        %v2439 = vunpack.c.h.b16 %v2143
        %v2440 = vunpack.c.l.b16 %v2144
        %v2441 = vunpack.c.h.b16 %v2144
        %v2442 = vunpack.c.l.b16 %v2145
        %v2443 = vunpack.c.h.b16 %v2145
        %v2444 = vunpack.c.l.b16 %v2146
        %v2445 = vunpack.c.h.b16 %v2146
        %v2446 = vunpack.c.l.b16 %v2147
        %v2447 = vunpack.c.h.b16 %v2147
        %v2448 = vunpack.c.l.b16 %v2148
        %v2449 = vunpack.c.h.b16 %v2148
        %v2450 = vunpack.c.l.b16 %v2149
        %v2451 = vunpack.c.h.b16 %v2149
        %v2452 = vunpack.c.l.b16 %v2150
        %v2453 = vunpack.c.h.b16 %v2150
        %v2454 = vunpack.c.l.b16 %v2151
        %v2455 = vunpack.c.h.b16 %v2151
        %v2456 = vunpack.c.l.b16 %v2152
        %v2457 = vunpack.c.h.b16 %v2152
        %v2458 = vunpack.c.l.b16 %v2153
        %v2459 = vunpack.c.h.b16 %v2153
        %v2460 = vunpack.c.l.b16 %v2154
        %v2461 = vunpack.c.h.b16 %v2154
        %v2462 = vunpack.c.l.b16 %v2155
        %v2463 = vunpack.c.h.b16 %v2155
        %v2464 = vunpack.c.l.b16 %v2156
        %v2465 = vunpack.c.h.b16 %v2156
        %v2466 = vunpack.c.l.b16 %v2157
        %v2467 = vunpack.c.h.b16 %v2157
        %v2468 = vunpack.c.l.b16 %v2158
        %v2469 = vunpack.c.h.b16 %v2158
        %v2470 = vunpack.c.l.b16 %v2159
        %v2471 = vunpack.c.h.b16 %v2159
        %v2472 = vunpack.c.l.b16 %v2160
        %v2473 = vunpack.c.h.b16 %v2160
        %v2474 = vunpack.c.l.b16 %v2161
        %v2475 = vunpack.c.h.b16 %v2161
        %v2476 = vunpack.c.l.b16 %v2162
        %v2477 = vunpack.c.h.b16 %v2162
        %v2478 = vunpack.c.l.b16 %v2163
        %v2479 = vunpack.c.h.b16 %v2163
        %v2480 = vunpack.c.l.b16 %v2164
        %v2481 = vunpack.c.h.b16 %v2164
        %v2482 = vunpack.c.l.b16 %v2165
        %v2483 = vunpack.c.h.b16 %v2165
        %v2484 = vunpack.c.l.b16 %v2166
        %v2485 = vunpack.c.h.b16 %v2166
        %v2486 = vunpack.c.l.b16 %v2167
        %v2487 = vunpack.c.h.b16 %v2167
        %v2488 = vunpack.c.l.b16 %v2168
        %v2489 = vunpack.c.h.b16 %v2168
        %v2490 = vunpack.c.l.b16 %v2169
        %v2491 = vunpack.c.h.b16 %v2169
        %v2492 = vunpack.c.l.b16 %v2170
        %v2493 = vunpack.c.h.b16 %v2170
        %v2494 = vunpack.c.l.b16 %v2171
        %v2495 = vunpack.c.h.b16 %v2171
        %v2496 = vunpack.c.l.b16 %v2172
        %v2497 = vunpack.c.h.b16 %v2172
        %v2498 = vunpack.c.l.b16 %v2173
        %v2499 = vunpack.c.h.b16 %v2173
        %v2500 = vunpack.c.l.b16 %v2174
        %v2501 = vunpack.c.h.b16 %v2174
        %v2502 = vunpack.c.l.b16 %v2175
        %v2503 = vunpack.c.h.b16 %v2175
        %v2504 = vunpack.c.l.b16 %v2176
        %v2505 = vunpack.c.h.b16 %v2176
        %v2506 = vunpack.c.l.b16 %v2177
        %v2507 = vunpack.c.h.b16 %v2177
        %v2508 = vunpack.c.l.b16 %v2178
        %v2509 = vunpack.c.h.b16 %v2178
        %v2510 = vunpack.c.l.b16 %v2179
        %v2511 = vunpack.c.h.b16 %v2179
        %v2512 = vunpack.c.l.b16 %v2180
        %v2513 = vunpack.c.h.b16 %v2180
        %v2514 = vunpack.c.l.b16 %v2181
        %v2515 = vunpack.c.h.b16 %v2181
        %v2516 = vunpack.c.l.b16 %v2182
        %v2517 = vunpack.c.h.b16 %v2182
        %v2518 = vunpack.c.l.b16 %v2183
        %v2519 = vunpack.c.h.b16 %v2183
        %v2520 = vunpack.c.l.b16 %v2184
        %v2521 = vunpack.c.h.b16 %v2184
        %v2522 = vunpack.c.l.b16 %v2185
        %v2523 = vunpack.c.h.b16 %v2185
        %v2524 = vunpack.c.l.b16 %v2186
        %v2525 = vunpack.c.h.b16 %v2186
        %v2526 = vunpack.c.l.b16 %v2187
        %v2527 = vunpack.c.h.b16 %v2187
        %v2528 = vunpack.c.l.b16 %v2188
        %v2529 = vunpack.c.h.b16 %v2188
        %v2530 = vunpack.c.l.b16 %v2189
        %v2531 = vunpack.c.h.b16 %v2189
        %v2532 = vunpack.c.l.b16 %v2190
        %v2533 = vunpack.c.h.b16 %v2190
        %v2534 = vunpack.c.l.b16 %v2191
        %v2535 = vunpack.c.h.b16 %v2191
        %v2536 = vunpack.c.l.b16 %v2192
        %v2537 = vunpack.c.h.b16 %v2192
        %v2538 = vunpack.c.l.b16 %v2193
        %v2539 = vunpack.c.h.b16 %v2193
        %v2540 = vunpack.c.l.b16 %v2194
        %v2541 = vunpack.c.h.b16 %v2194
        %v2542 = vunpack.c.l.b16 %v2195
        %v2543 = vunpack.c.h.b16 %v2195
        %v2544 = vunpack.c.l.b16 %v2196
        %v2545 = vunpack.c.h.b16 %v2196
        %v2546 = vunpack.c.l.b16 %v2197
        %v2547 = vunpack.c.h.b16 %v2197
        %v2548 = vunpack.c.l.b16 %v2198
        %v2549 = vunpack.c.h.b16 %v2198
        %v2550 = vunpack.c.l.b16 %v2199
        %v2551 = vunpack.c.h.b16 %v2199
        %v2552 = vunpack.c.l.b16 %v2200
        %v2553 = vunpack.c.h.b16 %v2200
        %v2554 = vunpack.c.l.b16 %v2201
        %v2555 = vunpack.c.h.b16 %v2201
        %v2556 = vunpack.c.l.b16 %v2202
        %v2557 = vunpack.c.h.b16 %v2202
        %v2558 = vunpack.c.l.b16 %v2203
        %v2559 = vunpack.c.h.b16 %v2203
        %v2560 = vunpack.c.l.b16 %v2204
        %v2561 = vunpack.c.h.b16 %v2204
        %v2562 = vunpack.c.l.b16 %v2205
        %v2563 = vunpack.c.h.b16 %v2205
        %v2564 = vunpack.c.l.b16 %v2206
        %v2565 = vunpack.c.h.b16 %v2206
        %v2566 = vunpack.c.l.b16 %v2207
        %v2567 = vunpack.c.h.b16 %v2207
        %v2568 = vunpack.c.l.b16 %v2208
        %v2569 = vunpack.c.h.b16 %v2208
        %v2570 = vunpack.c.l.b16 %v2209
        %v2571 = vunpack.c.h.b16 %v2209
        %v2572 = vunpack.c.l.b16 %v2210
        %v2573 = vunpack.c.h.b16 %v2210
        %v2574 = vunpack.c.l.b16 %v2211
        %v2575 = vunpack.c.h.b16 %v2211
        %v2576 = vunpack.c.l.b16 %v2212
        %v2577 = vunpack.c.h.b16 %v2212
        %v2578 = vunpack.c.l.b16 %v2213
        %v2579 = vunpack.c.h.b16 %v2213
        %v2580 = vunpack.c.l.b16 %v2214
        %v2581 = vunpack.c.h.b16 %v2214
        %v2582 = vunpack.c.l.b16 %v2215
        %v2583 = vunpack.c.h.b16 %v2215
        %v2584 = vunpack.c.l.b16 %v2216
        %v2585 = vunpack.c.h.b16 %v2216
        %v2586 = vunpack.c.l.b16 %v2217
        %v2587 = vunpack.c.h.b16 %v2217
        %v2588 = vunpack.c.l.b16 %v2218
        %v2589 = vunpack.c.h.b16 %v2218
        %v2590 = vunpack.c.l.b16 %v2219
        %v2591 = vunpack.c.h.b16 %v2219
        %v2592 = vunpack.c.l.b16 %v2220
        %v2593 = vunpack.c.h.b16 %v2220
        %v2594 = vunpack.c.l.b16 %v2221
        %v2595 = vunpack.c.h.b16 %v2221
        %v2596 = vunpack.c.l.b16 %v2222
        %v2597 = vunpack.c.h.b16 %v2222
        %v2598 = vunpack.c.l.b16 %v2223
        %v2599 = vunpack.c.h.b16 %v2223
        %v2600 = vunpack.c.l.b16 %v2224
        %v2601 = vunpack.c.h.b16 %v2224
        %v2602 = vunpack.c.l.b16 %v2225
        %v2603 = vunpack.c.h.b16 %v2225
        %v2604 = vunpack.c.l.b16 %v2226
        %v2605 = vunpack.c.h.b16 %v2226
        %v2606 = vunpack.c.l.b16 %v2227
        %v2607 = vunpack.c.h.b16 %v2227
        %v2608 = vunpack.c.l.b16 %v2228
        %v2609 = vunpack.c.h.b16 %v2228
        %v2610 = vunpack.c.l.b16 %v2229
        %v2611 = vunpack.c.h.b16 %v2229
        %v2612 = vunpack.c.l.b16 %v2230
        %v2613 = vunpack.c.h.b16 %v2230
        %v2614 = vunpack.c.l.b16 %v2231
        %v2615 = vunpack.c.h.b16 %v2231
        %v2616 = vunpack.c.l.b16 %v2232
        %v2617 = vunpack.c.h.b16 %v2232
        %v2618 = vunpack.c.l.b16 %v2233
        %v2619 = vunpack.c.h.b16 %v2233
        %v2620 = vunpack.c.l.b16 %v2234
        %v2621 = vunpack.c.h.b16 %v2234
        %v2622 = vunpack.c.l.b16 %v2235
        %v2623 = vunpack.c.h.b16 %v2235
        %v2624 = vunpack.c.l.b16 %v2236
        %v2625 = vunpack.c.h.b16 %v2236
        %v2626 = vunpack.c.l.b16 %v2237
        %v2627 = vunpack.c.h.b16 %v2237
        %v2628 = vunpack.c.l.b16 %v2238
        %v2629 = vunpack.c.h.b16 %v2238
        %v2630 = vunpack.c.l.b16 %v2239
        %v2631 = vunpack.c.h.b16 %v2239
        %v2632 = vunpack.c.l.b16 %v2240
        %v2633 = vunpack.c.h.b16 %v2240
        %v2634 = vunpack.c.l.b16 %v2241
        %v2635 = vunpack.c.h.b16 %v2241
        %v2636 = vunpack.c.l.b16 %v2242
        %v2637 = vunpack.c.h.b16 %v2242
        %v2638 = vunpack.c.l.b16 %v2243
        %v2639 = vunpack.c.h.b16 %v2243
        %v2640 = vunpack.c.l.b16 %v2244
        %v2641 = vunpack.c.h.b16 %v2244
        %v2642 = vunpack.c.l.b16 %v2245
        %v2643 = vunpack.c.h.b16 %v2245
        %v2644 = vunpack.c.l.b16 %v2246
        %v2645 = vunpack.c.h.b16 %v2246
        %v2646 = vunpack.c.l.b16 %v2247
        %v2647 = vunpack.c.h.b16 %v2247
        %v2648 = vunpack.c.l.b16 %v2248
        %v2649 = vunpack.c.h.b16 %v2248
        %v2650 = vunpack.c.l.b16 %v2249
        %v2651 = vunpack.c.h.b16 %v2249
        %v2652 = vunpack.c.l.b16 %v2250
        %v2653 = vunpack.c.h.b16 %v2250
        %v2654 = vunpack.c.l.b16 %v2251
        %v2655 = vunpack.c.h.b16 %v2251
        %v2656 = vunpack.c.l.b16 %v2252
        %v2657 = vunpack.c.h.b16 %v2252
        %v2658 = vunpack.c.l.b16 %v2253
        %v2659 = vunpack.c.h.b16 %v2253
        %v2660 = vpack.c.b16 %v2408, %v2404
        %v2661 = vpack.c.b16 %v2409, %v2405
        %v2662 = vpack.c.b16 %v2410, %v2406
        %v2663 = vpack.c.b16 %v2411, %v2407
        %v2664 = vpack.c.b16 %v2416, %v2412
        %v2665 = vpack.c.b16 %v2417, %v2413
        %v2666 = vpack.c.b16 %v2418, %v2414
        %v2667 = vpack.c.b16 %v2419, %v2415
        %v2668 = vpack.c.b16 %v2424, %v2420
        %v2669 = vpack.c.b16 %v2425, %v2421
        %v2670 = vpack.c.b16 %v2426, %v2422
        %v2671 = vpack.c.b16 %v2427, %v2423
        %v2672 = vpack.c.b16 %v2432, %v2428
        %v2673 = vpack.c.b16 %v2433, %v2429
        %v2674 = vpack.c.b16 %v2434, %v2430
        %v2675 = vpack.c.b16 %v2435, %v2431
        %v2676 = vpack.c.b16 %v2440, %v2436
        %v2677 = vpack.c.b16 %v2441, %v2437
        %v2678 = vpack.c.b16 %v2442, %v2438
        %v2679 = vpack.c.b16 %v2443, %v2439
        %v2680 = vpack.c.b16 %v2448, %v2444
        %v2681 = vpack.c.b16 %v2449, %v2445
        %v2682 = vpack.c.b16 %v2450, %v2446
        %v2683 = vpack.c.b16 %v2451, %v2447
        %v2684 = vpack.c.b16 %v2456, %v2452
        %v2685 = vpack.c.b16 %v2457, %v2453
        %v2686 = vpack.c.b16 %v2458, %v2454
        %v2687 = vpack.c.b16 %v2459, %v2455
        %v2688 = vpack.c.b16 %v2464, %v2460
        %v2689 = vpack.c.b16 %v2465, %v2461
        %v2690 = vpack.c.b16 %v2466, %v2462
        %v2691 = vpack.c.b16 %v2467, %v2463
        %v2692 = vpack.c.b16 %v2472, %v2468
        %v2693 = vpack.c.b16 %v2473, %v2469
        %v2694 = vpack.c.b16 %v2474, %v2470
        %v2695 = vpack.c.b16 %v2475, %v2471
        %v2696 = vpack.c.b16 %v2480, %v2476
        %v2697 = vpack.c.b16 %v2481, %v2477
        %v2698 = vpack.c.b16 %v2482, %v2478
        %v2699 = vpack.c.b16 %v2483, %v2479
        %v2700 = vpack.c.b16 %v2488, %v2484
        %v2701 = vpack.c.b16 %v2489, %v2485
        %v2702 = vpack.c.b16 %v2490, %v2486
        %v2703 = vpack.c.b16 %v2491, %v2487
        %v2704 = vpack.c.b16 %v2496, %v2492
        %v2705 = vpack.c.b16 %v2497, %v2493
        %v2706 = vpack.c.b16 %v2498, %v2494
        %v2707 = vpack.c.b16 %v2499, %v2495
        %v2708 = vpack.c.b16 %v2504, %v2500
        %v2709 = vpack.c.b16 %v2505, %v2501
        %v2710 = vpack.c.b16 %v2506, %v2502
        %v2711 = vpack.c.b16 %v2507, %v2503
        %v2712 = vpack.c.b16 %v2512, %v2508
        %v2713 = vpack.c.b16 %v2513, %v2509
        %v2714 = vpack.c.b16 %v2514, %v2510
        %v2715 = vpack.c.b16 %v2515, %v2511
        %v2716 = vpack.c.b16 %v2520, %v2516
        %v2717 = vpack.c.b16 %v2521, %v2517
        %v2718 = vpack.c.b16 %v2522, %v2518
        %v2719 = vpack.c.b16 %v2523, %v2519
        %v2720 = vpack.c.b16 %v2528, %v2524
        %v2721 = vpack.c.b16 %v2529, %v2525
        %v2722 = vpack.c.b16 %v2530, %v2526
        %v2723 = vpack.c.b16 %v2531, %v2527
        %v2724 = vpack.c.b16 %v2536, %v2532
        %v2725 = vpack.c.b16 %v2537, %v2533
        %v2726 = vpack.c.b16 %v2538, %v2534
        %v2727 = vpack.c.b16 %v2539, %v2535
        %v2728 = vpack.c.b16 %v2544, %v2540
        %v2729 = vpack.c.b16 %v2545, %v2541
        %v2730 = vpack.c.b16 %v2546, %v2542
        %v2731 = vpack.c.b16 %v2547, %v2543
        %v2732 = vpack.c.b16 %v2552, %v2548
        %v2733 = vpack.c.b16 %v2553, %v2549
        %v2734 = vpack.c.b16 %v2554, %v2550
        %v2735 = vpack.c.b16 %v2555, %v2551
        %v2736 = vpack.c.b16 %v2560, %v2556
        %v2737 = vpack.c.b16 %v2561, %v2557
        %v2738 = vpack.c.b16 %v2562, %v2558
        %v2739 = vpack.c.b16 %v2563, %v2559
        %v2740 = vpack.c.b16 %v2568, %v2564
        %v2741 = vpack.c.b16 %v2569, %v2565
        %v2742 = vpack.c.b16 %v2570, %v2566
        %v2743 = vpack.c.b16 %v2571, %v2567
        %v2744 = vpack.c.b16 %v2576, %v2572
        %v2745 = vpack.c.b16 %v2577, %v2573
        %v2746 = vpack.c.b16 %v2578, %v2574
        %v2747 = vpack.c.b16 %v2579, %v2575
        %v2748 = vpack.c.b16 %v2584, %v2580
        %v2749 = vpack.c.b16 %v2585, %v2581
        %v2750 = vpack.c.b16 %v2586, %v2582
        %v2751 = vpack.c.b16 %v2587, %v2583
        %v2752 = vpack.c.b16 %v2592, %v2588
        %v2753 = vpack.c.b16 %v2593, %v2589
        %v2754 = vpack.c.b16 %v2594, %v2590
        %v2755 = vpack.c.b16 %v2595, %v2591
        %v2756 = vpack.c.b16 %v2600, %v2596
        %v2757 = vpack.c.b16 %v2601, %v2597
        %v2758 = vpack.c.b16 %v2602, %v2598
        %v2759 = vpack.c.b16 %v2603, %v2599
        %v2760 = vpack.c.b16 %v2608, %v2604
        %v2761 = vpack.c.b16 %v2609, %v2605
        %v2762 = vpack.c.b16 %v2610, %v2606
        %v2763 = vpack.c.b16 %v2611, %v2607
        %v2764 = vpack.c.b16 %v2616, %v2612
        %v2765 = vpack.c.b16 %v2617, %v2613
        %v2766 = vpack.c.b16 %v2618, %v2614
        %v2767 = vpack.c.b16 %v2619, %v2615
        %v2768 = vpack.c.b16 %v2624, %v2620
        %v2769 = vpack.c.b16 %v2625, %v2621
        %v2770 = vpack.c.b16 %v2626, %v2622
        %v2771 = vpack.c.b16 %v2627, %v2623
        %v2772 = vpack.c.b16 %v2632, %v2628
        %v2773 = vpack.c.b16 %v2633, %v2629
        %v2774 = vpack.c.b16 %v2634, %v2630
        %v2775 = vpack.c.b16 %v2635, %v2631
        %v2776 = vpack.c.b16 %v2640, %v2636
        %v2777 = vpack.c.b16 %v2641, %v2637
        %v2778 = vpack.c.b16 %v2642, %v2638
        %v2779 = vpack.c.b16 %v2643, %v2639
        %v2780 = vpack.c.b16 %v2648, %v2644
        %v2781 = vpack.c.b16 %v2649, %v2645
        %v2782 = vpack.c.b16 %v2650, %v2646
        %v2783 = vpack.c.b16 %v2651, %v2647
        %v2784 = vpack.c.b16 %v2656, %v2652
        %v2785 = vpack.c.b16 %v2657, %v2653
        %v2786 = vpack.c.b16 %v2658, %v2654
        %v2787 = vpack.c.b16 %v2659, %v2655
        %2916 = vmatprep.subr.bf16.mxu0 %v2661
        %2917 = vmatpush1.bf16.msra.mxu0 %v2660
        %2918 = vmatprep.subr.bf16.mxu0 %v2665
        %2919 = vmatpush1.bf16.msra.mxu0 %v2664
        %2920 = vmatprep.subr.bf16.mxu0 %v2669
        %2921 = vmatpush1.bf16.msra.mxu0 %v2668
        %2922 = vmatprep.subr.bf16.mxu0 %v2673
        %2923 = vmatpush1.bf16.msra.mxu0 %v2672
        %2924 = vmatprep.subr.bf16.mxu0 %v2677
        %2925 = vmatpush1.bf16.msra.mxu0 %v2676
        %2926 = vmatprep.subr.bf16.mxu0 %v2681
        %2927 = vmatpush1.bf16.msra.mxu0 %v2680
        %2928 = vmatprep.subr.bf16.mxu0 %v2685
        %2929 = vmatpush1.bf16.msra.mxu0 %v2684
        %2930 = vmatprep.subr.bf16.mxu0 %v2689
        %2931 = vmatpush1.bf16.msra.mxu0 %v2688
        %2932 = vmatprep.subr.bf16.mxu0 %v2693
        %2933 = vmatpush1.bf16.msra.mxu0 %v2692
        %2934 = vmatprep.subr.bf16.mxu0 %v2697
        %2935 = vmatpush1.bf16.msra.mxu0 %v2696
        %2936 = vmatprep.subr.bf16.mxu0 %v2701
        %2937 = vmatpush1.bf16.msra.mxu0 %v2700
        %2938 = vmatprep.subr.bf16.mxu0 %v2705
        %2939 = vmatpush1.bf16.msra.mxu0 %v2704
        %2940 = vmatprep.subr.bf16.mxu0 %v2709
        %2941 = vmatpush1.bf16.msra.mxu0 %v2708
        %2942 = vmatprep.subr.bf16.mxu0 %v2713
        %2943 = vmatpush1.bf16.msra.mxu0 %v2712
        %2944 = vmatprep.subr.bf16.mxu0 %v2717
        %2945 = vmatpush1.bf16.msra.mxu0 %v2716
        %2946 = vmatprep.subr.bf16.mxu0 %v2721
        %2947 = vmatpush1.bf16.msra.mxu0 %v2720
        %2948 = vmatprep.mubr.bf16.mxu0 %v2087
        %2949 = vmatmul.mubr.bf16.gmra.mrb[0].mxu0 %v2086
        %v2950 = vpop.f32.mrb[0].mxu0
        %v2951 = vadd.f32 %v2259, %v2950
        %v2952 = vpop.f32.mrb[0].mxu0
        %v2953 = vadd.f32 %v2263, %v2952
        %v2954 = vpop.f32.mrb[0].mxu0
        %v2955 = vadd.f32 %v2259, %v2954
        %v2956 = vpop.f32.mrb[0].mxu0
        %v2957 = vadd.f32 %v2263, %v2956
        %2958 = vmatprep.mubr.bf16.mxu0 %v2091
        %2959 = vmatmul.mubr.bf16.gmra.mrb[0].mxu0 %v2090
        %v2960 = vpop.f32.mrb[0].mxu0
        %v2961 = vadd.f32 %v2259, %v2960
        %v2962 = vpop.f32.mrb[0].mxu0
        %v2963 = vadd.f32 %v2263, %v2962
        %v2964 = vpop.f32.mrb[0].mxu0
        %v2965 = vadd.f32 %v2259, %v2964
        %v2966 = vpop.f32.mrb[0].mxu0
        %v2967 = vadd.f32 %v2263, %v2966
        %2968 = vmatprep.mubr.bf16.mxu0 %v2095
        %2969 = vmatmul.mubr.bf16.gmra.mrb[0].mxu0 %v2094
        %v2970 = vpop.f32.mrb[0].mxu0
        %v2971 = vadd.f32 %v2259, %v2970
        %v2972 = vpop.f32.mrb[0].mxu0
        %v2973 = vadd.f32 %v2263, %v2972
        %v2974 = vpop.f32.mrb[0].mxu0
        %v2975 = vadd.f32 %v2259, %v2974
        %v2976 = vpop.f32.mrb[0].mxu0
        %v2977 = vadd.f32 %v2263, %v2976
        %2978 = vmatprep.mubr.bf16.mxu0 %v2099
        %2979 = vmatmul.mubr.bf16.gmra.mrb[0].mxu0 %v2098
        %v2980 = vpop.f32.mrb[0].mxu0
        %v2981 = vadd.f32 %v2259, %v2980
        %v2982 = vpop.f32.mrb[0].mxu0
        %v2983 = vadd.f32 %v2263, %v2982
        %v2984 = vpop.f32.mrb[0].mxu0
        %v2985 = vadd.f32 %v2259, %v2984
        %v2986 = vpop.f32.mrb[0].mxu0
        %v2987 = vadd.f32 %v2263, %v2986
        %2988 = vmatprep.mubr.bf16.mxu0 %v2103
        %2989 = vmatmul.mubr.bf16.gmra.mrb[0].mxu0 %v2102
        %v2990 = vpop.f32.mrb[0].mxu0
        %v2991 = vadd.f32 %v2259, %v2990
        %v2992 = vpop.f32.mrb[0].mxu0
        %v2993 = vadd.f32 %v2263, %v2992
        %v2994 = vpop.f32.mrb[0].mxu0
        %v2995 = vadd.f32 %v2259, %v2994
        %v2996 = vpop.f32.mrb[0].mxu0
        %v2997 = vadd.f32 %v2263, %v2996
        %2998 = vmatprep.mubr.bf16.mxu0 %v2107
        %2999 = vmatmul.mubr.bf16.gmra.mrb[0].mxu0 %v2106
        %v3000 = vpop.f32.mrb[0].mxu0
        %v3001 = vadd.f32 %v2259, %v3000
        %v3002 = vpop.f32.mrb[0].mxu0
        %v3003 = vadd.f32 %v2263, %v3002
        %v3004 = vpop.f32.mrb[0].mxu0
        %v3005 = vadd.f32 %v2259, %v3004
        %v3006 = vpop.f32.mrb[0].mxu0
        %v3007 = vadd.f32 %v2263, %v3006
        %3008 = vmatprep.mubr.bf16.mxu0 %v2111
        %3009 = vmatmul.mubr.bf16.gmra.mrb[0].mxu0 %v2110
        %v3010 = vpop.f32.mrb[0].mxu0
        %v3011 = vadd.f32 %v2259, %v3010
        %v3012 = vpop.f32.mrb[0].mxu0
        %v3013 = vadd.f32 %v2263, %v3012
        %v3014 = vpop.f32.mrb[0].mxu0
        %v3015 = vadd.f32 %v2259, %v3014
        %v3016 = vpop.f32.mrb[0].mxu0
        %v3017 = vadd.f32 %v2263, %v3016
        %3018 = vmatprep.mubr.bf16.mxu0 %v2115
        %3019 = vmatmul.mubr.bf16.gmra.mrb[0].mxu0 %v2114
        %v3020 = vpop.f32.mrb[0].mxu0
        %v3021 = vadd.f32 %v2259, %v3020
        %v3022 = vpop.f32.mrb[0].mxu0
        %v3023 = vadd.f32 %v2263, %v3022
        %v3024 = vpop.f32.mrb[0].mxu0
        %v3025 = vadd.f32 %v2259, %v3024
        %v3026 = vpop.f32.mrb[0].mxu0
        %v3027 = vadd.f32 %v2263, %v3026
        %3028 = vmatprep.mubr.bf16.mxu0 %v2119
        %3029 = vmatmul.mubr.bf16.gmra.mrb[0].mxu0 %v2118
        %v3030 = vpop.f32.mrb[0].mxu0
        %v3031 = vadd.f32 %v2259, %v3030
        %v3032 = vpop.f32.mrb[0].mxu0
        %v3033 = vadd.f32 %v2263, %v3032
        %v3034 = vpop.f32.mrb[0].mxu0
        %v3035 = vadd.f32 %v2259, %v3034
        %v3036 = vpop.f32.mrb[0].mxu0
        %v3037 = vadd.f32 %v2263, %v3036
        %3038 = vmatprep.mubr.bf16.mxu0 %v2123
        %3039 = vmatmul.mubr.bf16.gmra.mrb[0].mxu0 %v2122
        %v3040 = vpop.f32.mrb[0].mxu0
        %v3041 = vadd.f32 %v2259, %v3040
        %v3042 = vpop.f32.mrb[0].mxu0
        %v3043 = vadd.f32 %v2263, %v3042
        %v3044 = vpop.f32.mrb[0].mxu0
        %v3045 = vadd.f32 %v2259, %v3044
        %v3046 = vpop.f32.mrb[0].mxu0
        %v3047 = vadd.f32 %v2263, %v3046
        %3048 = vdwg.mxu0
        %3049 = vmatprep.subr.bf16.mxu0 %v2725
        %3050 = vmatpush1.bf16.msra.mxu0 %v2724
        %3051 = vmatprep.subr.bf16.mxu0 %v2729
        %3052 = vmatpush1.bf16.msra.mxu0 %v2728
        %3053 = vmatprep.subr.bf16.mxu0 %v2733
        %3054 = vmatpush1.bf16.msra.mxu0 %v2732
        %3055 = vmatprep.subr.bf16.mxu0 %v2737
        %3056 = vmatpush1.bf16.msra.mxu0 %v2736
        %3057 = vmatprep.subr.bf16.mxu0 %v2741
        %3058 = vmatpush1.bf16.msra.mxu0 %v2740
        %3059 = vmatprep.subr.bf16.mxu0 %v2745
        %3060 = vmatpush1.bf16.msra.mxu0 %v2744
        %3061 = vmatprep.subr.bf16.mxu0 %v2749
        %3062 = vmatpush1.bf16.msra.mxu0 %v2748
        %3063 = vmatprep.subr.bf16.mxu0 %v2753
        %3064 = vmatpush1.bf16.msra.mxu0 %v2752
        %3065 = vmatprep.subr.bf16.mxu0 %v2757
        %3066 = vmatpush1.bf16.msra.mxu0 %v2756
        %3067 = vmatprep.subr.bf16.mxu0 %v2761
        %3068 = vmatpush1.bf16.msra.mxu0 %v2760
        %3069 = vmatprep.subr.bf16.mxu0 %v2765
        %3070 = vmatpush1.bf16.msra.mxu0 %v2764
        %3071 = vmatprep.subr.bf16.mxu0 %v2769
        %3072 = vmatpush1.bf16.msra.mxu0 %v2768
        %3073 = vmatprep.subr.bf16.mxu0 %v2773
        %3074 = vmatpush1.bf16.msra.mxu0 %v2772
        %3075 = vmatprep.subr.bf16.mxu0 %v2777
        %3076 = vmatpush1.bf16.msra.mxu0 %v2776
        %3077 = vmatprep.subr.bf16.mxu0 %v2781
        %3078 = vmatpush1.bf16.msra.mxu0 %v2780
        %3079 = vmatprep.subr.bf16.mxu0 %v2785
        %3080 = vmatpush1.bf16.msra.mxu0 %v2784
        %3081 = vmatprep.mubr.bf16.mxu0 %v2089
        %3082 = vmatmul.mubr.bf16.gmra.mrb[0].mxu0 %v2088
        %v3083 = vpop.f32.mrb[0].mxu0
        %v3084 = vadd.f32 %v2951, %v3083
        %v3085 = vpop.f32.mrb[0].mxu0
        %v3086 = vadd.f32 %v2953, %v3085
        %v3087 = vpop.f32.mrb[0].mxu0
        %v3088 = vadd.f32 %v2955, %v3087
        %v3089 = vpop.f32.mrb[0].mxu0
        %v3090 = vadd.f32 %v2957, %v3089
        %3091 = vmatprep.mubr.bf16.mxu0 %v2093
        %3092 = vmatmul.mubr.bf16.gmra.mrb[0].mxu0 %v2092
        %v3093 = vpop.f32.mrb[0].mxu0
        %v3094 = vadd.f32 %v2961, %v3093
        %v3095 = vpop.f32.mrb[0].mxu0
        %v3096 = vadd.f32 %v2963, %v3095
        %v3097 = vpop.f32.mrb[0].mxu0
        %v3098 = vadd.f32 %v2965, %v3097
        %v3099 = vpop.f32.mrb[0].mxu0
        %v3100 = vadd.f32 %v2967, %v3099
        %3101 = vmatprep.mubr.bf16.mxu0 %v2097
        %3102 = vmatmul.mubr.bf16.gmra.mrb[0].mxu0 %v2096
        %v3103 = vpop.f32.mrb[0].mxu0
        %v3104 = vadd.f32 %v2971, %v3103
        %v3105 = vpop.f32.mrb[0].mxu0
        %v3106 = vadd.f32 %v2973, %v3105
        %v3107 = vpop.f32.mrb[0].mxu0
        %v3108 = vadd.f32 %v2975, %v3107
        %v3109 = vpop.f32.mrb[0].mxu0
        %v3110 = vadd.f32 %v2977, %v3109
        %3111 = vmatprep.mubr.bf16.mxu0 %v2101
        %3112 = vmatmul.mubr.bf16.gmra.mrb[0].mxu0 %v2100
        %v3113 = vpop.f32.mrb[0].mxu0
        %v3114 = vadd.f32 %v2981, %v3113
        %v3115 = vpop.f32.mrb[0].mxu0
        %v3116 = vadd.f32 %v2983, %v3115
        %v3117 = vpop.f32.mrb[0].mxu0
        %v3118 = vadd.f32 %v2985, %v3117
        %v3119 = vpop.f32.mrb[0].mxu0
        %v3120 = vadd.f32 %v2987, %v3119
        %3121 = vmatprep.mubr.bf16.mxu0 %v2105
        %3122 = vmatmul.mubr.bf16.gmra.mrb[0].mxu0 %v2104
        %v3123 = vpop.f32.mrb[0].mxu0
        %v3124 = vadd.f32 %v2991, %v3123
        %v3125 = vpop.f32.mrb[0].mxu0
        %v3126 = vadd.f32 %v2993, %v3125
        %v3127 = vpop.f32.mrb[0].mxu0
        %v3128 = vadd.f32 %v2995, %v3127
        %v3129 = vpop.f32.mrb[0].mxu0
        %v3130 = vadd.f32 %v2997, %v3129
        %3131 = vmatprep.mubr.bf16.mxu0 %v2109
        %3132 = vmatmul.mubr.bf16.gmra.mrb[0].mxu0 %v2108
        %v3133 = vpop.f32.mrb[0].mxu0
        %v3134 = vadd.f32 %v3001, %v3133
        %v3135 = vpop.f32.mrb[0].mxu0
        %v3136 = vadd.f32 %v3003, %v3135
        %v3137 = vpop.f32.mrb[0].mxu0
        %v3138 = vadd.f32 %v3005, %v3137
        %v3139 = vpop.f32.mrb[0].mxu0
        %v3140 = vadd.f32 %v3007, %v3139
        %3141 = vmatprep.mubr.bf16.mxu0 %v2113
        %3142 = vmatmul.mubr.bf16.gmra.mrb[0].mxu0 %v2112
        %v3143 = vpop.f32.mrb[0].mxu0
        %v3144 = vadd.f32 %v3011, %v3143
        %v3145 = vpop.f32.mrb[0].mxu0
        %v3146 = vadd.f32 %v3013, %v3145
        %v3147 = vpop.f32.mrb[0].mxu0
        %v3148 = vadd.f32 %v3015, %v3147
        %v3149 = vpop.f32.mrb[0].mxu0
        %v3150 = vadd.f32 %v3017, %v3149
        %3151 = vmatprep.mubr.bf16.mxu0 %v2117
        %3152 = vmatmul.mubr.bf16.gmra.mrb[0].mxu0 %v2116
        %v3153 = vpop.f32.mrb[0].mxu0
        %v3154 = vadd.f32 %v3021, %v3153
        %v3155 = vpop.f32.mrb[0].mxu0
        %v3156 = vadd.f32 %v3023, %v3155
        %v3157 = vpop.f32.mrb[0].mxu0
        %v3158 = vadd.f32 %v3025, %v3157
        %v3159 = vpop.f32.mrb[0].mxu0
        %v3160 = vadd.f32 %v3027, %v3159
        %3161 = vmatprep.mubr.bf16.mxu0 %v2121
        %3162 = vmatmul.mubr.bf16.gmra.mrb[0].mxu0 %v2120
        %v3163 = vpop.f32.mrb[0].mxu0
        %v3164 = vadd.f32 %v3031, %v3163
        %v3165 = vpop.f32.mrb[0].mxu0
        %v3166 = vadd.f32 %v3033, %v3165
        %v3167 = vpop.f32.mrb[0].mxu0
        %v3168 = vadd.f32 %v3035, %v3167
        %v3169 = vpop.f32.mrb[0].mxu0
        %v3170 = vadd.f32 %v3037, %v3169
        %3171 = vmatprep.mubr.bf16.mxu0 %v2125
        %3172 = vmatmul.mubr.bf16.gmra.mrb[0].mxu0 %v2124
        %v3173 = vpop.f32.mrb[0].mxu0
        %v3174 = vadd.f32 %v3041, %v3173
        %v3175 = vpop.f32.mrb[0].mxu0
        %v3176 = vadd.f32 %v3043, %v3175
        %v3177 = vpop.f32.mrb[0].mxu0
        %v3178 = vadd.f32 %v3045, %v3177
        %v3179 = vpop.f32.mrb[0].mxu0
        %v3180 = vadd.f32 %v3047, %v3179
        %3181 = vdwg.mxu0
        %3182 = vmatprep.subr.bf16.mxu0 %v2663
        %3183 = vmatpush1.bf16.msra.mxu0 %v2662
        %3184 = vmatprep.subr.bf16.mxu0 %v2667
        %3185 = vmatpush1.bf16.msra.mxu0 %v2666
        %3186 = vmatprep.subr.bf16.mxu0 %v2671
        %3187 = vmatpush1.bf16.msra.mxu0 %v2670
        %3188 = vmatprep.subr.bf16.mxu0 %v2675
        %3189 = vmatpush1.bf16.msra.mxu0 %v2674
        %3190 = vmatprep.subr.bf16.mxu0 %v2679
        %3191 = vmatpush1.bf16.msra.mxu0 %v2678
        %3192 = vmatprep.subr.bf16.mxu0 %v2683
        %3193 = vmatpush1.bf16.msra.mxu0 %v2682
        %3194 = vmatprep.subr.bf16.mxu0 %v2687
        %3195 = vmatpush1.bf16.msra.mxu0 %v2686
        %3196 = vmatprep.subr.bf16.mxu0 %v2691
        %3197 = vmatpush1.bf16.msra.mxu0 %v2690
        %3198 = vmatprep.subr.bf16.mxu0 %v2695
        %3199 = vmatpush1.bf16.msra.mxu0 %v2694
        %3200 = vmatprep.subr.bf16.mxu0 %v2699
        %3201 = vmatpush1.bf16.msra.mxu0 %v2698
        %3202 = vmatprep.subr.bf16.mxu0 %v2703
        %3203 = vmatpush1.bf16.msra.mxu0 %v2702
        %3204 = vmatprep.subr.bf16.mxu0 %v2707
        %3205 = vmatpush1.bf16.msra.mxu0 %v2706
        %3206 = vmatprep.subr.bf16.mxu0 %v2711
        %3207 = vmatpush1.bf16.msra.mxu0 %v2710
        %3208 = vmatprep.subr.bf16.mxu0 %v2715
        %3209 = vmatpush1.bf16.msra.mxu0 %v2714
        %3210 = vmatprep.subr.bf16.mxu0 %v2719
        %3211 = vmatpush1.bf16.msra.mxu0 %v2718
        %3212 = vmatprep.subr.bf16.mxu0 %v2723
        %3213 = vmatpush1.bf16.msra.mxu0 %v2722
        %3214 = vmatprep.mubr.bf16.mxu0 %v2087
        %3215 = vmatmul.mubr.bf16.gmra.mrb[0].mxu0 %v2086
        %v3216 = vpop.f32.mrb[0].mxu0
        %v3217 = vadd.f32 %v2267, %v3216
        %v3218 = vpop.f32.mrb[0].mxu0
        %v3219 = vadd.f32 %v2271, %v3218
        %v3220 = vpop.f32.mrb[0].mxu0
        %v3221 = vadd.f32 %v2267, %v3220
        %v3222 = vpop.f32.mrb[0].mxu0
        %v3223 = vadd.f32 %v2271, %v3222
        %3224 = vmatprep.mubr.bf16.mxu0 %v2091
        %3225 = vmatmul.mubr.bf16.gmra.mrb[0].mxu0 %v2090
        %v3226 = vpop.f32.mrb[0].mxu0
        %v3227 = vadd.f32 %v2267, %v3226
        %v3228 = vpop.f32.mrb[0].mxu0
        %v3229 = vadd.f32 %v2271, %v3228
        %v3230 = vpop.f32.mrb[0].mxu0
        %v3231 = vadd.f32 %v2267, %v3230
        %v3232 = vpop.f32.mrb[0].mxu0
        %v3233 = vadd.f32 %v2271, %v3232
        %3234 = vmatprep.mubr.bf16.mxu0 %v2095
        %3235 = vmatmul.mubr.bf16.gmra.mrb[0].mxu0 %v2094
        %v3236 = vpop.f32.mrb[0].mxu0
        %v3237 = vadd.f32 %v2267, %v3236
        %v3238 = vpop.f32.mrb[0].mxu0
        %v3239 = vadd.f32 %v2271, %v3238
        %v3240 = vpop.f32.mrb[0].mxu0
        %v3241 = vadd.f32 %v2267, %v3240
        %v3242 = vpop.f32.mrb[0].mxu0
        %v3243 = vadd.f32 %v2271, %v3242
        %3244 = vmatprep.mubr.bf16.mxu0 %v2099
        %3245 = vmatmul.mubr.bf16.gmra.mrb[0].mxu0 %v2098
        %v3246 = vpop.f32.mrb[0].mxu0
        %v3247 = vadd.f32 %v2267, %v3246
        %v3248 = vpop.f32.mrb[0].mxu0
        %v3249 = vadd.f32 %v2271, %v3248
        %v3250 = vpop.f32.mrb[0].mxu0
        %v3251 = vadd.f32 %v2267, %v3250
        %v3252 = vpop.f32.mrb[0].mxu0
        %v3253 = vadd.f32 %v2271, %v3252
        %3254 = vmatprep.mubr.bf16.mxu0 %v2103
        %3255 = vmatmul.mubr.bf16.gmra.mrb[0].mxu0 %v2102
        %v3256 = vpop.f32.mrb[0].mxu0
        %v3257 = vadd.f32 %v2267, %v3256
        %v3258 = vpop.f32.mrb[0].mxu0
        %v3259 = vadd.f32 %v2271, %v3258
        %v3260 = vpop.f32.mrb[0].mxu0
        %v3261 = vadd.f32 %v2267, %v3260
        %v3262 = vpop.f32.mrb[0].mxu0
        %v3263 = vadd.f32 %v2271, %v3262
        %3264 = vmatprep.mubr.bf16.mxu0 %v2107
        %3265 = vmatmul.mubr.bf16.gmra.mrb[0].mxu0 %v2106
        %v3266 = vpop.f32.mrb[0].mxu0
        %v3267 = vadd.f32 %v2267, %v3266
        %v3268 = vpop.f32.mrb[0].mxu0
        %v3269 = vadd.f32 %v2271, %v3268
        %v3270 = vpop.f32.mrb[0].mxu0
        %v3271 = vadd.f32 %v2267, %v3270
        %v3272 = vpop.f32.mrb[0].mxu0
        %v3273 = vadd.f32 %v2271, %v3272
        %3274 = vmatprep.mubr.bf16.mxu0 %v2111
        %3275 = vmatmul.mubr.bf16.gmra.mrb[0].mxu0 %v2110
        %v3276 = vpop.f32.mrb[0].mxu0
        %v3277 = vadd.f32 %v2267, %v3276
        %v3278 = vpop.f32.mrb[0].mxu0
        %v3279 = vadd.f32 %v2271, %v3278
        %v3280 = vpop.f32.mrb[0].mxu0
        %v3281 = vadd.f32 %v2267, %v3280
        %v3282 = vpop.f32.mrb[0].mxu0
        %v3283 = vadd.f32 %v2271, %v3282
        %3284 = vmatprep.mubr.bf16.mxu0 %v2115
        %3285 = vmatmul.mubr.bf16.gmra.mrb[0].mxu0 %v2114
        %v3286 = vpop.f32.mrb[0].mxu0
        %v3287 = vadd.f32 %v2267, %v3286
        %v3288 = vpop.f32.mrb[0].mxu0
        %v3289 = vadd.f32 %v2271, %v3288
        %v3290 = vpop.f32.mrb[0].mxu0
        %v3291 = vadd.f32 %v2267, %v3290
        %v3292 = vpop.f32.mrb[0].mxu0
        %v3293 = vadd.f32 %v2271, %v3292
        %3294 = vmatprep.mubr.bf16.mxu0 %v2119
        %3295 = vmatmul.mubr.bf16.gmra.mrb[0].mxu0 %v2118
        %v3296 = vpop.f32.mrb[0].mxu0
        %v3297 = vadd.f32 %v2267, %v3296
        %v3298 = vpop.f32.mrb[0].mxu0
        %v3299 = vadd.f32 %v2271, %v3298
        %v3300 = vpop.f32.mrb[0].mxu0
        %v3301 = vadd.f32 %v2267, %v3300
        %v3302 = vpop.f32.mrb[0].mxu0
        %v3303 = vadd.f32 %v2271, %v3302
        %3304 = vmatprep.mubr.bf16.mxu0 %v2123
        %3305 = vmatmul.mubr.bf16.gmra.mrb[0].mxu0 %v2122
        %v3306 = vpop.f32.mrb[0].mxu0
        %v3307 = vadd.f32 %v2267, %v3306
        %v3308 = vpop.f32.mrb[0].mxu0
        %v3309 = vadd.f32 %v2271, %v3308
        %v3310 = vpop.f32.mrb[0].mxu0
        %v3311 = vadd.f32 %v2267, %v3310
        %v3312 = vpop.f32.mrb[0].mxu0
        %v3313 = vadd.f32 %v2271, %v3312
        %3314 = vdwg.mxu0
        %3315 = vmatprep.subr.bf16.mxu0 %v2727
        %3316 = vmatpush1.bf16.msra.mxu0 %v2726
        %3317 = vmatprep.subr.bf16.mxu0 %v2731
        %3318 = vmatpush1.bf16.msra.mxu0 %v2730
        %3319 = vmatprep.subr.bf16.mxu0 %v2735
        %3320 = vmatpush1.bf16.msra.mxu0 %v2734
        %3321 = vmatprep.subr.bf16.mxu0 %v2739
        %3322 = vmatpush1.bf16.msra.mxu0 %v2738
        %3323 = vmatprep.subr.bf16.mxu0 %v2743
        %3324 = vmatpush1.bf16.msra.mxu0 %v2742
        %3325 = vmatprep.subr.bf16.mxu0 %v2747
        %3326 = vmatpush1.bf16.msra.mxu0 %v2746
        %3327 = vmatprep.subr.bf16.mxu0 %v2751
        %3328 = vmatpush1.bf16.msra.mxu0 %v2750
        %3329 = vmatprep.subr.bf16.mxu0 %v2755
        %3330 = vmatpush1.bf16.msra.mxu0 %v2754
        %3331 = vmatprep.subr.bf16.mxu0 %v2759
        %3332 = vmatpush1.bf16.msra.mxu0 %v2758
        %3333 = vmatprep.subr.bf16.mxu0 %v2763
        %3334 = vmatpush1.bf16.msra.mxu0 %v2762
        %3335 = vmatprep.subr.bf16.mxu0 %v2767
        %3336 = vmatpush1.bf16.msra.mxu0 %v2766
        %3337 = vmatprep.subr.bf16.mxu0 %v2771
        %3338 = vmatpush1.bf16.msra.mxu0 %v2770
        %3339 = vmatprep.subr.bf16.mxu0 %v2775
        %3340 = vmatpush1.bf16.msra.mxu0 %v2774
        %3341 = vmatprep.subr.bf16.mxu0 %v2779
        %3342 = vmatpush1.bf16.msra.mxu0 %v2778
        %3343 = vmatprep.subr.bf16.mxu0 %v2783
        %3344 = vmatpush1.bf16.msra.mxu0 %v2782
        %3345 = vmatprep.subr.bf16.mxu0 %v2787
        %3346 = vmatpush1.bf16.msra.mxu0 %v2786
        %3347 = vmatprep.mubr.bf16.mxu0 %v2089
        %3348 = vmatmul.mubr.bf16.gmra.mrb[0].mxu0 %v2088
        %v3349 = vpop.f32.mrb[0].mxu0
        %v3350 = vadd.f32 %v3217, %v3349
        %v3351 = vpop.f32.mrb[0].mxu0
        %v3352 = vadd.f32 %v3219, %v3351
        %v3353 = vpop.f32.mrb[0].mxu0
        %v3354 = vadd.f32 %v3221, %v3353
        %v3355 = vpop.f32.mrb[0].mxu0
        %v3356 = vadd.f32 %v3223, %v3355
        %3357 = vmatprep.mubr.bf16.mxu0 %v2093
        %3358 = vmatmul.mubr.bf16.gmra.mrb[0].mxu0 %v2092
        %v3359 = vpop.f32.mrb[0].mxu0
        %v3360 = vadd.f32 %v3227, %v3359
        %v3361 = vpop.f32.mrb[0].mxu0
        %v3362 = vadd.f32 %v3229, %v3361
        %v3363 = vpop.f32.mrb[0].mxu0
        %v3364 = vadd.f32 %v3231, %v3363
        %v3365 = vpop.f32.mrb[0].mxu0
        %v3366 = vadd.f32 %v3233, %v3365
        %3367 = vmatprep.mubr.bf16.mxu0 %v2097
        %3368 = vmatmul.mubr.bf16.gmra.mrb[0].mxu0 %v2096
        %v3369 = vpop.f32.mrb[0].mxu0
        %v3370 = vadd.f32 %v3237, %v3369
        %v3371 = vpop.f32.mrb[0].mxu0
        %v3372 = vadd.f32 %v3239, %v3371
        %v3373 = vpop.f32.mrb[0].mxu0
        %v3374 = vadd.f32 %v3241, %v3373
        %v3375 = vpop.f32.mrb[0].mxu0
        %v3376 = vadd.f32 %v3243, %v3375
        %3377 = vmatprep.mubr.bf16.mxu0 %v2101
        %3378 = vmatmul.mubr.bf16.gmra.mrb[0].mxu0 %v2100
        %v3379 = vpop.f32.mrb[0].mxu0
        %v3380 = vadd.f32 %v3247, %v3379
        %v3381 = vpop.f32.mrb[0].mxu0
        %v3382 = vadd.f32 %v3249, %v3381
        %v3383 = vpop.f32.mrb[0].mxu0
        %v3384 = vadd.f32 %v3251, %v3383
        %v3385 = vpop.f32.mrb[0].mxu0
        %v3386 = vadd.f32 %v3253, %v3385
        %3387 = vmatprep.mubr.bf16.mxu0 %v2105
        %3388 = vmatmul.mubr.bf16.gmra.mrb[0].mxu0 %v2104
        %v3389 = vpop.f32.mrb[0].mxu0
        %v3390 = vadd.f32 %v3257, %v3389
        %v3391 = vpop.f32.mrb[0].mxu0
        %v3392 = vadd.f32 %v3259, %v3391
        %v3393 = vpop.f32.mrb[0].mxu0
        %v3394 = vadd.f32 %v3261, %v3393
        %v3395 = vpop.f32.mrb[0].mxu0
        %v3396 = vadd.f32 %v3263, %v3395
        %3397 = vmatprep.mubr.bf16.mxu0 %v2109
        %3398 = vmatmul.mubr.bf16.gmra.mrb[0].mxu0 %v2108
        %v3399 = vpop.f32.mrb[0].mxu0
        %v3400 = vadd.f32 %v3267, %v3399
        %v3401 = vpop.f32.mrb[0].mxu0
        %v3402 = vadd.f32 %v3269, %v3401
        %v3403 = vpop.f32.mrb[0].mxu0
        %v3404 = vadd.f32 %v3271, %v3403
        %v3405 = vpop.f32.mrb[0].mxu0
        %v3406 = vadd.f32 %v3273, %v3405
        %3407 = vmatprep.mubr.bf16.mxu0 %v2113
        %3408 = vmatmul.mubr.bf16.gmra.mrb[0].mxu0 %v2112
        %v3409 = vpop.f32.mrb[0].mxu0
        %v3410 = vadd.f32 %v3277, %v3409
        %v3411 = vpop.f32.mrb[0].mxu0
        %v3412 = vadd.f32 %v3279, %v3411
        %v3413 = vpop.f32.mrb[0].mxu0
        %v3414 = vadd.f32 %v3281, %v3413
        %v3415 = vpop.f32.mrb[0].mxu0
        %v3416 = vadd.f32 %v3283, %v3415
        %3417 = vmatprep.mubr.bf16.mxu0 %v2117
        %3418 = vmatmul.mubr.bf16.gmra.mrb[0].mxu0 %v2116
        %v3419 = vpop.f32.mrb[0].mxu0
        %v3420 = vadd.f32 %v3287, %v3419
        %v3421 = vpop.f32.mrb[0].mxu0
        %v3422 = vadd.f32 %v3289, %v3421
        %v3423 = vpop.f32.mrb[0].mxu0
        %v3424 = vadd.f32 %v3291, %v3423
        %v3425 = vpop.f32.mrb[0].mxu0
        %v3426 = vadd.f32 %v3293, %v3425
        %3427 = vmatprep.mubr.bf16.mxu0 %v2121
        %3428 = vmatmul.mubr.bf16.gmra.mrb[0].mxu0 %v2120
        %v3429 = vpop.f32.mrb[0].mxu0
        %v3430 = vadd.f32 %v3297, %v3429
        %v3431 = vpop.f32.mrb[0].mxu0
        %v3432 = vadd.f32 %v3299, %v3431
        %v3433 = vpop.f32.mrb[0].mxu0
        %v3434 = vadd.f32 %v3301, %v3433
        %v3435 = vpop.f32.mrb[0].mxu0
        %v3436 = vadd.f32 %v3303, %v3435
        %3437 = vmatprep.mubr.bf16.mxu0 %v2125
        %3438 = vmatmul.mubr.bf16.gmra.mrb[0].mxu0 %v2124
        %v3439 = vpop.f32.mrb[0].mxu0
        %v3440 = vadd.f32 %v3307, %v3439
        %v3441 = vpop.f32.mrb[0].mxu0
        %v3442 = vadd.f32 %v3309, %v3441
        %v3443 = vpop.f32.mrb[0].mxu0
        %v3444 = vadd.f32 %v3311, %v3443
        %v3445 = vpop.f32.mrb[0].mxu0
        %v3446 = vadd.f32 %v3313, %v3445
        %3447 = vdwg.mxu0
        %vm3448 = vcmp.gt.f32.partialorder %v3084, 0.0
        %vm3449 = vcmp.gt.f32.partialorder %v3086, 0.0
        %vm3450 = vcmp.gt.f32.partialorder %v3350, 0.0
        %vm3451 = vcmp.gt.f32.partialorder %v3352, 0.0
        %vm3452 = vcmp.gt.f32.partialorder %v3088, 0.0
        %vm3453 = vcmp.gt.f32.partialorder %v3090, 0.0
        %vm3454 = vcmp.gt.f32.partialorder %v3354, 0.0
        %vm3455 = vcmp.gt.f32.partialorder %v3356, 0.0
        %vm3456 = vcmp.gt.f32.partialorder %v3094, 0.0
        %vm3457 = vcmp.gt.f32.partialorder %v3096, 0.0
        %vm3458 = vcmp.gt.f32.partialorder %v3360, 0.0
        %vm3459 = vcmp.gt.f32.partialorder %v3362, 0.0
        %vm3460 = vcmp.gt.f32.partialorder %v3098, 0.0
        %vm3461 = vcmp.gt.f32.partialorder %v3100, 0.0
        %vm3462 = vcmp.gt.f32.partialorder %v3364, 0.0
        %vm3463 = vcmp.gt.f32.partialorder %v3366, 0.0
        %vm3464 = vcmp.gt.f32.partialorder %v3104, 0.0
        %vm3465 = vcmp.gt.f32.partialorder %v3106, 0.0
        %vm3466 = vcmp.gt.f32.partialorder %v3370, 0.0
        %vm3467 = vcmp.gt.f32.partialorder %v3372, 0.0
        %vm3468 = vcmp.gt.f32.partialorder %v3108, 0.0
        %vm3469 = vcmp.gt.f32.partialorder %v3110, 0.0
        %vm3470 = vcmp.gt.f32.partialorder %v3374, 0.0
        %vm3471 = vcmp.gt.f32.partialorder %v3376, 0.0
        %vm3472 = vcmp.gt.f32.partialorder %v3114, 0.0
        %vm3473 = vcmp.gt.f32.partialorder %v3116, 0.0
        %vm3474 = vcmp.gt.f32.partialorder %v3380, 0.0
        %vm3475 = vcmp.gt.f32.partialorder %v3382, 0.0
        %vm3476 = vcmp.gt.f32.partialorder %v3118, 0.0
        %vm3477 = vcmp.gt.f32.partialorder %v3120, 0.0
        %vm3478 = vcmp.gt.f32.partialorder %v3384, 0.0
        %vm3479 = vcmp.gt.f32.partialorder %v3386, 0.0
        %vm3480 = vcmp.gt.f32.partialorder %v3124, 0.0
        %vm3481 = vcmp.gt.f32.partialorder %v3126, 0.0
        %vm3482 = vcmp.gt.f32.partialorder %v3390, 0.0
        %vm3483 = vcmp.gt.f32.partialorder %v3392, 0.0
        %vm3484 = vcmp.gt.f32.partialorder %v3128, 0.0
        %vm3485 = vcmp.gt.f32.partialorder %v3130, 0.0
        %vm3486 = vcmp.gt.f32.partialorder %v3394, 0.0
        %vm3487 = vcmp.gt.f32.partialorder %v3396, 0.0
        %vm3488 = vcmp.gt.f32.partialorder %v3134, 0.0
        %vm3489 = vcmp.gt.f32.partialorder %v3136, 0.0
        %vm3490 = vcmp.gt.f32.partialorder %v3400, 0.0
        %vm3491 = vcmp.gt.f32.partialorder %v3402, 0.0
        %vm3492 = vcmp.gt.f32.partialorder %v3138, 0.0
        %vm3493 = vcmp.gt.f32.partialorder %v3140, 0.0
        %vm3494 = vcmp.gt.f32.partialorder %v3404, 0.0
        %vm3495 = vcmp.gt.f32.partialorder %v3406, 0.0
        %vm3496 = vcmp.gt.f32.partialorder %v3144, 0.0
        %vm3497 = vcmp.gt.f32.partialorder %v3146, 0.0
        %vm3498 = vcmp.gt.f32.partialorder %v3410, 0.0
        %vm3499 = vcmp.gt.f32.partialorder %v3412, 0.0
        %vm3500 = vcmp.gt.f32.partialorder %v3148, 0.0
        %vm3501 = vcmp.gt.f32.partialorder %v3150, 0.0
        %vm3502 = vcmp.gt.f32.partialorder %v3414, 0.0
        %vm3503 = vcmp.gt.f32.partialorder %v3416, 0.0
        %vm3504 = vcmp.gt.f32.partialorder %v3154, 0.0
        %vm3505 = vcmp.gt.f32.partialorder %v3156, 0.0
        %vm3506 = vcmp.gt.f32.partialorder %v3420, 0.0
        %vm3507 = vcmp.gt.f32.partialorder %v3422, 0.0
        %vm3508 = vcmp.gt.f32.partialorder %v3158, 0.0
        %vm3509 = vcmp.gt.f32.partialorder %v3160, 0.0
        %vm3510 = vcmp.gt.f32.partialorder %v3424, 0.0
        %vm3511 = vcmp.gt.f32.partialorder %v3426, 0.0
        %vm3512 = vcmp.gt.f32.partialorder %v3164, 0.0
        %vm3513 = vcmp.gt.f32.partialorder %v3166, 0.0
        %vm3514 = vcmp.gt.f32.partialorder %v3430, 0.0
        %vm3515 = vcmp.gt.f32.partialorder %v3432, 0.0
        %vm3516 = vcmp.gt.f32.partialorder %v3168, 0.0
        %vm3517 = vcmp.gt.f32.partialorder %v3170, 0.0
        %vm3518 = vcmp.gt.f32.partialorder %v3434, 0.0
        %vm3519 = vcmp.gt.f32.partialorder %v3436, 0.0
        %vm3520 = vcmp.gt.f32.partialorder %v3174, 0.0
        %vm3521 = vcmp.gt.f32.partialorder %v3176, 0.0
        %vm3522 = vcmp.gt.f32.partialorder %v3440, 0.0
        %vm3523 = vcmp.gt.f32.partialorder %v3442, 0.0
        %vm3524 = vcmp.gt.f32.partialorder %v3178, 0.0
        %vm3525 = vcmp.gt.f32.partialorder %v3180, 0.0
        %vm3526 = vcmp.gt.f32.partialorder %v3444, 0.0
        %vm3527 = vcmp.gt.f32.partialorder %v3446, 0.0
        %v3528 = vstv %s402
        %v3529 = vmul.f32 %v3528, %v3084
        %v3530 = vmul.f32 %v3528, %v3086
        %v3531 = vmul.f32 %v3528, %v3350
        %v3532 = vmul.f32 %v3528, %v3352
        %v3533 = vmul.f32 %v3528, %v3088
        %v3534 = vmul.f32 %v3528, %v3090
        %v3535 = vmul.f32 %v3528, %v3354
        %v3536 = vmul.f32 %v3528, %v3356
        %v3537 = vmul.f32 %v3528, %v3094
        %v3538 = vmul.f32 %v3528, %v3096
        %v3539 = vmul.f32 %v3528, %v3360
        %v3540 = vmul.f32 %v3528, %v3362
        %v3541 = vmul.f32 %v3528, %v3098
        %v3542 = vmul.f32 %v3528, %v3100
        %v3543 = vmul.f32 %v3528, %v3364
        %v3544 = vmul.f32 %v3528, %v3366
        %v3545 = vmul.f32 %v3528, %v3104
        %v3546 = vmul.f32 %v3528, %v3106
        %v3547 = vmul.f32 %v3528, %v3370
        %v3548 = vmul.f32 %v3528, %v3372
        %v3549 = vmul.f32 %v3528, %v3108
        %v3550 = vmul.f32 %v3528, %v3110
        %v3551 = vmul.f32 %v3528, %v3374
        %v3552 = vmul.f32 %v3528, %v3376
        %v3553 = vmul.f32 %v3528, %v3114
        %v3554 = vmul.f32 %v3528, %v3116
        %v3555 = vmul.f32 %v3528, %v3380
        %v3556 = vmul.f32 %v3528, %v3382
        %v3557 = vmul.f32 %v3528, %v3118
        %v3558 = vmul.f32 %v3528, %v3120
        %v3559 = vmul.f32 %v3528, %v3384
        %v3560 = vmul.f32 %v3528, %v3386
        %v3561 = vmul.f32 %v3528, %v3124
        %v3562 = vmul.f32 %v3528, %v3126
        %v3563 = vmul.f32 %v3528, %v3390
        %v3564 = vmul.f32 %v3528, %v3392
        %v3565 = vmul.f32 %v3528, %v3128
        %v3566 = vmul.f32 %v3528, %v3130
        %v3567 = vmul.f32 %v3528, %v3394
        %v3568 = vmul.f32 %v3528, %v3396
        %v3569 = vmul.f32 %v3528, %v3134
        %v3570 = vmul.f32 %v3528, %v3136
        %v3571 = vmul.f32 %v3528, %v3400
        %v3572 = vmul.f32 %v3528, %v3402
        %v3573 = vmul.f32 %v3528, %v3138
        %v3574 = vmul.f32 %v3528, %v3140
        %v3575 = vmul.f32 %v3528, %v3404
        %v3576 = vmul.f32 %v3528, %v3406
        %v3577 = vmul.f32 %v3528, %v3144
        %v3578 = vmul.f32 %v3528, %v3146
        %v3579 = vmul.f32 %v3528, %v3410
        %v3580 = vmul.f32 %v3528, %v3412
        %v3581 = vmul.f32 %v3528, %v3148
        %v3582 = vmul.f32 %v3528, %v3150
        %v3583 = vmul.f32 %v3528, %v3414
        %v3584 = vmul.f32 %v3528, %v3416
        %v3585 = vmul.f32 %v3528, %v3154
        %v3586 = vmul.f32 %v3528, %v3156
        %v3587 = vmul.f32 %v3528, %v3420
        %v3588 = vmul.f32 %v3528, %v3422
        %v3589 = vmul.f32 %v3528, %v3158
        %v3590 = vmul.f32 %v3528, %v3160
        %v3591 = vmul.f32 %v3528, %v3424
        %v3592 = vmul.f32 %v3528, %v3426
        %v3593 = vmul.f32 %v3528, %v3164
        %v3594 = vmul.f32 %v3528, %v3166
        %v3595 = vmul.f32 %v3528, %v3430
        %v3596 = vmul.f32 %v3528, %v3432
        %v3597 = vmul.f32 %v3528, %v3168
        %v3598 = vmul.f32 %v3528, %v3170
        %v3599 = vmul.f32 %v3528, %v3434
        %v3600 = vmul.f32 %v3528, %v3436
        %v3601 = vmul.f32 %v3528, %v3174
        %v3602 = vmul.f32 %v3528, %v3176
        %v3603 = vmul.f32 %v3528, %v3440
        %v3604 = vmul.f32 %v3528, %v3442
        %v3605 = vmul.f32 %v3528, %v3178
        %v3606 = vmul.f32 %v3528, %v3180
        %v3607 = vmul.f32 %v3528, %v3444
        %v3608 = vmul.f32 %v3528, %v3446
        %v3609 = vsel %vm3448, %v3084, %v3529
        %v3610 = vsel %vm3449, %v3086, %v3530
        %v3611 = vsel %vm3450, %v3350, %v3531
        %v3612 = vsel %vm3451, %v3352, %v3532
        %v3613 = vsel %vm3452, %v3088, %v3533
        %v3614 = vsel %vm3453, %v3090, %v3534
        %v3615 = vsel %vm3454, %v3354, %v3535
        %v3616 = vsel %vm3455, %v3356, %v3536
        %v3617 = vsel %vm3456, %v3094, %v3537
        %v3618 = vsel %vm3457, %v3096, %v3538
        %v3619 = vsel %vm3458, %v3360, %v3539
        %v3620 = vsel %vm3459, %v3362, %v3540
        %v3621 = vsel %vm3460, %v3098, %v3541
        %v3622 = vsel %vm3461, %v3100, %v3542
        %v3623 = vsel %vm3462, %v3364, %v3543
        %v3624 = vsel %vm3463, %v3366, %v3544
        %v3625 = vsel %vm3464, %v3104, %v3545
        %v3626 = vsel %vm3465, %v3106, %v3546
        %v3627 = vsel %vm3466, %v3370, %v3547
        %v3628 = vsel %vm3467, %v3372, %v3548
        %v3629 = vsel %vm3468, %v3108, %v3549
        %v3630 = vsel %vm3469, %v3110, %v3550
        %v3631 = vsel %vm3470, %v3374, %v3551
        %v3632 = vsel %vm3471, %v3376, %v3552
        %v3633 = vsel %vm3472, %v3114, %v3553
        %v3634 = vsel %vm3473, %v3116, %v3554
        %v3635 = vsel %vm3474, %v3380, %v3555
        %v3636 = vsel %vm3475, %v3382, %v3556
        %v3637 = vsel %vm3476, %v3118, %v3557
        %v3638 = vsel %vm3477, %v3120, %v3558
        %v3639 = vsel %vm3478, %v3384, %v3559
        %v3640 = vsel %vm3479, %v3386, %v3560
        %v3641 = vsel %vm3480, %v3124, %v3561
        %v3642 = vsel %vm3481, %v3126, %v3562
        %v3643 = vsel %vm3482, %v3390, %v3563
        %v3644 = vsel %vm3483, %v3392, %v3564
        %v3645 = vsel %vm3484, %v3128, %v3565
        %v3646 = vsel %vm3485, %v3130, %v3566
        %v3647 = vsel %vm3486, %v3394, %v3567
        %v3648 = vsel %vm3487, %v3396, %v3568
        %v3649 = vsel %vm3488, %v3134, %v3569
        %v3650 = vsel %vm3489, %v3136, %v3570
        %v3651 = vsel %vm3490, %v3400, %v3571
        %v3652 = vsel %vm3491, %v3402, %v3572
        %v3653 = vsel %vm3492, %v3138, %v3573
        %v3654 = vsel %vm3493, %v3140, %v3574
        %v3655 = vsel %vm3494, %v3404, %v3575
        %v3656 = vsel %vm3495, %v3406, %v3576
        %v3657 = vsel %vm3496, %v3144, %v3577
        %v3658 = vsel %vm3497, %v3146, %v3578
        %v3659 = vsel %vm3498, %v3410, %v3579
        %v3660 = vsel %vm3499, %v3412, %v3580
        %v3661 = vsel %vm3500, %v3148, %v3581
        %v3662 = vsel %vm3501, %v3150, %v3582
        %v3663 = vsel %vm3502, %v3414, %v3583
        %v3664 = vsel %vm3503, %v3416, %v3584
        %v3665 = vsel %vm3504, %v3154, %v3585
        %v3666 = vsel %vm3505, %v3156, %v3586
        %v3667 = vsel %vm3506, %v3420, %v3587
        %v3668 = vsel %vm3507, %v3422, %v3588
        %v3669 = vsel %vm3508, %v3158, %v3589
        %v3670 = vsel %vm3509, %v3160, %v3590
        %v3671 = vsel %vm3510, %v3424, %v3591
        %v3672 = vsel %vm3511, %v3426, %v3592
        %v3673 = vsel %vm3512, %v3164, %v3593
        %v3674 = vsel %vm3513, %v3166, %v3594
        %v3675 = vsel %vm3514, %v3430, %v3595
        %v3676 = vsel %vm3515, %v3432, %v3596
        %v3677 = vsel %vm3516, %v3168, %v3597
        %v3678 = vsel %vm3517, %v3170, %v3598
        %v3679 = vsel %vm3518, %v3434, %v3599
        %v3680 = vsel %vm3519, %v3436, %v3600
        %v3681 = vsel %vm3520, %v3174, %v3601
        %v3682 = vsel %vm3521, %v3176, %v3602
        %v3683 = vsel %vm3522, %v3440, %v3603
        %v3684 = vsel %vm3523, %v3442, %v3604
        %v3685 = vsel %vm3524, %v3178, %v3605
        %v3686 = vsel %vm3525, %v3180, %v3606
        %v3687 = vsel %vm3526, %v3444, %v3607
        %v3688 = vsel %vm3527, %v3446, %v3608
        %v3689 = vpack.c.bf16 %v3613, %v3609
        %v3690 = vpack.c.bf16 %v3614, %v3610
        %v3691 = vpack.c.bf16 %v3615, %v3611
        %v3692 = vpack.c.bf16 %v3616, %v3612
        %v3693 = vpack.c.bf16 %v3621, %v3617
        %v3694 = vpack.c.bf16 %v3622, %v3618
        %v3695 = vpack.c.bf16 %v3623, %v3619
        %v3696 = vpack.c.bf16 %v3624, %v3620
        %v3697 = vpack.c.bf16 %v3629, %v3625
        %v3698 = vpack.c.bf16 %v3630, %v3626
        %v3699 = vpack.c.bf16 %v3631, %v3627
        %v3700 = vpack.c.bf16 %v3632, %v3628
        %v3701 = vpack.c.bf16 %v3637, %v3633
        %v3702 = vpack.c.bf16 %v3638, %v3634
        %v3703 = vpack.c.bf16 %v3639, %v3635
        %v3704 = vpack.c.bf16 %v3640, %v3636
        %v3705 = vpack.c.bf16 %v3645, %v3641
        %v3706 = vpack.c.bf16 %v3646, %v3642
        %v3707 = vpack.c.bf16 %v3647, %v3643
        %v3708 = vpack.c.bf16 %v3648, %v3644
        %v3709 = vpack.c.bf16 %v3653, %v3649
        %v3710 = vpack.c.bf16 %v3654, %v3650
        %v3711 = vpack.c.bf16 %v3655, %v3651
        %v3712 = vpack.c.bf16 %v3656, %v3652
        %v3713 = vpack.c.bf16 %v3661, %v3657
        %v3714 = vpack.c.bf16 %v3662, %v3658
        %v3715 = vpack.c.bf16 %v3663, %v3659
        %v3716 = vpack.c.bf16 %v3664, %v3660
        %v3717 = vpack.c.bf16 %v3669, %v3665
        %v3718 = vpack.c.bf16 %v3670, %v3666
        %v3719 = vpack.c.bf16 %v3671, %v3667
        %v3720 = vpack.c.bf16 %v3672, %v3668
        %v3721 = vpack.c.bf16 %v3677, %v3673
        %v3722 = vpack.c.bf16 %v3678, %v3674
        %v3723 = vpack.c.bf16 %v3679, %v3675
        %v3724 = vpack.c.bf16 %v3680, %v3676
        %v3725 = vpack.c.bf16 %v3685, %v3681
        %v3726 = vpack.c.bf16 %v3686, %v3682
        %v3727 = vpack.c.bf16 %v3687, %v3683
        %v3728 = vpack.c.bf16 %v3688, %v3684
        %v3729 = vld [vmem:[#allocation10] sm:$0xf]
        %v3730 = vld [vmem:[#allocation10 + $0x4] sm:$0xf]
        %v3731 = vld [vmem:[#allocation10 + $0x8] sm:$0xf]
        %v3732 = vld [vmem:[#allocation10 + $0xc] sm:$0xf]
        %v3733 = vld [vmem:[#allocation10 + $0x10] sm:$0xf]
        %v3734 = vld [vmem:[#allocation10 + $0x14] sm:$0xf]
        %v3735 = vld [vmem:[#allocation10 + $0x18] sm:$0xf]
        %v3736 = vld [vmem:[#allocation10 + $0x1c] sm:$0xf]
        %v3737 = vld [vmem:[#allocation10 + $0x20] sm:$0xf]
        %v3738 = vld [vmem:[#allocation10 + $0x24] sm:$0xf]
        %v3739 = vld [vmem:[#allocation10 + $0x28] sm:$0xf]
        %v3740 = vld [vmem:[#allocation10 + $0x2c] sm:$0xf]
        %v3741 = vld [vmem:[#allocation10 + $0x30] sm:$0xf]
        %v3742 = vld [vmem:[#allocation10 + $0x34] sm:$0xf]
        %v3743 = vld [vmem:[#allocation10 + $0x38] sm:$0xf]
        %v3744 = vld [vmem:[#allocation10 + $0x3c] sm:$0xf]
        %v3745 = vld [vmem:[#allocation10 + $0x40] sm:$0xf]
        %v3746 = vld [vmem:[#allocation10 + $0x44] sm:$0xf]
        %v3747 = vld [vmem:[#allocation10 + $0x48] sm:$0xf]
        %v3748 = vld [vmem:[#allocation10 + $0x4c] sm:$0xf]
        %v3749 = vld [vmem:[#allocation10 + $0x50] sm:$0xf]
        %v3750 = vld [vmem:[#allocation10 + $0x54] sm:$0xf]
        %v3751 = vld [vmem:[#allocation10 + $0x58] sm:$0xf]
        %v3752 = vld [vmem:[#allocation10 + $0x5c] sm:$0xf]
        %v3753 = vld [vmem:[#allocation10 + $0x60] sm:$0xf]
        %v3754 = vld [vmem:[#allocation10 + $0x64] sm:$0xf]
        %v3755 = vld [vmem:[#allocation10 + $0x68] sm:$0xf]
        %v3756 = vld [vmem:[#allocation10 + $0x6c] sm:$0xf]
        %v3757 = vld [vmem:[#allocation10 + $0x70] sm:$0xf]
        %v3758 = vld [vmem:[#allocation10 + $0x74] sm:$0xf]
        %v3759 = vld [vmem:[#allocation10 + $0x78] sm:$0xf]
        %v3760 = vld [vmem:[#allocation10 + $0x7c] sm:$0xf]
        %v3761 = vld [vmem:[#allocation10 + $0x80] sm:$0xf]
        %v3762 = vld [vmem:[#allocation10 + $0x84] sm:$0xf]
        %v3763 = vld [vmem:[#allocation10 + $0x88] sm:$0xf]
        %v3764 = vld [vmem:[#allocation10 + $0x8c] sm:$0xf]
        %v3765 = vld [vmem:[#allocation10 + $0x90] sm:$0xf]
        %v3766 = vld [vmem:[#allocation10 + $0x94] sm:$0xf]
        %v3767 = vld [vmem:[#allocation10 + $0x98] sm:$0xf]
        %v3768 = vld [vmem:[#allocation10 + $0x9c] sm:$0xf]
        %v3769 = vld [vmem:[#allocation10 + $0xa0] sm:$0xf]
        %v3770 = vld [vmem:[#allocation10 + $0xa4] sm:$0xf]
        %v3771 = vld [vmem:[#allocation10 + $0xa8] sm:$0xf]
        %v3772 = vld [vmem:[#allocation10 + $0xac] sm:$0xf]
        %v3773 = vld [vmem:[#allocation10 + $0xb0] sm:$0xf]
        %v3774 = vld [vmem:[#allocation10 + $0xb4] sm:$0xf]
        %v3775 = vld [vmem:[#allocation10 + $0xb8] sm:$0xf]
        %v3776 = vld [vmem:[#allocation10 + $0xbc] sm:$0xf]
        %v3777 = vld [vmem:[#allocation10 + $0xc0] sm:$0xf]
        %v3778 = vld [vmem:[#allocation10 + $0xc4] sm:$0xf]
        %v3779 = vld [vmem:[#allocation10 + $0xc8] sm:$0xf]
        %v3780 = vld [vmem:[#allocation10 + $0xcc] sm:$0xf]
        %v3781 = vld [vmem:[#allocation10 + $0xd0] sm:$0xf]
        %v3782 = vld [vmem:[#allocation10 + $0xd4] sm:$0xf]
        %v3783 = vld [vmem:[#allocation10 + $0xd8] sm:$0xf]
        %v3784 = vld [vmem:[#allocation10 + $0xdc] sm:$0xf]
        %v3785 = vld [vmem:[#allocation10 + $0xe0] sm:$0xf]
        %v3786 = vld [vmem:[#allocation10 + $0xe4] sm:$0xf]
        %v3787 = vld [vmem:[#allocation10 + $0xe8] sm:$0xf]
        %v3788 = vld [vmem:[#allocation10 + $0xec] sm:$0xf]
        %v3789 = vld [vmem:[#allocation10 + $0xf0] sm:$0xf]
        %v3790 = vld [vmem:[#allocation10 + $0xf4] sm:$0xf]
        %v3791 = vld [vmem:[#allocation10 + $0xf8] sm:$0xf]
        %v3792 = vld [vmem:[#allocation10 + $0xfc] sm:$0xf]
        %v3793 = vld [vmem:[%s8] sm:$0x1]
        %v3795 = vlaneseq
        %v3796 = vshrl.u32 %v3795, 7
        %v3797 = vsub.s32 0, %v3796
        %v3798 = vrot.slane %v3793, %v3797
        %v3864 = vunpack.c.l.b16 %v3729
        %v3865 = vunpack.c.l.b16 %v3730
        %v3866 = vunpack.c.l.b16 %v3731
        %v3867 = vunpack.c.l.b16 %v3732
        %v3868 = vunpack.c.l.b16 %v3733
        %v3869 = vunpack.c.l.b16 %v3734
        %v3870 = vunpack.c.l.b16 %v3735
        %v3871 = vunpack.c.l.b16 %v3736
        %v3872 = vunpack.c.l.b16 %v3737
        %v3873 = vunpack.c.l.b16 %v3738
        %v3874 = vunpack.c.l.b16 %v3739
        %v3875 = vunpack.c.l.b16 %v3740
        %v3876 = vunpack.c.l.b16 %v3741
        %v3877 = vunpack.c.l.b16 %v3742
        %v3878 = vunpack.c.l.b16 %v3743
        %v3879 = vunpack.c.l.b16 %v3744
        %v3880 = vunpack.c.l.b16 %v3745
        %v3881 = vunpack.c.l.b16 %v3746
        %v3882 = vunpack.c.l.b16 %v3747
        %v3883 = vunpack.c.l.b16 %v3748
        %v3884 = vunpack.c.l.b16 %v3749
        %v3885 = vunpack.c.l.b16 %v3750
        %v3886 = vunpack.c.l.b16 %v3751
        %v3887 = vunpack.c.l.b16 %v3752
        %v3888 = vunpack.c.l.b16 %v3753
        %v3889 = vunpack.c.l.b16 %v3754
        %v3890 = vunpack.c.l.b16 %v3755
        %v3891 = vunpack.c.l.b16 %v3756
        %v3892 = vunpack.c.l.b16 %v3757
        %v3893 = vunpack.c.l.b16 %v3758
        %v3894 = vunpack.c.l.b16 %v3759
        %v3895 = vunpack.c.l.b16 %v3760
        %v3896 = vunpack.c.l.b16 %v3761
        %v3897 = vunpack.c.l.b16 %v3762
        %v3898 = vunpack.c.l.b16 %v3763
        %v3899 = vunpack.c.l.b16 %v3764
        %v3900 = vunpack.c.l.b16 %v3765
        %v3901 = vunpack.c.l.b16 %v3766
        %v3902 = vunpack.c.l.b16 %v3767
        %v3903 = vunpack.c.l.b16 %v3768
        %v3904 = vunpack.c.l.b16 %v3769
        %v3905 = vunpack.c.l.b16 %v3770
        %v3906 = vunpack.c.l.b16 %v3771
        %v3907 = vunpack.c.l.b16 %v3772
        %v3908 = vunpack.c.l.b16 %v3773
        %v3909 = vunpack.c.l.b16 %v3774
        %v3910 = vunpack.c.l.b16 %v3775
        %v3911 = vunpack.c.l.b16 %v3776
        %v3912 = vunpack.c.l.b16 %v3777
        %v3913 = vunpack.c.l.b16 %v3778
        %v3914 = vunpack.c.l.b16 %v3779
        %v3915 = vunpack.c.l.b16 %v3780
        %v3916 = vunpack.c.l.b16 %v3781
        %v3917 = vunpack.c.l.b16 %v3782
        %v3918 = vunpack.c.l.b16 %v3783
        %v3919 = vunpack.c.l.b16 %v3784
        %v3920 = vunpack.c.l.b16 %v3785
        %v3921 = vunpack.c.l.b16 %v3786
        %v3922 = vunpack.c.l.b16 %v3787
        %v3923 = vunpack.c.l.b16 %v3788
        %v3924 = vunpack.c.l.b16 %v3789
        %v3925 = vunpack.c.l.b16 %v3790
        %v3926 = vunpack.c.l.b16 %v3791
        %v3927 = vunpack.c.l.b16 %v3792
        %v3928 = vpack.c.b16 %v3865, %v3864
        %v3929 = vpack.c.b16 %v3867, %v3866
        %v3930 = vpack.c.b16 %v3869, %v3868
        %v3931 = vpack.c.b16 %v3871, %v3870
        %v3932 = vpack.c.b16 %v3873, %v3872
        %v3933 = vpack.c.b16 %v3875, %v3874
        %v3934 = vpack.c.b16 %v3877, %v3876
        %v3935 = vpack.c.b16 %v3879, %v3878
        %v3936 = vpack.c.b16 %v3881, %v3880
        %v3937 = vpack.c.b16 %v3883, %v3882
        %v3938 = vpack.c.b16 %v3885, %v3884
        %v3939 = vpack.c.b16 %v3887, %v3886
        %v3940 = vpack.c.b16 %v3889, %v3888
        %v3941 = vpack.c.b16 %v3891, %v3890
        %v3942 = vpack.c.b16 %v3893, %v3892
        %v3943 = vpack.c.b16 %v3895, %v3894
        %v3944 = vpack.c.b16 %v3897, %v3896
        %v3945 = vpack.c.b16 %v3899, %v3898
        %v3946 = vpack.c.b16 %v3901, %v3900
        %v3947 = vpack.c.b16 %v3903, %v3902
        %v3948 = vpack.c.b16 %v3905, %v3904
        %v3949 = vpack.c.b16 %v3907, %v3906
        %v3950 = vpack.c.b16 %v3909, %v3908
        %v3951 = vpack.c.b16 %v3911, %v3910
        %v3952 = vpack.c.b16 %v3913, %v3912
        %v3953 = vpack.c.b16 %v3915, %v3914
        %v3954 = vpack.c.b16 %v3917, %v3916
        %v3955 = vpack.c.b16 %v3919, %v3918
        %v3956 = vpack.c.b16 %v3921, %v3920
        %v3957 = vpack.c.b16 %v3923, %v3922
        %v3958 = vpack.c.b16 %v3925, %v3924
        %v3959 = vpack.c.b16 %v3927, %v3926
        %3992 = vmatprep.subr.bf16.mxu0 0
        %3993 = vmatpush1.bf16.msra.mxu0 %v3928
        %3994 = vmatprep.subr.bf16.mxu0 0
        %3995 = vmatpush1.bf16.msra.mxu0 %v3929
        %3996 = vmatprep.subr.bf16.mxu0 0
        %3997 = vmatpush1.bf16.msra.mxu0 %v3930
        %3998 = vmatprep.subr.bf16.mxu0 0
        %3999 = vmatpush1.bf16.msra.mxu0 %v3931
        %4000 = vmatprep.subr.bf16.mxu0 0
        %4001 = vmatpush1.bf16.msra.mxu0 %v3932
        %4002 = vmatprep.subr.bf16.mxu0 0
        %4003 = vmatpush1.bf16.msra.mxu0 %v3933
        %4004 = vmatprep.subr.bf16.mxu0 0
        %4005 = vmatpush1.bf16.msra.mxu0 %v3934
        %4006 = vmatprep.subr.bf16.mxu0 0
        %4007 = vmatpush1.bf16.msra.mxu0 %v3935
        %4008 = vmatprep.subr.bf16.mxu0 0
        %4009 = vmatpush1.bf16.msra.mxu0 %v3936
        %4010 = vmatprep.subr.bf16.mxu0 0
        %4011 = vmatpush1.bf16.msra.mxu0 %v3937
        %4012 = vmatprep.subr.bf16.mxu0 0
        %4013 = vmatpush1.bf16.msra.mxu0 %v3938
        %4014 = vmatprep.subr.bf16.mxu0 0
        %4015 = vmatpush1.bf16.msra.mxu0 %v3939
        %4016 = vmatprep.subr.bf16.mxu0 0
        %4017 = vmatpush1.bf16.msra.mxu0 %v3940
        %4018 = vmatprep.subr.bf16.mxu0 0
        %4019 = vmatpush1.bf16.msra.mxu0 %v3941
        %4020 = vmatprep.subr.bf16.mxu0 0
        %4021 = vmatpush1.bf16.msra.mxu0 %v3942
        %4022 = vmatprep.subr.bf16.mxu0 0
        %4023 = vmatpush1.bf16.msra.mxu0 %v3943
        %4024 = vmatprep.mubr.bf16.mxu0 %v3690
        %4025 = vmatmul.mubr.bf16.gmra.mrb[0].mxu0 %v3689
        %v4026 = vpop.f32.mrb[0].mxu0
        %v4027 = vadd.f32 %v3798, %v4026
        %v4028 = vpop.f32.mrb[0].mxu0
        %v4029 = vpop.f32.mrb[0].mxu0
        %v4030 = vadd.f32 %v3798, %v4029
        %v4031 = vpop.f32.mrb[0].mxu0
        %4032 = vmatprep.mubr.bf16.mxu0 %v3694
        %4033 = vmatmul.mubr.bf16.gmra.mrb[0].mxu0 %v3693
        %v4034 = vpop.f32.mrb[0].mxu0
        %v4035 = vadd.f32 %v3798, %v4034
        %v4036 = vpop.f32.mrb[0].mxu0
        %v4037 = vpop.f32.mrb[0].mxu0
        %v4038 = vadd.f32 %v3798, %v4037
        %v4039 = vpop.f32.mrb[0].mxu0
        %4040 = vmatprep.mubr.bf16.mxu0 %v3698
        %4041 = vmatmul.mubr.bf16.gmra.mrb[0].mxu0 %v3697
        %v4042 = vpop.f32.mrb[0].mxu0
        %v4043 = vadd.f32 %v3798, %v4042
        %v4044 = vpop.f32.mrb[0].mxu0
        %v4045 = vpop.f32.mrb[0].mxu0
        %v4046 = vadd.f32 %v3798, %v4045
        %v4047 = vpop.f32.mrb[0].mxu0
        %4048 = vmatprep.mubr.bf16.mxu0 %v3702
        %4049 = vmatmul.mubr.bf16.gmra.mrb[0].mxu0 %v3701
        %v4050 = vpop.f32.mrb[0].mxu0
        %v4051 = vadd.f32 %v3798, %v4050
        %v4052 = vpop.f32.mrb[0].mxu0
        %v4053 = vpop.f32.mrb[0].mxu0
        %v4054 = vadd.f32 %v3798, %v4053
        %v4055 = vpop.f32.mrb[0].mxu0
        %4056 = vmatprep.mubr.bf16.mxu0 %v3706
        %4057 = vmatmul.mubr.bf16.gmra.mrb[0].mxu0 %v3705
        %v4058 = vpop.f32.mrb[0].mxu0
        %v4059 = vadd.f32 %v3798, %v4058
        %v4060 = vpop.f32.mrb[0].mxu0
        %v4061 = vpop.f32.mrb[0].mxu0
        %v4062 = vadd.f32 %v3798, %v4061
        %v4063 = vpop.f32.mrb[0].mxu0
        %4064 = vmatprep.mubr.bf16.mxu0 %v3710
        %4065 = vmatmul.mubr.bf16.gmra.mrb[0].mxu0 %v3709
        %v4066 = vpop.f32.mrb[0].mxu0
        %v4067 = vadd.f32 %v3798, %v4066
        %v4068 = vpop.f32.mrb[0].mxu0
        %v4069 = vpop.f32.mrb[0].mxu0
        %v4070 = vadd.f32 %v3798, %v4069
        %v4071 = vpop.f32.mrb[0].mxu0
        %4072 = vmatprep.mubr.bf16.mxu0 %v3714
        %4073 = vmatmul.mubr.bf16.gmra.mrb[0].mxu0 %v3713
        %v4074 = vpop.f32.mrb[0].mxu0
        %v4075 = vadd.f32 %v3798, %v4074
        %v4076 = vpop.f32.mrb[0].mxu0
        %v4077 = vpop.f32.mrb[0].mxu0
        %v4078 = vadd.f32 %v3798, %v4077
        %v4079 = vpop.f32.mrb[0].mxu0
        %4080 = vmatprep.mubr.bf16.mxu0 %v3718
        %4081 = vmatmul.mubr.bf16.gmra.mrb[0].mxu0 %v3717
        %v4082 = vpop.f32.mrb[0].mxu0
        %v4083 = vadd.f32 %v3798, %v4082
        %v4084 = vpop.f32.mrb[0].mxu0
        %v4085 = vpop.f32.mrb[0].mxu0
        %v4086 = vadd.f32 %v3798, %v4085
        %v4087 = vpop.f32.mrb[0].mxu0
        %4088 = vmatprep.mubr.bf16.mxu0 %v3722
        %4089 = vmatmul.mubr.bf16.gmra.mrb[0].mxu0 %v3721
        %v4090 = vpop.f32.mrb[0].mxu0
        %v4091 = vadd.f32 %v3798, %v4090
        %v4092 = vpop.f32.mrb[0].mxu0
        %v4093 = vpop.f32.mrb[0].mxu0
        %v4094 = vadd.f32 %v3798, %v4093
        %v4095 = vpop.f32.mrb[0].mxu0
        %4096 = vmatprep.mubr.bf16.mxu0 %v3726
        %4097 = vmatmul.mubr.bf16.gmra.mrb[0].mxu0 %v3725
        %v4098 = vpop.f32.mrb[0].mxu0
        %v4099 = vadd.f32 %v3798, %v4098
        %v4100 = vpop.f32.mrb[0].mxu0
        %v4101 = vpop.f32.mrb[0].mxu0
        %v4102 = vadd.f32 %v3798, %v4101
        %v4103 = vpop.f32.mrb[0].mxu0
        %4104 = vdwg.mxu0
        %4105 = vmatprep.subr.bf16.mxu0 0
        %4106 = vmatpush1.bf16.msra.mxu0 %v3944
        %4107 = vmatprep.subr.bf16.mxu0 0
        %4108 = vmatpush1.bf16.msra.mxu0 %v3945
        %4109 = vmatprep.subr.bf16.mxu0 0
        %4110 = vmatpush1.bf16.msra.mxu0 %v3946
        %4111 = vmatprep.subr.bf16.mxu0 0
        %4112 = vmatpush1.bf16.msra.mxu0 %v3947
        %4113 = vmatprep.subr.bf16.mxu0 0
        %4114 = vmatpush1.bf16.msra.mxu0 %v3948
        %4115 = vmatprep.subr.bf16.mxu0 0
        %4116 = vmatpush1.bf16.msra.mxu0 %v3949
        %4117 = vmatprep.subr.bf16.mxu0 0
        %4118 = vmatpush1.bf16.msra.mxu0 %v3950
        %4119 = vmatprep.subr.bf16.mxu0 0
        %4120 = vmatpush1.bf16.msra.mxu0 %v3951
        %4121 = vmatprep.subr.bf16.mxu0 0
        %4122 = vmatpush1.bf16.msra.mxu0 %v3952
        %4123 = vmatprep.subr.bf16.mxu0 0
        %4124 = vmatpush1.bf16.msra.mxu0 %v3953
        %4125 = vmatprep.subr.bf16.mxu0 0
        %4126 = vmatpush1.bf16.msra.mxu0 %v3954
        %4127 = vmatprep.subr.bf16.mxu0 0
        %4128 = vmatpush1.bf16.msra.mxu0 %v3955
        %4129 = vmatprep.subr.bf16.mxu0 0
        %4130 = vmatpush1.bf16.msra.mxu0 %v3956
        %4131 = vmatprep.subr.bf16.mxu0 0
        %4132 = vmatpush1.bf16.msra.mxu0 %v3957
        %4133 = vmatprep.subr.bf16.mxu0 0
        %4134 = vmatpush1.bf16.msra.mxu0 %v3958
        %4135 = vmatprep.subr.bf16.mxu0 0
        %4136 = vmatpush1.bf16.msra.mxu0 %v3959
        %4137 = vmatprep.mubr.bf16.mxu0 %v3692
        %4138 = vmatmul.mubr.bf16.gmra.mrb[0].mxu0 %v3691
        %v4139 = vpop.f32.mrb[0].mxu0
        %v4140 = vadd.f32 %v4027, %v4139
        %v4141 = vpop.f32.mrb[0].mxu0
        %v4142 = vpop.f32.mrb[0].mxu0
        %v4143 = vadd.f32 %v4030, %v4142
        %v4144 = vpop.f32.mrb[0].mxu0
        %4145 = vmatprep.mubr.bf16.mxu0 %v3696
        %4146 = vmatmul.mubr.bf16.gmra.mrb[0].mxu0 %v3695
        %v4147 = vpop.f32.mrb[0].mxu0
        %v4148 = vadd.f32 %v4035, %v4147
        %v4149 = vpop.f32.mrb[0].mxu0
        %v4150 = vpop.f32.mrb[0].mxu0
        %v4151 = vadd.f32 %v4038, %v4150
        %v4152 = vpop.f32.mrb[0].mxu0
        %4153 = vmatprep.mubr.bf16.mxu0 %v3700
        %4154 = vmatmul.mubr.bf16.gmra.mrb[0].mxu0 %v3699
        %v4155 = vpop.f32.mrb[0].mxu0
        %v4156 = vadd.f32 %v4043, %v4155
        %v4157 = vpop.f32.mrb[0].mxu0
        %v4158 = vpop.f32.mrb[0].mxu0
        %v4159 = vadd.f32 %v4046, %v4158
        %v4160 = vpop.f32.mrb[0].mxu0
        %4161 = vmatprep.mubr.bf16.mxu0 %v3704
        %4162 = vmatmul.mubr.bf16.gmra.mrb[0].mxu0 %v3703
        %v4163 = vpop.f32.mrb[0].mxu0
        %v4164 = vadd.f32 %v4051, %v4163
        %v4165 = vpop.f32.mrb[0].mxu0
        %v4166 = vpop.f32.mrb[0].mxu0
        %v4167 = vadd.f32 %v4054, %v4166
        %v4168 = vpop.f32.mrb[0].mxu0
        %4169 = vmatprep.mubr.bf16.mxu0 %v3708
        %4170 = vmatmul.mubr.bf16.gmra.mrb[0].mxu0 %v3707
        %v4171 = vpop.f32.mrb[0].mxu0
        %v4172 = vadd.f32 %v4059, %v4171
        %v4173 = vpop.f32.mrb[0].mxu0
        %v4174 = vpop.f32.mrb[0].mxu0
        %v4175 = vadd.f32 %v4062, %v4174
        %v4176 = vpop.f32.mrb[0].mxu0
        %4177 = vmatprep.mubr.bf16.mxu0 %v3712
        %4178 = vmatmul.mubr.bf16.gmra.mrb[0].mxu0 %v3711
        %v4179 = vpop.f32.mrb[0].mxu0
        %v4180 = vadd.f32 %v4067, %v4179
        %v4181 = vpop.f32.mrb[0].mxu0
        %v4182 = vpop.f32.mrb[0].mxu0
        %v4183 = vadd.f32 %v4070, %v4182
        %v4184 = vpop.f32.mrb[0].mxu0
        %4185 = vmatprep.mubr.bf16.mxu0 %v3716
        %4186 = vmatmul.mubr.bf16.gmra.mrb[0].mxu0 %v3715
        %v4187 = vpop.f32.mrb[0].mxu0
        %v4188 = vadd.f32 %v4075, %v4187
        %v4189 = vpop.f32.mrb[0].mxu0
        %v4190 = vpop.f32.mrb[0].mxu0
        %v4191 = vadd.f32 %v4078, %v4190
        %v4192 = vpop.f32.mrb[0].mxu0
        %4193 = vmatprep.mubr.bf16.mxu0 %v3720
        %4194 = vmatmul.mubr.bf16.gmra.mrb[0].mxu0 %v3719
        %v4195 = vpop.f32.mrb[0].mxu0
        %v4196 = vadd.f32 %v4083, %v4195
        %v4197 = vpop.f32.mrb[0].mxu0
        %v4198 = vpop.f32.mrb[0].mxu0
        %v4199 = vadd.f32 %v4086, %v4198
        %v4200 = vpop.f32.mrb[0].mxu0
        %4201 = vmatprep.mubr.bf16.mxu0 %v3724
        %4202 = vmatmul.mubr.bf16.gmra.mrb[0].mxu0 %v3723
        %v4203 = vpop.f32.mrb[0].mxu0
        %v4204 = vadd.f32 %v4091, %v4203
        %v4205 = vpop.f32.mrb[0].mxu0
        %v4206 = vpop.f32.mrb[0].mxu0
        %v4207 = vadd.f32 %v4094, %v4206
        %v4208 = vpop.f32.mrb[0].mxu0
        %4209 = vmatprep.mubr.bf16.mxu0 %v3728
        %4210 = vmatmul.mubr.bf16.gmra.mrb[0].mxu0 %v3727
        %v4211 = vpop.f32.mrb[0].mxu0
        %v4212 = vadd.f32 %v4099, %v4211
        %v4213 = vpop.f32.mrb[0].mxu0
        %v4214 = vpop.f32.mrb[0].mxu0
        %v4215 = vadd.f32 %v4102, %v4214
        %v4216 = vpop.f32.mrb[0].mxu0
        %4217 = vdwg.mxu0
        %v4218 = vpack.c.bf16 %v4143, %v4140
        %v4219 = vpack.c.bf16 %v4151, %v4148
        %v4220 = vpack.c.bf16 %v4159, %v4156
        %v4221 = vpack.c.bf16 %v4167, %v4164
        %v4222 = vpack.c.bf16 %v4175, %v4172
        %v4223 = vpack.c.bf16 %v4183, %v4180
        %v4224 = vpack.c.bf16 %v4191, %v4188
        %v4225 = vpack.c.bf16 %v4199, %v4196
        %v4226 = vpack.c.bf16 %v4207, %v4204
        %v4227 = vpack.c.bf16 %v4215, %v4212
        %v4238 = vunpack.c.l.b16 %v4218
        %v4239 = vunpack.c.h.b16 %v4218
        %v4240 = vunpack.c.l.b16 %v4219
        %v4241 = vunpack.c.h.b16 %v4219
        %v4242 = vunpack.c.l.b16 %v4220
        %v4243 = vunpack.c.h.b16 %v4220
        %v4244 = vunpack.c.l.b16 %v4221
        %v4245 = vunpack.c.h.b16 %v4221
        %v4246 = vunpack.c.l.b16 %v4222
        %v4247 = vunpack.c.h.b16 %v4222
        %v4248 = vunpack.c.l.b16 %v4223
        %v4249 = vunpack.c.h.b16 %v4223
        %v4250 = vunpack.c.l.b16 %v4224
        %v4251 = vunpack.c.h.b16 %v4224
        %v4252 = vunpack.c.l.b16 %v4225
        %v4253 = vunpack.c.h.b16 %v4225
        %v4254 = vunpack.c.l.b16 %v4226
        %v4255 = vunpack.c.h.b16 %v4226
        %v4256 = vunpack.c.l.b16 %v4227
        %v4257 = vunpack.c.h.b16 %v4227
        %v4258 = vpack.c.b16 %v4238, %v4238
        %v4259 = vpack.c.b16 %v4239, %v4239
        %v4260 = vpack.c.b16 %v4240, %v4240
        %v4261 = vpack.c.b16 %v4241, %v4241
        %v4262 = vpack.c.b16 %v4242, %v4242
        %v4263 = vpack.c.b16 %v4243, %v4243
        %v4264 = vpack.c.b16 %v4244, %v4244
        %v4265 = vpack.c.b16 %v4245, %v4245
        %v4266 = vpack.c.b16 %v4246, %v4246
        %v4267 = vpack.c.b16 %v4247, %v4247
        %v4268 = vpack.c.b16 %v4248, %v4248
        %v4269 = vpack.c.b16 %v4249, %v4249
        %v4270 = vpack.c.b16 %v4250, %v4250
        %v4271 = vpack.c.b16 %v4251, %v4251
        %v4272 = vpack.c.b16 %v4252, %v4252
        %v4273 = vpack.c.b16 %v4253, %v4253
        %v4274 = vpack.c.b16 %v4254, %v4254
        %v4275 = vpack.c.b16 %v4255, %v4255
        %v4276 = vpack.c.b16 %v4256, %v4256
        %v4277 = vpack.c.b16 %v4257, %v4257
        %4298 = vst [vmem:[%s397] sm:$0xf] %v4258
        %4299 = vst [vmem:[%s397 + $0x4] sm:$0xf] %v4259
        %4300 = vst [vmem:[%s397 + $0x8] sm:$0xf] %v4260
        %4301 = vst [vmem:[%s397 + $0xc] sm:$0xf] %v4261
        %4302 = vst [vmem:[%s397 + $0x10] sm:$0xf] %v4262
        %4303 = vst [vmem:[%s397 + $0x14] sm:$0xf] %v4263
        %4304 = vst [vmem:[%s397 + $0x18] sm:$0xf] %v4264
        %4305 = vst [vmem:[%s397 + $0x1c] sm:$0xf] %v4265
        %4306 = vst [vmem:[%s397 + $0x20] sm:$0xf] %v4266
        %4307 = vst [vmem:[%s397 + $0x24] sm:$0xf] %v4267
        %4308 = vst [vmem:[%s397 + $0x28] sm:$0xf] %v4268
        %4309 = vst [vmem:[%s397 + $0x2c] sm:$0xf] %v4269
        %4310 = vst [vmem:[%s397 + $0x30] sm:$0xf] %v4270
        %4311 = vst [vmem:[%s397 + $0x34] sm:$0xf] %v4271
        %4312 = vst [vmem:[%s397 + $0x38] sm:$0xf] %v4272
        %4313 = vst [vmem:[%s397 + $0x3c] sm:$0xf] %v4273
        %4314 = vst [vmem:[%s397 + $0x40] sm:$0xf] %v4274
        %4315 = vst [vmem:[%s397 + $0x44] sm:$0xf] %v4275
        %4316 = vst [vmem:[%s397 + $0x48] sm:$0xf] %v4276
        %4317 = vst [vmem:[%s397 + $0x4c] sm:$0xf] %v4277
        %s4318 = sand.u32 %s232, 1
        %s4319 = scalar_lea.sflag [#allocation6], %s4318
        %s4320 = sand.u32 %s232, 1
        %s4321 = smul.addr %s4320, 80
        %s4322 = scalar_lea.vmem [#allocation12], %s4321
        // Predicated region
        $region73: #{tpu_custom_call.1} parent=55 // pred_check
          %p4323 = pneg %p242
        $region74: #{tpu_custom_call.1} parent=55 // pred_check_branch
          %4325 = sbr.rel (%p4323) target = $region76
        $region75: #{tpu_custom_call.1} parent=55 // pred_region
          %s4326 = smul.u32 20, %s30
          %s4328 = ssub.s32 1280, 1280
          %4329 = vsyncadd %s4319, %s4328
          %s4330 = smul.addr %s4326, 64
          %s4331 = scalar_lea.hbm %s9, %s4330
          %s4332 = sshll.u32 %s4322, 4
          %s4333 = int_to_ptr.vmem [resolvable:$true] %s4332
          %4338 = dma.vmem_to_hbm [thread:$0]  %s4333, 1280, %s4331, %s4319, 64, 64, 4
        $region76: #{tpu_custom_call.1} parent=55 // pred_fallthru
          _
      $region56: #{tpu_custom_call.1} parent=5 // pred_fallthru
        _
      %p4339 = scmp.le.s32.totalorder 2, %s25
      // Predicated region
      $region77: #{tpu_custom_call.1} parent=5 // pred_check
        %p4340 = pneg %p4339
      $region78: #{tpu_custom_call.1} parent=5 // pred_check_branch
        %4342 = sbr.rel (%p4340) target = $region80
      $region79: #{tpu_custom_call.1} parent=5 // pred_region
        %s4343 = ssub.s32 %s25, 2
        // Predicated region
        $region81: #{tpu_custom_call.1} parent=79 // pred_check
          %p4344 = pneg %p248
        $region82: #{tpu_custom_call.1} parent=79 // pred_check_branch
          %4346 = sbr.rel (%p4344) target = $region84
        $region83: #{tpu_custom_call.1} parent=79 // pred_region
          %s4347 = sand.u32 %s233, 1
          %s4348 = scalar_lea.sflag [#allocation6], %s4347
          %s4349 = sand.u32 %s233, 1
          %s4350 = smul.addr %s4349, 80
          %s4351 = scalar_lea.vmem [#allocation12], %s4350
          %4352 = dma.done %s4348, 1280
        $region84: #{tpu_custom_call.1} parent=79 // pred_fallthru
          _
      $region80: #{tpu_custom_call.1} parent=5 // pred_fallthru
        _
    $region6: #{tpu_custom_call.1} parent=1 // loop_footer
      %s29 = sadd.s32 1, %s25
    $region7: #{tpu_custom_call.1} parent=1 // loop_footer_branch
      %24 = sbr.rel target = $region3
    $region8: #{tpu_custom_call.1} parent=1 // loop_exit
      _
    %4353 = vsyncpa [#allocation5], 1
    %s4354 = scalar_lea.sflag [#allocation5], 1
    %4355 = vsyncpa %s4354, 1
    %4356 = vsyncpa [#allocation8], 1
    %4357 = vsyncpa [#allocation11], 1
    %4358 = vsyncpa [#allocation6], 1
    %s4359 = scalar_lea.sflag [#allocation6], 1
    %4360 = vsyncpa %s4359, 1

</llo_original>
